<compile_context>
chip_gen: v6e
topology: v6e:2x2x1
jax: 0.10.0
libtpu: 0.0.40
codegen_flags: <defaults>
</compile_context>

<pallas_src>
import jax
import jax.numpy as jnp
import numpy as np
from jax.experimental import pallas as pl
from jax.experimental.pallas import tpu as pltpu


# ------------------------------ fused kernel ------------------------------- #

def _fused_kernel(x_ref,                                   # (3, 32, 32)  one image (NCHW slice)
                  w1_ref, b1_ref, cs1_ref, rs1_ref,        # conv1 + pool1 tables
                  w2_ref, b2_ref, cs2_ref, rs2_ref,        # conv2 + pool2 tables
                  w3_ref, b3_ref,                          # conv3 tables
                  wf_ref, bf_ref,                          # fc tables
                  out_ref,                                 # (1, 512)
                  pad1, pad2, pad3):                       # VMEM scratch (padded conv inputs)
    f32 = jnp.float32

    def mm(a, b):
        return jnp.dot(a, b, preferred_element_type=f32)

    def max3(a, b, c):
        return jnp.maximum(jnp.maximum(a, b), c)

    # -------- stage 1: conv1 (+ folded BN) + ReLU --------------------------
    # pad1[2+h, ci*32+w] = x[ci, h, w]; the 2 zero guard rows (re-zeroed every
    # step: with megacore a core may never run step 0) give the vertical
    # 'same' padding, horizontal padding is folded into the band matrices.
    # Channels are folded into the K/lane dim -> 5 matmuls, K=96.
    pad1[0:2, :] = jnp.zeros((2, 96), f32)
    pad1[34:36, :] = jnp.zeros((2, 96), f32)
    for ci in range(3):
        pad1[2:34, ci * 32:(ci + 1) * 32] = x_ref[ci]
    acc1 = jnp.zeros((32, 128), f32)                       # lanes = w*4 + cout
    for dy in range(5):
        acc1 = acc1 + mm(pad1[dy:dy + 32, :], w1_ref[dy])
    y1 = jnp.maximum(acc1 + b1_ref[...], 0.0)              # (32, 128)

    # -------- pool1: 3x3 / stride 2 / pad 1 max (separable) ----------------
    colp1 = max3(mm(y1, cs1_ref[0]), mm(y1, cs1_ref[1]), mm(y1, cs1_ref[2]))          # (32, 64)
    pool1 = max3(mm(rs1_ref[0], colp1), mm(rs1_ref[1], colp1), mm(rs1_ref[2], colp1))  # (16, 64)

    # -------- stage 2: conv2 (+ folded BN) + ReLU ---------------------------
    pad2[0:2, :] = jnp.zeros((2, 64), f32)
    pad2[18:20, :] = jnp.zeros((2, 64), f32)
    pad2[2:18, :] = pool1                                   # lanes = w*4 + cin
    acc2 = jnp.zeros((16, 128), f32)                        # lanes = w*8 + cout
    for dy in range(5):
        acc2 = acc2 + mm(pad2[dy:dy + 16, :], w2_ref[dy])
    y2 = jnp.maximum(acc2 + b2_ref[...], 0.0)               # (16, 128)

    # -------- pool2 ---------------------------------------------------------
    colp2 = max3(mm(y2, cs2_ref[0]), mm(y2, cs2_ref[1]), mm(y2, cs2_ref[2]))          # (16, 64)
    pool2 = max3(mm(rs2_ref[0], colp2), mm(rs2_ref[1], colp2), mm(rs2_ref[2], colp2))  # (8, 64)

    # -------- stage 3: conv3 (+ folded BN) + ReLU ---------------------------
    pad3[0:2, :] = jnp.zeros((2, 64), f32)
    pad3[10:12, :] = jnp.zeros((2, 64), f32)
    pad3[2:10, :] = pool2                                   # lanes = w*8 + cin
    acc3 = jnp.zeros((8, 128), f32)                         # lanes = w*16 + cout
    for dy in range(5):
        acc3 = acc3 + mm(pad3[dy:dy + 8, :], w3_ref[dy])
    y3 = jnp.maximum(acc3 + b3_ref[...], 0.0)               # (8, 128)

    # -------- fc (+ folded BN) + ReLU; dropout == identity in eval ----------
    # wf rows were pre-permuted to the packed (h, w*16 + c) order, so the
    # PyTorch NCHW x.view(N, 1024) flatten needs no run-time transpose.
    fc = jnp.zeros((1, 512), f32)
    for h in range(8):
        fc = fc + mm(y3[h:h + 1, :], wf_ref[h])
    out_ref[...] = jnp.maximum(fc + bf_ref[...], 0.0)


# ------------------------------- wrapper ------------------------------------ #

def feature_generator_small(x_nchw, pk):
    """Fused forward pass of FeatureGeneratorSmall (eval mode). x: (N, 3, 32, 32)."""
    n = x_nchw.shape[0]
    x = x_nchw.astype(jnp.float32)
    weights = (pk["band1"], pk["b1p"], pk["S1"], pk["R1"],
               pk["band2"], pk["b2p"], pk["S2"], pk["R2"],
               pk["band3"], pk["b3p"], pk["wfh"], pk["bfp"])

    def _resident(shape):               # full-array block, constant index map
        nd = len(shape)
        return pl.BlockSpec(tuple(shape), lambda i, _nd=nd: (0,) * _nd)

    out = pl.pallas_call(
        _fused_kernel,
        out_shape=jax.ShapeDtypeStruct((n, 1, 512), jnp.float32),
        grid=(n,),
        in_specs=[pl.BlockSpec((None, 3, 32, 32), lambda i: (i, 0, 0, 0))]
                 + [_resident(w.shape) for w in weights],
        out_specs=pl.BlockSpec((None, 1, 512), lambda i: (i, 0, 0)),
        scratch_shapes=[
            pltpu.VMEM((36, 96), jnp.float32),      # conv1 input (channels packed in lanes), 2 zero guard rows
            pltpu.VMEM((20, 64), jnp.float32),      # conv2 input, 2 zero guard rows
            pltpu.VMEM((12, 64), jnp.float32),      # conv3 input, 2 zero guard rows
        ],
        compiler_params=pltpu.CompilerParams(
            dimension_semantics=("parallel",)),     # v7x: both TCs split the batch
    )(x, *weights)
    return out.reshape(n, 512)


# ------------------------- offline parameter packing ------------------------ #

def _pack_params(p):
    """Fold eval-BN into the weights and repack everything into the lane-dense,
    banded / selection-matrix form consumed by the fused kernel (done once)."""
    f = np.float32
    npf = lambda a: np.asarray(a, dtype=f)

    w1 = npf(p["w1"]) * npf(p["s1"])[None, None, None, :]   # (5,5,3,4)  * BN scale over Cout
    w2 = npf(p["w2"]) * npf(p["s2"])[None, None, None, :]   # (5,5,4,8)
    w3 = npf(p["w3"]) * npf(p["s3"])[None, None, None, :]   # (5,5,8,16)
    b1 = npf(p["b1"]) * npf(p["s1"]) + npf(p["t1"])
    b2 = npf(p["b2"]) * npf(p["s2"]) + npf(p["t2"])
    b3 = npf(p["b3"]) * npf(p["s3"]) + npf(p["t3"])
    wf = npf(p["wf"]) * npf(p["sf"])[None, :]                # (1024, 512)
    bf = npf(p["bf"]) * npf(p["sf"]) + npf(p["tf"])          # (512,)

    # conv1 bands: LHS lanes = ci*32 + w_in (96), out lanes = w*4 + co (128).
    band1 = np.zeros((5, 96, 128), f)
    for dy in range(5):
        for dx in range(5):
            for w in range(32):
                wi = w + dx - 2
                if 0 <= wi < 32:
                    for ci in range(3):
                        band1[dy, ci * 32 + wi, w * 4:(w + 1) * 4] = w1[dy, dx, ci]   # (4,)
    # conv2 bands: LHS lanes = w_in*4 + ci (64), out lanes = w*8 + co (128).
    band2 = np.zeros((5, 64, 128), f)
    for dy in range(5):
        for dx in range(5):
            for w in range(16):
                wi = w + dx - 2
                if 0 <= wi < 16:
                    band2[dy, wi * 4:(wi + 1) * 4, w * 8:(w + 1) * 8] = w2[dy, dx]    # (4,8)
    # conv3 bands: LHS lanes = w_in*8 + ci (64), out lanes = w*16 + co (128).
    band3 = np.zeros((5, 64, 128), f)
    for dy in range(5):
        for dx in range(5):
            for w in range(8):
                wi = w + dx - 2
                if 0 <= wi < 8:
                    band3[dy, wi * 8:(wi + 1) * 8, w * 16:(w + 1) * 16] = w3[dy, dx]  # (8,16)

    # pool selection matrices (0/1): column tap d-1 with stride-2 downsample,
    # and row tap d-1 with stride-2 downsample.
    def col_sel(win, wout, c):
        s = np.zeros((3, win * c, wout * c), f)
        for d in range(3):
            for wo in range(wout):
                wi = 2 * wo + d - 1
                if 0 <= wi < win:
                    for ch in range(c):
                        s[d, wi * c + ch, wo * c + ch] = 1.0
        return s

    def row_sel(hin, hout):
        r = np.zeros((3, hout, hin), f)
        for d in range(3):
            for ho in range(hout):
                hi = 2 * ho + d - 1
                if 0 <= hi < hin:
                    r[d, ho, hi] = 1.0
        return r

    S1, R1 = col_sel(32, 16, 4), row_sel(32, 16)             # (3,128,64), (3,16,32)
    S2, R2 = col_sel(16, 8, 8), row_sel(16, 8)               # (3,128,64), (3,8,16)

    # fc: permute rows from PyTorch NCHW-flatten order (c*64 + h*8 + w) to the
    # kernel's packed order (h, w*16 + c).
    wfh = np.zeros((8, 128, 512), f)
    for h in range(8):
        for w in range(8):
            for c in range(16):
                wfh[h, w * 16 + c, :] = wf[c * 64 + h * 8 + w, :]

    pk = dict(
        band1=band1, b1p=np.tile(b1, 32).reshape(1, 128), S1=S1, R1=R1,
        band2=band2, b2p=np.tile(b2, 16).reshape(1, 128), S2=S2, R2=R2,
        band3=band3, b3p=np.tile(b3, 8).reshape(1, 128),
        wfh=wfh, bfp=bf.reshape(1, 512),
    )
    return {k: jnp.asarray(v) for k, v in pk.items()}


# ------------------------- pure-JAX reference check ------------------------- #

def _reference(x_nchw, p):
    x = jnp.transpose(x_nchw, (0, 2, 3, 1)).astype(jnp.float32)

    def conv(x, w, b, s, t):
        y = jax.lax.conv_general_dilated(
            x, w, window_strides=(1, 1), padding="SAME",
            dimension_numbers=("NHWC", "HWIO", "NHWC"))
        return jnp.maximum((y + b) * s + t, 0.0)

    def pool(x):
        return jax.lax.reduce_window(
            x, -jnp.inf, jax.lax.max, (1, 3, 3, 1), (1, 2, 2, 1),
            [(0, 0), (1, 1), (1, 1), (0, 0)])

    x = pool(conv(x, p["w1"], p["b1"], p["s1"], p["t1"]))
    x = pool(conv(x, p["w2"], p["b2"], p["s2"], p["t2"]))
    x = conv(x, p["w3"], p["b3"], p["s3"], p["t3"])
    xf = jnp.transpose(x, (0, 3, 1, 2)).reshape(x.shape[0], -1)   # NCHW flatten
    y = (jnp.dot(xf, p["wf"]) + p["bf"]) * p["sf"] + p["tf"]
    return jnp.maximum(y, 0.0)


# --------------------------------- params ----------------------------------- #

def _bn_fold(key, c, eps=1e-5):
    """Fold eval-mode BatchNorm (gamma, beta, running stats) -> scale, shift."""
    k1, k2, k3, k4 = jax.random.split(key, 4)
    gamma = 1.0 + 0.1 * jax.random.normal(k1, (c,), jnp.float32)
    beta = 0.1 * jax.random.normal(k2, (c,), jnp.float32)
    mean = 0.1 * jax.random.normal(k3, (c,), jnp.float32)
    var = 0.5 + jnp.abs(jax.random.normal(k4, (c,), jnp.float32))
    scale = gamma / jnp.sqrt(var + eps)
    shift = beta - mean * scale
    return scale, shift


def _make_params(key):
    ks = jax.random.split(key, 12)
    p = {}
    # conv weights stored as [5, 5, Cin, Cout] (== PyTorch [Cout,Cin,5,5].transpose(2,3,1,0))
    p["w1"] = jax.random.normal(ks[0], (5, 5, 3, 4), jnp.float32) / np.sqrt(5 * 5 * 3)
    p["b1"] = 0.1 * jax.random.normal(ks[1], (4,), jnp.float32)
    p["s1"], p["t1"] = _bn_fold(ks[2], 4)
    p["w2"] = jax.random.normal(ks[3], (5, 5, 4, 8), jnp.float32) / np.sqrt(5 * 5 * 4)
    p["b2"] = 0.1 * jax.random.normal(ks[4], (8,), jnp.float32)
    p["s2"], p["t2"] = _bn_fold(ks[5], 8)
    p["w3"] = jax.random.normal(ks[6], (5, 5, 8, 16), jnp.float32) / np.sqrt(5 * 5 * 8)
    p["b3"] = 0.1 * jax.random.normal(ks[7], (16,), jnp.float32)
    p["s3"], p["t3"] = _bn_fold(ks[8], 16)
    # fc weight stored as [1024, 512] (== PyTorch fc1.weight.T, rows in NCHW-flatten order)
    p["wf"] = jax.random.normal(ks[9], (1024, 512), jnp.float32) / np.sqrt(1024.0)
    p["bf"] = 0.1 * jax.random.normal(ks[10], (512,), jnp.float32)
    p["sf"], p["tf"] = _bn_fold(ks[11], 512)
    return p


if __name__ == "__main__":
    key = jax.random.PRNGKey(0)
    k_params, k_x = jax.random.split(key)
    params = _make_params(k_params)
    packed = _pack_params(params)

    # fc1 = Linear(8*8*16, 512) with two stride-2 pools => input is [N, 3, 32, 32]
    x = jax.random.normal(k_x, (2, 3, 32, 32), jnp.float32)

    fwd = jax.jit(feature_generator_small)
    out = jax.block_until_ready(fwd(x, packed))
    assert out.shape == (2, 512) and out.dtype == jnp.float32

    ref = jax.block_until_ready(_reference(x, params))
    np.testing.assert_allclose(np.asarray(out), np.asarray(ref), rtol=2e-3, atol=2e-3)

    print("KERNEL_OK")
</pallas_src>

<mosaic_0001>
module attributes {stable_mosaic.version = 11 : i64} {
  func.func @_fused_kernel(%arg0: i32, %arg1: memref<1x3x32x32xf32, #tpu.memory_space<vmem>>, %arg2: memref<5x96x128xf32, #tpu.memory_space<vmem>>, %arg3: memref<1x128xf32, #tpu.memory_space<vmem>>, %arg4: memref<3x128x64xf32, #tpu.memory_space<vmem>>, %arg5: memref<3x16x32xf32, #tpu.memory_space<vmem>>, %arg6: memref<5x64x128xf32, #tpu.memory_space<vmem>>, %arg7: memref<1x128xf32, #tpu.memory_space<vmem>>, %arg8: memref<3x128x64xf32, #tpu.memory_space<vmem>>, %arg9: memref<3x8x16xf32, #tpu.memory_space<vmem>>, %arg10: memref<5x64x128xf32, #tpu.memory_space<vmem>>, %arg11: memref<1x128xf32, #tpu.memory_space<vmem>>, %arg12: memref<8x128x512xf32, #tpu.memory_space<vmem>>, %arg13: memref<1x512xf32, #tpu.memory_space<vmem>>, %arg14: memref<1x1x512xf32, #tpu.memory_space<vmem>>, %arg15: memref<36x96xf32, #tpu.memory_space<vmem>>, %arg16: memref<20x64xf32, #tpu.memory_space<vmem>>, %arg17: memref<12x64xf32, #tpu.memory_space<vmem>>) attributes {dimension_semantics = [#tpu.dimension_semantics<parallel>], iteration_bounds = array<i64: 2>, scalar_prefetch = 0 : i64, scratch_operands = 3 : i64, tpu.core_type = #tpu.core_type<tc>, window_params = [{transform_indices = @transform_0, window_bounds = array<i64: 1, 3, 32, 32>}, {pipeline_mode = #tpu.pipeline_mode<synchronous>, transform_indices = @transform_1, window_bounds = array<i64: 5, 96, 128>}, {pipeline_mode = #tpu.pipeline_mode<synchronous>, transform_indices = @transform_2, window_bounds = array<i64: 1, 128>}, {pipeline_mode = #tpu.pipeline_mode<synchronous>, transform_indices = @transform_3, window_bounds = array<i64: 3, 128, 64>}, {pipeline_mode = #tpu.pipeline_mode<synchronous>, transform_indices = @transform_4, window_bounds = array<i64: 3, 16, 32>}, {pipeline_mode = #tpu.pipeline_mode<synchronous>, transform_indices = @transform_5, window_bounds = array<i64: 5, 64, 128>}, {pipeline_mode = #tpu.pipeline_mode<synchronous>, transform_indices = @transform_6, window_bounds = array<i64: 1, 128>}, {pipeline_mode = #tpu.pipeline_mode<synchronous>, transform_indices = @transform_7, window_bounds = array<i64: 3, 128, 64>}, {pipeline_mode = #tpu.pipeline_mode<synchronous>, transform_indices = @transform_8, window_bounds = array<i64: 3, 8, 16>}, {pipeline_mode = #tpu.pipeline_mode<synchronous>, transform_indices = @transform_9, window_bounds = array<i64: 5, 64, 128>}, {pipeline_mode = #tpu.pipeline_mode<synchronous>, transform_indices = @transform_10, window_bounds = array<i64: 1, 128>}, {pipeline_mode = #tpu.pipeline_mode<synchronous>, transform_indices = @transform_11, window_bounds = array<i64: 8, 128, 512>}, {pipeline_mode = #tpu.pipeline_mode<synchronous>, transform_indices = @transform_12, window_bounds = array<i64: 1, 512>}, {transform_indices = @transform_13, window_bounds = array<i64: 1, 1, 512>}]} {
    %cst = arith.constant 0.000000e+00 : f32
    %0 = vector.broadcast %cst : f32 to vector<2x96xf32>
    %c0 = arith.constant 0 : index
    %c0_0 = arith.constant 0 : index
    %1 = vector.load %arg15[%c0, %c0_0] : memref<36x96xf32, #tpu.memory_space<vmem>>, vector<2x96xf32>
    tpu.vector_store %arg15[%c0, %c0_0], %0 {strides = array<i32>} : memref<36x96xf32, #tpu.memory_space<vmem>>, vector<2x96xf32>,
    %cst_1 = arith.constant 0.000000e+00 : f32
    %2 = vector.broadcast %cst_1 : f32 to vector<2x96xf32>
    %c34 = arith.constant 34 : index
    %c0_2 = arith.constant 0 : index
    %3 = vector.load %arg15[%c34, %c0_2] : memref<36x96xf32, #tpu.memory_space<vmem>>, vector<2x96xf32>
    tpu.vector_store %arg15[%c34, %c0_2], %2 {strides = array<i32>} : memref<36x96xf32, #tpu.memory_space<vmem>>, vector<2x96xf32>,
    %c0_3 = arith.constant 0 : index
    %c0_4 = arith.constant 0 : index
    %c0_5 = arith.constant 0 : index
    %c0_6 = arith.constant 0 : index
    %4 = vector.load %arg1[%c0_3, %c0_4, %c0_5, %c0_6] : memref<1x3x32x32xf32, #tpu.memory_space<vmem>>, vector<1x1x32x32xf32>
    %5 = vector.shape_cast %4 : vector<1x1x32x32xf32> to vector<32x32xf32>
    %c2 = arith.constant 2 : index
    %c0_7 = arith.constant 0 : index
    %6 = vector.load %arg15[%c2, %c0_7] : memref<36x96xf32, #tpu.memory_space<vmem>>, vector<32x32xf32>
    tpu.vector_store %arg15[%c2, %c0_7], %5 {strides = array<i32>} : memref<36x96xf32, #tpu.memory_space<vmem>>, vector<32x32xf32>,
    %c0_8 = arith.constant 0 : index
    %c1 = arith.constant 1 : index
    %c0_9 = arith.constant 0 : index
    %c0_10 = arith.constant 0 : index
    %7 = vector.load %arg1[%c0_8, %c1, %c0_9, %c0_10] : memref<1x3x32x32xf32, #tpu.memory_space<vmem>>, vector<1x1x32x32xf32>
    %8 = vector.shape_cast %7 : vector<1x1x32x32xf32> to vector<32x32xf32>
    %c2_11 = arith.constant 2 : index
    %c32 = arith.constant 32 : index
    %9 = vector.load %arg15[%c2_11, %c32] : memref<36x96xf32, #tpu.memory_space<vmem>>, vector<32x32xf32>
    tpu.vector_store %arg15[%c2_11, %c32], %8 {strides = array<i32>} : memref<36x96xf32, #tpu.memory_space<vmem>>, vector<32x32xf32>,
    %c0_12 = arith.constant 0 : index
    %c2_13 = arith.constant 2 : index
    %c0_14 = arith.constant 0 : index
    %c0_15 = arith.constant 0 : index
    %10 = vector.load %arg1[%c0_12, %c2_13, %c0_14, %c0_15] : memref<1x3x32x32xf32, #tpu.memory_space<vmem>>, vector<1x1x32x32xf32>
    %11 = vector.shape_cast %10 : vector<1x1x32x32xf32> to vector<32x32xf32>
    %c2_16 = arith.constant 2 : index
    %c64 = arith.constant 64 : index
    %12 = vector.load %arg15[%c2_16, %c64] : memref<36x96xf32, #tpu.memory_space<vmem>>, vector<32x32xf32>
    tpu.vector_store %arg15[%c2_16, %c64], %11 {strides = array<i32>} : memref<36x96xf32, #tpu.memory_space<vmem>>, vector<32x32xf32>,
    %cst_17 = arith.constant 0.000000e+00 : f32
    %13 = vector.broadcast %cst_17 : f32 to vector<32x128xf32>
    %c0_18 = arith.constant 0 : index
    %c0_19 = arith.constant 0 : index
    %14 = vector.load %arg15[%c0_18, %c0_19] : memref<36x96xf32, #tpu.memory_space<vmem>>, vector<32x96xf32>
    %c0_20 = arith.constant 0 : index
    %c0_21 = arith.constant 0 : index
    %c0_22 = arith.constant 0 : index
    %15 = vector.load %arg2[%c0_20, %c0_21, %c0_22] : memref<5x96x128xf32, #tpu.memory_space<vmem>>, vector<1x96x128xf32>
    %16 = vector.shape_cast %15 : vector<1x96x128xf32> to vector<96x128xf32>
    %cst_23 = arith.constant dense<0.000000e+00> : vector<32x128xf32>
    %17 = tpu.matmul %14, %16, %cst_23 {dimension_numbers = #tpu.dot_dimension_numbers<[1], [0], [0], [1], [0, 0, 1, 1], [], []>} : vector<32x96xf32>, vector<96x128xf32>, vector<32x128xf32> -> vector<32x128xf32>
    %18 = arith.addf %13, %17 : vector<32x128xf32>
    %c1_24 = arith.constant 1 : index
    %c0_25 = arith.constant 0 : index
    %19 = vector.load %arg15[%c1_24, %c0_25] : memref<36x96xf32, #tpu.memory_space<vmem>>, vector<32x96xf32>
    %c1_26 = arith.constant 1 : index
    %c0_27 = arith.constant 0 : index
    %c0_28 = arith.constant 0 : index
    %20 = vector.load %arg2[%c1_26, %c0_27, %c0_28] : memref<5x96x128xf32, #tpu.memory_space<vmem>>, vector<1x96x128xf32>
    %21 = vector.shape_cast %20 : vector<1x96x128xf32> to vector<96x128xf32>
    %cst_29 = arith.constant dense<0.000000e+00> : vector<32x128xf32>
    %22 = tpu.matmul %19, %21, %cst_29 {dimension_numbers = #tpu.dot_dimension_numbers<[1], [0], [0], [1], [0, 0, 1, 1], [], []>} : vector<32x96xf32>, vector<96x128xf32>, vector<32x128xf32> -> vector<32x128xf32>
    %23 = arith.addf %18, %22 : vector<32x128xf32>
    %c2_30 = arith.constant 2 : index
    %c0_31 = arith.constant 0 : index
    %24 = vector.load %arg15[%c2_30, %c0_31] : memref<36x96xf32, #tpu.memory_space<vmem>>, vector<32x96xf32>
    %c2_32 = arith.constant 2 : index
    %c0_33 = arith.constant 0 : index
    %c0_34 = arith.constant 0 : index
    %25 = vector.load %arg2[%c2_32, %c0_33, %c0_34] : memref<5x96x128xf32, #tpu.memory_space<vmem>>, vector<1x96x128xf32>
    %26 = vector.shape_cast %25 : vector<1x96x128xf32> to vector<96x128xf32>
    %cst_35 = arith.constant dense<0.000000e+00> : vector<32x128xf32>
    %27 = tpu.matmul %24, %26, %cst_35 {dimension_numbers = #tpu.dot_dimension_numbers<[1], [0], [0], [1], [0, 0, 1, 1], [], []>} : vector<32x96xf32>, vector<96x128xf32>, vector<32x128xf32> -> vector<32x128xf32>
    %28 = arith.addf %23, %27 : vector<32x128xf32>
    %c3 = arith.constant 3 : index
    %c0_36 = arith.constant 0 : index
    %29 = vector.load %arg15[%c3, %c0_36] : memref<36x96xf32, #tpu.memory_space<vmem>>, vector<32x96xf32>
    %c3_37 = arith.constant 3 : index
    %c0_38 = arith.constant 0 : index
    %c0_39 = arith.constant 0 : index
    %30 = vector.load %arg2[%c3_37, %c0_38, %c0_39] : memref<5x96x128xf32, #tpu.memory_space<vmem>>, vector<1x96x128xf32>
    %31 = vector.shape_cast %30 : vector<1x96x128xf32> to vector<96x128xf32>
    %cst_40 = arith.constant dense<0.000000e+00> : vector<32x128xf32>
    %32 = tpu.matmul %29, %31, %cst_40 {dimension_numbers = #tpu.dot_dimension_numbers<[1], [0], [0], [1], [0, 0, 1, 1], [], []>} : vector<32x96xf32>, vector<96x128xf32>, vector<32x128xf32> -> vector<32x128xf32>
    %33 = arith.addf %28, %32 : vector<32x128xf32>
    %c4 = arith.constant 4 : index
    %c0_41 = arith.constant 0 : index
    %34 = vector.load %arg15[%c4, %c0_41] : memref<36x96xf32, #tpu.memory_space<vmem>>, vector<32x96xf32>
    %c4_42 = arith.constant 4 : index
    %c0_43 = arith.constant 0 : index
    %c0_44 = arith.constant 0 : index
    %35 = vector.load %arg2[%c4_42, %c0_43, %c0_44] : memref<5x96x128xf32, #tpu.memory_space<vmem>>, vector<1x96x128xf32>
    %36 = vector.shape_cast %35 : vector<1x96x128xf32> to vector<96x128xf32>
    %cst_45 = arith.constant dense<0.000000e+00> : vector<32x128xf32>
    %37 = tpu.matmul %34, %36, %cst_45 {dimension_numbers = #tpu.dot_dimension_numbers<[1], [0], [0], [1], [0, 0, 1, 1], [], []>} : vector<32x96xf32>, vector<96x128xf32>, vector<32x128xf32> -> vector<32x128xf32>
    %38 = arith.addf %33, %37 : vector<32x128xf32>
    %c0_46 = arith.constant 0 : index
    %c0_47 = arith.constant 0 : index
    %39 = vector.load %arg3[%c0_46, %c0_47] : memref<1x128xf32, #tpu.memory_space<vmem>>, vector<1x128xf32>
    %40 = vector.broadcast %39 : vector<1x128xf32> to vector<32x128xf32>
    %41 = arith.addf %38, %40 : vector<32x128xf32>
    %cst_48 = arith.constant 0.000000e+00 : f32
    %42 = vector.broadcast %cst_48 : f32 to vector<32x128xf32>
    %43 = arith.maximumf %41, %42 : vector<32x128xf32>
    %c0_49 = arith.constant 0 : index
    %c0_50 = arith.constant 0 : index
    %c0_51 = arith.constant 0 : index
    %44 = vector.load %arg4[%c0_49, %c0_50, %c0_51] : memref<3x128x64xf32, #tpu.memory_space<vmem>>, vector<1x128x64xf32>
    %45 = vector.shape_cast %44 : vector<1x128x64xf32> to vector<128x64xf32>
    %cst_52 = arith.constant dense<0.000000e+00> : vector<32x64xf32>
    %46 = tpu.matmul %43, %45, %cst_52 {dimension_numbers = #tpu.dot_dimension_numbers<[1], [0], [0], [1], [0, 0, 1, 1], [], []>} : vector<32x128xf32>, vector<128x64xf32>, vector<32x64xf32> -> vector<32x64xf32>
    %c1_53 = arith.constant 1 : index
    %c0_54 = arith.constant 0 : index
    %c0_55 = arith.constant 0 : index
    %47 = vector.load %arg4[%c1_53, %c0_54, %c0_55] : memref<3x128x64xf32, #tpu.memory_space<vmem>>, vector<1x128x64xf32>
    %48 = vector.shape_cast %47 : vector<1x128x64xf32> to vector<128x64xf32>
    %cst_56 = arith.constant dense<0.000000e+00> : vector<32x64xf32>
    %49 = tpu.matmul %43, %48, %cst_56 {dimension_numbers = #tpu.dot_dimension_numbers<[1], [0], [0], [1], [0, 0, 1, 1], [], []>} : vector<32x128xf32>, vector<128x64xf32>, vector<32x64xf32> -> vector<32x64xf32>
    %c2_57 = arith.constant 2 : index
    %c0_58 = arith.constant 0 : index
    %c0_59 = arith.constant 0 : index
    %50 = vector.load %arg4[%c2_57, %c0_58, %c0_59] : memref<3x128x64xf32, #tpu.memory_space<vmem>>, vector<1x128x64xf32>
    %51 = vector.shape_cast %50 : vector<1x128x64xf32> to vector<128x64xf32>
    %cst_60 = arith.constant dense<0.000000e+00> : vector<32x64xf32>
    %52 = tpu.matmul %43, %51, %cst_60 {dimension_numbers = #tpu.dot_dimension_numbers<[1], [0], [0], [1], [0, 0, 1, 1], [], []>} : vector<32x128xf32>, vector<128x64xf32>, vector<32x64xf32> -> vector<32x64xf32>
    %53 = arith.maximumf %46, %49 : vector<32x64xf32>
    %54 = arith.maximumf %53, %52 : vector<32x64xf32>
    %c0_61 = arith.constant 0 : index
    %c0_62 = arith.constant 0 : index
    %c0_63 = arith.constant 0 : index
    %55 = vector.load %arg5[%c0_61, %c0_62, %c0_63] : memref<3x16x32xf32, #tpu.memory_space<vmem>>, vector<1x16x32xf32>
    %56 = vector.shape_cast %55 : vector<1x16x32xf32> to vector<16x32xf32>
    %cst_64 = arith.constant dense<0.000000e+00> : vector<16x64xf32>
    %57 = tpu.matmul %56, %54, %cst_64 {dimension_numbers = #tpu.dot_dimension_numbers<[1], [0], [0], [1], [0, 0, 1, 1], [], []>} : vector<16x32xf32>, vector<32x64xf32>, vector<16x64xf32> -> vector<16x64xf32>
    %c1_65 = arith.constant 1 : index
    %c0_66 = arith.constant 0 : index
    %c0_67 = arith.constant 0 : index
    %58 = vector.load %arg5[%c1_65, %c0_66, %c0_67] : memref<3x16x32xf32, #tpu.memory_space<vmem>>, vector<1x16x32xf32>
    %59 = vector.shape_cast %58 : vector<1x16x32xf32> to vector<16x32xf32>
    %cst_68 = arith.constant dense<0.000000e+00> : vector<16x64xf32>
    %60 = tpu.matmul %59, %54, %cst_68 {dimension_numbers = #tpu.dot_dimension_numbers<[1], [0], [0], [1], [0, 0, 1, 1], [], []>} : vector<16x32xf32>, vector<32x64xf32>, vector<16x64xf32> -> vector<16x64xf32>
    %c2_69 = arith.constant 2 : index
    %c0_70 = arith.constant 0 : index
    %c0_71 = arith.constant 0 : index
    %61 = vector.load %arg5[%c2_69, %c0_70, %c0_71] : memref<3x16x32xf32, #tpu.memory_space<vmem>>, vector<1x16x32xf32>
    %62 = vector.shape_cast %61 : vector<1x16x32xf32> to vector<16x32xf32>
    %cst_72 = arith.constant dense<0.000000e+00> : vector<16x64xf32>
    %63 = tpu.matmul %62, %54, %cst_72 {dimension_numbers = #tpu.dot_dimension_numbers<[1], [0], [0], [1], [0, 0, 1, 1], [], []>} : vector<16x32xf32>, vector<32x64xf32>, vector<16x64xf32> -> vector<16x64xf32>
    %64 = arith.maximumf %57, %60 : vector<16x64xf32>
    %65 = arith.maximumf %64, %63 : vector<16x64xf32>
    %cst_73 = arith.constant 0.000000e+00 : f32
    %66 = vector.broadcast %cst_73 : f32 to vector<2x64xf32>
    %c0_74 = arith.constant 0 : index
    %c0_75 = arith.constant 0 : index
    %67 = vector.load %arg16[%c0_74, %c0_75] : memref<20x64xf32, #tpu.memory_space<vmem>>, vector<2x64xf32>
    tpu.vector_store %arg16[%c0_74, %c0_75], %66 {strides = array<i32>} : memref<20x64xf32, #tpu.memory_space<vmem>>, vector<2x64xf32>,
    %cst_76 = arith.constant 0.000000e+00 : f32
    %68 = vector.broadcast %cst_76 : f32 to vector<2x64xf32>
    %c18 = arith.constant 18 : index
    %c0_77 = arith.constant 0 : index
    %69 = vector.load %arg16[%c18, %c0_77] : memref<20x64xf32, #tpu.memory_space<vmem>>, vector<2x64xf32>
    tpu.vector_store %arg16[%c18, %c0_77], %68 {strides = array<i32>} : memref<20x64xf32, #tpu.memory_space<vmem>>, vector<2x64xf32>,
    %c2_78 = arith.constant 2 : index
    %c0_79 = arith.constant 0 : index
    %70 = vector.load %arg16[%c2_78, %c0_79] : memref<20x64xf32, #tpu.memory_space<vmem>>, vector<16x64xf32>
    tpu.vector_store %arg16[%c2_78, %c0_79], %65 {strides = array<i32>} : memref<20x64xf32, #tpu.memory_space<vmem>>, vector<16x64xf32>,
    %cst_80 = arith.constant 0.000000e+00 : f32
    %71 = vector.broadcast %cst_80 : f32 to vector<16x128xf32>
    %c0_81 = arith.constant 0 : index
    %c0_82 = arith.constant 0 : index
    %72 = vector.load %arg16[%c0_81, %c0_82] : memref<20x64xf32, #tpu.memory_space<vmem>>, vector<16x64xf32>
    %c0_83 = arith.constant 0 : index
    %c0_84 = arith.constant 0 : index
    %c0_85 = arith.constant 0 : index
    %73 = vector.load %arg6[%c0_83, %c0_84, %c0_85] : memref<5x64x128xf32, #tpu.memory_space<vmem>>, vector<1x64x128xf32>
    %74 = vector.shape_cast %73 : vector<1x64x128xf32> to vector<64x128xf32>
    %cst_86 = arith.constant dense<0.000000e+00> : vector<16x128xf32>
    %75 = tpu.matmul %72, %74, %cst_86 {dimension_numbers = #tpu.dot_dimension_numbers<[1], [0], [0], [1], [0, 0, 1, 1], [], []>} : vector<16x64xf32>, vector<64x128xf32>, vector<16x128xf32> -> vector<16x128xf32>
    %76 = arith.addf %71, %75 : vector<16x128xf32>
    %c1_87 = arith.constant 1 : index
    %c0_88 = arith.constant 0 : index
    %77 = vector.load %arg16[%c1_87, %c0_88] : memref<20x64xf32, #tpu.memory_space<vmem>>, vector<16x64xf32>
    %c1_89 = arith.constant 1 : index
    %c0_90 = arith.constant 0 : index
    %c0_91 = arith.constant 0 : index
    %78 = vector.load %arg6[%c1_89, %c0_90, %c0_91] : memref<5x64x128xf32, #tpu.memory_space<vmem>>, vector<1x64x128xf32>
    %79 = vector.shape_cast %78 : vector<1x64x128xf32> to vector<64x128xf32>
    %cst_92 = arith.constant dense<0.000000e+00> : vector<16x128xf32>
    %80 = tpu.matmul %77, %79, %cst_92 {dimension_numbers = #tpu.dot_dimension_numbers<[1], [0], [0], [1], [0, 0, 1, 1], [], []>} : vector<16x64xf32>, vector<64x128xf32>, vector<16x128xf32> -> vector<16x128xf32>
    %81 = arith.addf %76, %80 : vector<16x128xf32>
    %c2_93 = arith.constant 2 : index
    %c0_94 = arith.constant 0 : index
    %82 = vector.load %arg16[%c2_93, %c0_94] : memref<20x64xf32, #tpu.memory_space<vmem>>, vector<16x64xf32>
    %c2_95 = arith.constant 2 : index
    %c0_96 = arith.constant 0 : index
    %c0_97 = arith.constant 0 : index
    %83 = vector.load %arg6[%c2_95, %c0_96, %c0_97] : memref<5x64x128xf32, #tpu.memory_space<vmem>>, vector<1x64x128xf32>
    %84 = vector.shape_cast %83 : vector<1x64x128xf32> to vector<64x128xf32>
    %cst_98 = arith.constant dense<0.000000e+00> : vector<16x128xf32>
    %85 = tpu.matmul %82, %84, %cst_98 {dimension_numbers = #tpu.dot_dimension_numbers<[1], [0], [0], [1], [0, 0, 1, 1], [], []>} : vector<16x64xf32>, vector<64x128xf32>, vector<16x128xf32> -> vector<16x128xf32>
    %86 = arith.addf %81, %85 : vector<16x128xf32>
    %c3_99 = arith.constant 3 : index
    %c0_100 = arith.constant 0 : index
    %87 = vector.load %arg16[%c3_99, %c0_100] : memref<20x64xf32, #tpu.memory_space<vmem>>, vector<16x64xf32>
    %c3_101 = arith.constant 3 : index
    %c0_102 = arith.constant 0 : index
    %c0_103 = arith.constant 0 : index
    %88 = vector.load %arg6[%c3_101, %c0_102, %c0_103] : memref<5x64x128xf32, #tpu.memory_space<vmem>>, vector<1x64x128xf32>
    %89 = vector.shape_cast %88 : vector<1x64x128xf32> to vector<64x128xf32>
    %cst_104 = arith.constant dense<0.000000e+00> : vector<16x128xf32>
    %90 = tpu.matmul %87, %89, %cst_104 {dimension_numbers = #tpu.dot_dimension_numbers<[1], [0], [0], [1], [0, 0, 1, 1], [], []>} : vector<16x64xf32>, vector<64x128xf32>, vector<16x128xf32> -> vector<16x128xf32>
    %91 = arith.addf %86, %90 : vector<16x128xf32>
    %c4_105 = arith.constant 4 : index
    %c0_106 = arith.constant 0 : index
    %92 = vector.load %arg16[%c4_105, %c0_106] : memref<20x64xf32, #tpu.memory_space<vmem>>, vector<16x64xf32>
    %c4_107 = arith.constant 4 : index
    %c0_108 = arith.constant 0 : index
    %c0_109 = arith.constant 0 : index
    %93 = vector.load %arg6[%c4_107, %c0_108, %c0_109] : memref<5x64x128xf32, #tpu.memory_space<vmem>>, vector<1x64x128xf32>
    %94 = vector.shape_cast %93 : vector<1x64x128xf32> to vector<64x128xf32>
    %cst_110 = arith.constant dense<0.000000e+00> : vector<16x128xf32>
    %95 = tpu.matmul %92, %94, %cst_110 {dimension_numbers = #tpu.dot_dimension_numbers<[1], [0], [0], [1], [0, 0, 1, 1], [], []>} : vector<16x64xf32>, vector<64x128xf32>, vector<16x128xf32> -> vector<16x128xf32>
    %96 = arith.addf %91, %95 : vector<16x128xf32>
    %c0_111 = arith.constant 0 : index
    %c0_112 = arith.constant 0 : index
    %97 = vector.load %arg7[%c0_111, %c0_112] : memref<1x128xf32, #tpu.memory_space<vmem>>, vector<1x128xf32>
    %98 = vector.broadcast %97 : vector<1x128xf32> to vector<16x128xf32>
    %99 = arith.addf %96, %98 : vector<16x128xf32>
    %cst_113 = arith.constant 0.000000e+00 : f32
    %100 = vector.broadcast %cst_113 : f32 to vector<16x128xf32>
    %101 = arith.maximumf %99, %100 : vector<16x128xf32>
    %c0_114 = arith.constant 0 : index
    %c0_115 = arith.constant 0 : index
    %c0_116 = arith.constant 0 : index
    %102 = vector.load %arg8[%c0_114, %c0_115, %c0_116] : memref<3x128x64xf32, #tpu.memory_space<vmem>>, vector<1x128x64xf32>
    %103 = vector.shape_cast %102 : vector<1x128x64xf32> to vector<128x64xf32>
    %cst_117 = arith.constant dense<0.000000e+00> : vector<16x64xf32>
    %104 = tpu.matmul %101, %103, %cst_117 {dimension_numbers = #tpu.dot_dimension_numbers<[1], [0], [0], [1], [0, 0, 1, 1], [], []>} : vector<16x128xf32>, vector<128x64xf32>, vector<16x64xf32> -> vector<16x64xf32>
    %c1_118 = arith.constant 1 : index
    %c0_119 = arith.constant 0 : index
    %c0_120 = arith.constant 0 : index
    %105 = vector.load %arg8[%c1_118, %c0_119, %c0_120] : memref<3x128x64xf32, #tpu.memory_space<vmem>>, vector<1x128x64xf32>
    %106 = vector.shape_cast %105 : vector<1x128x64xf32> to vector<128x64xf32>
    %cst_121 = arith.constant dense<0.000000e+00> : vector<16x64xf32>
    %107 = tpu.matmul %101, %106, %cst_121 {dimension_numbers = #tpu.dot_dimension_numbers<[1], [0], [0], [1], [0, 0, 1, 1], [], []>} : vector<16x128xf32>, vector<128x64xf32>, vector<16x64xf32> -> vector<16x64xf32>
    %c2_122 = arith.constant 2 : index
    %c0_123 = arith.constant 0 : index
    %c0_124 = arith.constant 0 : index
    %108 = vector.load %arg8[%c2_122, %c0_123, %c0_124] : memref<3x128x64xf32, #tpu.memory_space<vmem>>, vector<1x128x64xf32>
    %109 = vector.shape_cast %108 : vector<1x128x64xf32> to vector<128x64xf32>
    %cst_125 = arith.constant dense<0.000000e+00> : vector<16x64xf32>
    %110 = tpu.matmul %101, %109, %cst_125 {dimension_numbers = #tpu.dot_dimension_numbers<[1], [0], [0], [1], [0, 0, 1, 1], [], []>} : vector<16x128xf32>, vector<128x64xf32>, vector<16x64xf32> -> vector<16x64xf32>
    %111 = arith.maximumf %104, %107 : vector<16x64xf32>
    %112 = arith.maximumf %111, %110 : vector<16x64xf32>
    %c0_126 = arith.constant 0 : index
    %c0_127 = arith.constant 0 : index
    %c0_128 = arith.constant 0 : index
    %113 = vector.load %arg9[%c0_126, %c0_127, %c0_128] : memref<3x8x16xf32, #tpu.memory_space<vmem>>, vector<1x8x16xf32>
    %114 = vector.shape_cast %113 : vector<1x8x16xf32> to vector<8x16xf32>
    %cst_129 = arith.constant dense<0.000000e+00> : vector<8x64xf32>
    %115 = tpu.matmul %114, %112, %cst_129 {dimension_numbers = #tpu.dot_dimension_numbers<[1], [0], [0], [1], [0, 0, 1, 1], [], []>} : vector<8x16xf32>, vector<16x64xf32>, vector<8x64xf32> -> vector<8x64xf32>
    %c1_130 = arith.constant 1 : index
    %c0_131 = arith.constant 0 : index
    %c0_132 = arith.constant 0 : index
    %116 = vector.load %arg9[%c1_130, %c0_131, %c0_132] : memref<3x8x16xf32, #tpu.memory_space<vmem>>, vector<1x8x16xf32>
    %117 = vector.shape_cast %116 : vector<1x8x16xf32> to vector<8x16xf32>
    %cst_133 = arith.constant dense<0.000000e+00> : vector<8x64xf32>
    %118 = tpu.matmul %117, %112, %cst_133 {dimension_numbers = #tpu.dot_dimension_numbers<[1], [0], [0], [1], [0, 0, 1, 1], [], []>} : vector<8x16xf32>, vector<16x64xf32>, vector<8x64xf32> -> vector<8x64xf32>
    %c2_134 = arith.constant 2 : index
    %c0_135 = arith.constant 0 : index
    %c0_136 = arith.constant 0 : index
    %119 = vector.load %arg9[%c2_134, %c0_135, %c0_136] : memref<3x8x16xf32, #tpu.memory_space<vmem>>, vector<1x8x16xf32>
    %120 = vector.shape_cast %119 : vector<1x8x16xf32> to vector<8x16xf32>
    %cst_137 = arith.constant dense<0.000000e+00> : vector<8x64xf32>
    %121 = tpu.matmul %120, %112, %cst_137 {dimension_numbers = #tpu.dot_dimension_numbers<[1], [0], [0], [1], [0, 0, 1, 1], [], []>} : vector<8x16xf32>, vector<16x64xf32>, vector<8x64xf32> -> vector<8x64xf32>
    %122 = arith.maximumf %115, %118 : vector<8x64xf32>
    %123 = arith.maximumf %122, %121 : vector<8x64xf32>
    %cst_138 = arith.constant 0.000000e+00 : f32
    %124 = vector.broadcast %cst_138 : f32 to vector<2x64xf32>
    %c0_139 = arith.constant 0 : index
    %c0_140 = arith.constant 0 : index
    %125 = vector.load %arg17[%c0_139, %c0_140] : memref<12x64xf32, #tpu.memory_space<vmem>>, vector<2x64xf32>
    tpu.vector_store %arg17[%c0_139, %c0_140], %124 {strides = array<i32>} : memref<12x64xf32, #tpu.memory_space<vmem>>, vector<2x64xf32>,
    %cst_141 = arith.constant 0.000000e+00 : f32
    %126 = vector.broadcast %cst_141 : f32 to vector<2x64xf32>
    %c10 = arith.constant 10 : index
    %c0_142 = arith.constant 0 : index
    %127 = vector.load %arg17[%c10, %c0_142] : memref<12x64xf32, #tpu.memory_space<vmem>>, vector<2x64xf32>
    tpu.vector_store %arg17[%c10, %c0_142], %126 {strides = array<i32>} : memref<12x64xf32, #tpu.memory_space<vmem>>, vector<2x64xf32>,
    %c2_143 = arith.constant 2 : index
    %c0_144 = arith.constant 0 : index
    %128 = vector.load %arg17[%c2_143, %c0_144] : memref<12x64xf32, #tpu.memory_space<vmem>>, vector<8x64xf32>
    tpu.vector_store %arg17[%c2_143, %c0_144], %123 {strides = array<i32>} : memref<12x64xf32, #tpu.memory_space<vmem>>, vector<8x64xf32>,
    %cst_145 = arith.constant 0.000000e+00 : f32
    %129 = vector.broadcast %cst_145 : f32 to vector<8x128xf32>
    %c0_146 = arith.constant 0 : index
    %c0_147 = arith.constant 0 : index
    %130 = vector.load %arg17[%c0_146, %c0_147] : memref<12x64xf32, #tpu.memory_space<vmem>>, vector<8x64xf32>
    %c0_148 = arith.constant 0 : index
    %c0_149 = arith.constant 0 : index
    %c0_150 = arith.constant 0 : index
    %131 = vector.load %arg10[%c0_148, %c0_149, %c0_150] : memref<5x64x128xf32, #tpu.memory_space<vmem>>, vector<1x64x128xf32>
    %132 = vector.shape_cast %131 : vector<1x64x128xf32> to vector<64x128xf32>
    %cst_151 = arith.constant dense<0.000000e+00> : vector<8x128xf32>
    %133 = tpu.matmul %130, %132, %cst_151 {dimension_numbers = #tpu.dot_dimension_numbers<[1], [0], [0], [1], [0, 0, 1, 1], [], []>} : vector<8x64xf32>, vector<64x128xf32>, vector<8x128xf32> -> vector<8x128xf32>
    %134 = arith.addf %129, %133 : vector<8x128xf32>
    %c1_152 = arith.constant 1 : index
    %c0_153 = arith.constant 0 : index
    %135 = vector.load %arg17[%c1_152, %c0_153] : memref<12x64xf32, #tpu.memory_space<vmem>>, vector<8x64xf32>
    %c1_154 = arith.constant 1 : index
    %c0_155 = arith.constant 0 : index
    %c0_156 = arith.constant 0 : index
    %136 = vector.load %arg10[%c1_154, %c0_155, %c0_156] : memref<5x64x128xf32, #tpu.memory_space<vmem>>, vector<1x64x128xf32>
    %137 = vector.shape_cast %136 : vector<1x64x128xf32> to vector<64x128xf32>
    %cst_157 = arith.constant dense<0.000000e+00> : vector<8x128xf32>
    %138 = tpu.matmul %135, %137, %cst_157 {dimension_numbers = #tpu.dot_dimension_numbers<[1], [0], [0], [1], [0, 0, 1, 1], [], []>} : vector<8x64xf32>, vector<64x128xf32>, vector<8x128xf32> -> vector<8x128xf32>
    %139 = arith.addf %134, %138 : vector<8x128xf32>
    %c2_158 = arith.constant 2 : index
    %c0_159 = arith.constant 0 : index
    %140 = vector.load %arg17[%c2_158, %c0_159] : memref<12x64xf32, #tpu.memory_space<vmem>>, vector<8x64xf32>
    %c2_160 = arith.constant 2 : index
    %c0_161 = arith.constant 0 : index
    %c0_162 = arith.constant 0 : index
    %141 = vector.load %arg10[%c2_160, %c0_161, %c0_162] : memref<5x64x128xf32, #tpu.memory_space<vmem>>, vector<1x64x128xf32>
    %142 = vector.shape_cast %141 : vector<1x64x128xf32> to vector<64x128xf32>
    %cst_163 = arith.constant dense<0.000000e+00> : vector<8x128xf32>
    %143 = tpu.matmul %140, %142, %cst_163 {dimension_numbers = #tpu.dot_dimension_numbers<[1], [0], [0], [1], [0, 0, 1, 1], [], []>} : vector<8x64xf32>, vector<64x128xf32>, vector<8x128xf32> -> vector<8x128xf32>
    %144 = arith.addf %139, %143 : vector<8x128xf32>
    %c3_164 = arith.constant 3 : index
    %c0_165 = arith.constant 0 : index
    %145 = vector.load %arg17[%c3_164, %c0_165] : memref<12x64xf32, #tpu.memory_space<vmem>>, vector<8x64xf32>
    %c3_166 = arith.constant 3 : index
    %c0_167 = arith.constant 0 : index
    %c0_168 = arith.constant 0 : index
    %146 = vector.load %arg10[%c3_166, %c0_167, %c0_168] : memref<5x64x128xf32, #tpu.memory_space<vmem>>, vector<1x64x128xf32>
    %147 = vector.shape_cast %146 : vector<1x64x128xf32> to vector<64x128xf32>
    %cst_169 = arith.constant dense<0.000000e+00> : vector<8x128xf32>
    %148 = tpu.matmul %145, %147, %cst_169 {dimension_numbers = #tpu.dot_dimension_numbers<[1], [0], [0], [1], [0, 0, 1, 1], [], []>} : vector<8x64xf32>, vector<64x128xf32>, vector<8x128xf32> -> vector<8x128xf32>
    %149 = arith.addf %144, %148 : vector<8x128xf32>
    %c4_170 = arith.constant 4 : index
    %c0_171 = arith.constant 0 : index
    %150 = vector.load %arg17[%c4_170, %c0_171] : memref<12x64xf32, #tpu.memory_space<vmem>>, vector<8x64xf32>
    %c4_172 = arith.constant 4 : index
    %c0_173 = arith.constant 0 : index
    %c0_174 = arith.constant 0 : index
    %151 = vector.load %arg10[%c4_172, %c0_173, %c0_174] : memref<5x64x128xf32, #tpu.memory_space<vmem>>, vector<1x64x128xf32>
    %152 = vector.shape_cast %151 : vector<1x64x128xf32> to vector<64x128xf32>
    %cst_175 = arith.constant dense<0.000000e+00> : vector<8x128xf32>
    %153 = tpu.matmul %150, %152, %cst_175 {dimension_numbers = #tpu.dot_dimension_numbers<[1], [0], [0], [1], [0, 0, 1, 1], [], []>} : vector<8x64xf32>, vector<64x128xf32>, vector<8x128xf32> -> vector<8x128xf32>
    %154 = arith.addf %149, %153 : vector<8x128xf32>
    %c0_176 = arith.constant 0 : index
    %c0_177 = arith.constant 0 : index
    %155 = vector.load %arg11[%c0_176, %c0_177] : memref<1x128xf32, #tpu.memory_space<vmem>>, vector<1x128xf32>
    %156 = vector.broadcast %155 : vector<1x128xf32> to vector<8x128xf32>
    %157 = arith.addf %154, %156 : vector<8x128xf32>
    %cst_178 = arith.constant 0.000000e+00 : f32
    %158 = vector.broadcast %cst_178 : f32 to vector<8x128xf32>
    %159 = arith.maximumf %157, %158 : vector<8x128xf32>
    %cst_179 = arith.constant 0.000000e+00 : f32
    %160 = vector.broadcast %cst_179 : f32 to vector<1x512xf32>
    %161 = vector.extract_strided_slice %159 {offsets = [0, 0], sizes = [1, 128], strides = [1, 1]} : vector<8x128xf32> to vector<1x128xf32>
    %c0_180 = arith.constant 0 : index
    %c0_181 = arith.constant 0 : index
    %c0_182 = arith.constant 0 : index
    %162 = vector.load %arg12[%c0_180, %c0_181, %c0_182] : memref<8x128x512xf32, #tpu.memory_space<vmem>>, vector<1x128x512xf32>
    %163 = vector.shape_cast %162 : vector<1x128x512xf32> to vector<128x512xf32>
    %cst_183 = arith.constant dense<0.000000e+00> : vector<1x512xf32>
    %164 = tpu.matmul %161, %163, %cst_183 {dimension_numbers = #tpu.dot_dimension_numbers<[1], [0], [0], [1], [0, 0, 1, 1], [], []>} : vector<1x128xf32>, vector<128x512xf32>, vector<1x512xf32> -> vector<1x512xf32>
    %165 = arith.addf %160, %164 : vector<1x512xf32>
    %166 = vector.extract_strided_slice %159 {offsets = [1, 0], sizes = [1, 128], strides = [1, 1]} : vector<8x128xf32> to vector<1x128xf32>
    %c1_184 = arith.constant 1 : index
    %c0_185 = arith.constant 0 : index
    %c0_186 = arith.constant 0 : index
    %167 = vector.load %arg12[%c1_184, %c0_185, %c0_186] : memref<8x128x512xf32, #tpu.memory_space<vmem>>, vector<1x128x512xf32>
    %168 = vector.shape_cast %167 : vector<1x128x512xf32> to vector<128x512xf32>
    %cst_187 = arith.constant dense<0.000000e+00> : vector<1x512xf32>
    %169 = tpu.matmul %166, %168, %cst_187 {dimension_numbers = #tpu.dot_dimension_numbers<[1], [0], [0], [1], [0, 0, 1, 1], [], []>} : vector<1x128xf32>, vector<128x512xf32>, vector<1x512xf32> -> vector<1x512xf32>
    %170 = arith.addf %165, %169 : vector<1x512xf32>
    %171 = vector.extract_strided_slice %159 {offsets = [2, 0], sizes = [1, 128], strides = [1, 1]} : vector<8x128xf32> to vector<1x128xf32>
    %c2_188 = arith.constant 2 : index
    %c0_189 = arith.constant 0 : index
    %c0_190 = arith.constant 0 : index
    %172 = vector.load %arg12[%c2_188, %c0_189, %c0_190] : memref<8x128x512xf32, #tpu.memory_space<vmem>>, vector<1x128x512xf32>
    %173 = vector.shape_cast %172 : vector<1x128x512xf32> to vector<128x512xf32>
    %cst_191 = arith.constant dense<0.000000e+00> : vector<1x512xf32>
    %174 = tpu.matmul %171, %173, %cst_191 {dimension_numbers = #tpu.dot_dimension_numbers<[1], [0], [0], [1], [0, 0, 1, 1], [], []>} : vector<1x128xf32>, vector<128x512xf32>, vector<1x512xf32> -> vector<1x512xf32>
    %175 = arith.addf %170, %174 : vector<1x512xf32>
    %176 = vector.extract_strided_slice %159 {offsets = [3, 0], sizes = [1, 128], strides = [1, 1]} : vector<8x128xf32> to vector<1x128xf32>
    %c3_192 = arith.constant 3 : index
    %c0_193 = arith.constant 0 : index
    %c0_194 = arith.constant 0 : index
    %177 = vector.load %arg12[%c3_192, %c0_193, %c0_194] : memref<8x128x512xf32, #tpu.memory_space<vmem>>, vector<1x128x512xf32>
    %178 = vector.shape_cast %177 : vector<1x128x512xf32> to vector<128x512xf32>
    %cst_195 = arith.constant dense<0.000000e+00> : vector<1x512xf32>
    %179 = tpu.matmul %176, %178, %cst_195 {dimension_numbers = #tpu.dot_dimension_numbers<[1], [0], [0], [1], [0, 0, 1, 1], [], []>} : vector<1x128xf32>, vector<128x512xf32>, vector<1x512xf32> -> vector<1x512xf32>
    %180 = arith.addf %175, %179 : vector<1x512xf32>
    %181 = vector.extract_strided_slice %159 {offsets = [4, 0], sizes = [1, 128], strides = [1, 1]} : vector<8x128xf32> to vector<1x128xf32>
    %c4_196 = arith.constant 4 : index
    %c0_197 = arith.constant 0 : index
    %c0_198 = arith.constant 0 : index
    %182 = vector.load %arg12[%c4_196, %c0_197, %c0_198] : memref<8x128x512xf32, #tpu.memory_space<vmem>>, vector<1x128x512xf32>
    %183 = vector.shape_cast %182 : vector<1x128x512xf32> to vector<128x512xf32>
    %cst_199 = arith.constant dense<0.000000e+00> : vector<1x512xf32>
    %184 = tpu.matmul %181, %183, %cst_199 {dimension_numbers = #tpu.dot_dimension_numbers<[1], [0], [0], [1], [0, 0, 1, 1], [], []>} : vector<1x128xf32>, vector<128x512xf32>, vector<1x512xf32> -> vector<1x512xf32>
    %185 = arith.addf %180, %184 : vector<1x512xf32>
    %186 = vector.extract_strided_slice %159 {offsets = [5, 0], sizes = [1, 128], strides = [1, 1]} : vector<8x128xf32> to vector<1x128xf32>
    %c5 = arith.constant 5 : index
    %c0_200 = arith.constant 0 : index
    %c0_201 = arith.constant 0 : index
    %187 = vector.load %arg12[%c5, %c0_200, %c0_201] : memref<8x128x512xf32, #tpu.memory_space<vmem>>, vector<1x128x512xf32>
    %188 = vector.shape_cast %187 : vector<1x128x512xf32> to vector<128x512xf32>
    %cst_202 = arith.constant dense<0.000000e+00> : vector<1x512xf32>
    %189 = tpu.matmul %186, %188, %cst_202 {dimension_numbers = #tpu.dot_dimension_numbers<[1], [0], [0], [1], [0, 0, 1, 1], [], []>} : vector<1x128xf32>, vector<128x512xf32>, vector<1x512xf32> -> vector<1x512xf32>
    %190 = arith.addf %185, %189 : vector<1x512xf32>
    %191 = vector.extract_strided_slice %159 {offsets = [6, 0], sizes = [1, 128], strides = [1, 1]} : vector<8x128xf32> to vector<1x128xf32>
    %c6 = arith.constant 6 : index
    %c0_203 = arith.constant 0 : index
    %c0_204 = arith.constant 0 : index
    %192 = vector.load %arg12[%c6, %c0_203, %c0_204] : memref<8x128x512xf32, #tpu.memory_space<vmem>>, vector<1x128x512xf32>
    %193 = vector.shape_cast %192 : vector<1x128x512xf32> to vector<128x512xf32>
    %cst_205 = arith.constant dense<0.000000e+00> : vector<1x512xf32>
    %194 = tpu.matmul %191, %193, %cst_205 {dimension_numbers = #tpu.dot_dimension_numbers<[1], [0], [0], [1], [0, 0, 1, 1], [], []>} : vector<1x128xf32>, vector<128x512xf32>, vector<1x512xf32> -> vector<1x512xf32>
    %195 = arith.addf %190, %194 : vector<1x512xf32>
    %196 = vector.extract_strided_slice %159 {offsets = [7, 0], sizes = [1, 128], strides = [1, 1]} : vector<8x128xf32> to vector<1x128xf32>
    %c7 = arith.constant 7 : index
    %c0_206 = arith.constant 0 : index
    %c0_207 = arith.constant 0 : index
    %197 = vector.load %arg12[%c7, %c0_206, %c0_207] : memref<8x128x512xf32, #tpu.memory_space<vmem>>, vector<1x128x512xf32>
    %198 = vector.shape_cast %197 : vector<1x128x512xf32> to vector<128x512xf32>
    %cst_208 = arith.constant dense<0.000000e+00> : vector<1x512xf32>
    %199 = tpu.matmul %196, %198, %cst_208 {dimension_numbers = #tpu.dot_dimension_numbers<[1], [0], [0], [1], [0, 0, 1, 1], [], []>} : vector<1x128xf32>, vector<128x512xf32>, vector<1x512xf32> -> vector<1x512xf32>
    %200 = arith.addf %195, %199 : vector<1x512xf32>
    %c0_209 = arith.constant 0 : index
    %c0_210 = arith.constant 0 : index
    %201 = vector.load %arg13[%c0_209, %c0_210] : memref<1x512xf32, #tpu.memory_space<vmem>>, vector<1x512xf32>
    %202 = arith.addf %200, %201 : vector<1x512xf32>
    %cst_211 = arith.constant 0.000000e+00 : f32
    %203 = vector.broadcast %cst_211 : f32 to vector<1x512xf32>
    %204 = arith.maximumf %202, %203 : vector<1x512xf32>
    %c0_212 = arith.constant 0 : index
    %c0_213 = arith.constant 0 : index
    %c0_214 = arith.constant 0 : index
    %205 = vector.load %arg14[%c0_212, %c0_213, %c0_214] : memref<1x1x512xf32, #tpu.memory_space<vmem>>, vector<1x1x512xf32>
    %206 = vector.shape_cast %205 : vector<1x1x512xf32> to vector<1x512xf32>
    %207 = vector.shape_cast %204 : vector<1x512xf32> to vector<1x1x512xf32>
    tpu.vector_store %arg14[%c0_212, %c0_213, %c0_214], %207 {strides = array<i32>} : memref<1x1x512xf32, #tpu.memory_space<vmem>>, vector<1x1x512xf32>,
    return
  }
  func.func @transform_0(%arg0: i32) -> (i32, i32, i32, i32) {
    %c0_i32 = arith.constant 0 : i32
    %c0_i32_0 = arith.constant 0 : i32
    %c0_i32_1 = arith.constant 0 : i32
    %c0_i32_2 = arith.constant 0 : i32
    return %arg0, %c0_i32, %c0_i32_0, %c0_i32_1 : i32, i32, i32, i32
  }
  func.func @transform_1(%arg0: i32) -> (i32, i32, i32) {
    %c0_i32 = arith.constant 0 : i32
    %c0_i32_0 = arith.constant 0 : i32
    %c0_i32_1 = arith.constant 0 : i32
    %c0_i32_2 = arith.constant 0 : i32
    return %c0_i32, %c0_i32_0, %c0_i32_1 : i32, i32, i32
  }
  func.func @transform_2(%arg0: i32) -> (i32, i32) {
    %c0_i32 = arith.constant 0 : i32
    %c0_i32_0 = arith.constant 0 : i32
    %c0_i32_1 = arith.constant 0 : i32
    return %c0_i32, %c0_i32_0 : i32, i32
  }
  func.func @transform_3(%arg0: i32) -> (i32, i32, i32) {
    %c0_i32 = arith.constant 0 : i32
    %c0_i32_0 = arith.constant 0 : i32
    %c0_i32_1 = arith.constant 0 : i32
    %c0_i32_2 = arith.constant 0 : i32
    return %c0_i32, %c0_i32_0, %c0_i32_1 : i32, i32, i32
  }
  func.func @transform_4(%arg0: i32) -> (i32, i32, i32) {
    %c0_i32 = arith.constant 0 : i32
    %c0_i32_0 = arith.constant 0 : i32
    %c0_i32_1 = arith.constant 0 : i32
    %c0_i32_2 = arith.constant 0 : i32
    return %c0_i32, %c0_i32_0, %c0_i32_1 : i32, i32, i32
  }
  func.func @transform_5(%arg0: i32) -> (i32, i32, i32) {
    %c0_i32 = arith.constant 0 : i32
    %c0_i32_0 = arith.constant 0 : i32
    %c0_i32_1 = arith.constant 0 : i32
    %c0_i32_2 = arith.constant 0 : i32
    return %c0_i32, %c0_i32_0, %c0_i32_1 : i32, i32, i32
  }
  func.func @transform_6(%arg0: i32) -> (i32, i32) {
    %c0_i32 = arith.constant 0 : i32
    %c0_i32_0 = arith.constant 0 : i32
    %c0_i32_1 = arith.constant 0 : i32
    return %c0_i32, %c0_i32_0 : i32, i32
  }
  func.func @transform_7(%arg0: i32) -> (i32, i32, i32) {
    %c0_i32 = arith.constant 0 : i32
    %c0_i32_0 = arith.constant 0 : i32
    %c0_i32_1 = arith.constant 0 : i32
    %c0_i32_2 = arith.constant 0 : i32
    return %c0_i32, %c0_i32_0, %c0_i32_1 : i32, i32, i32
  }
  func.func @transform_8(%arg0: i32) -> (i32, i32, i32) {
    %c0_i32 = arith.constant 0 : i32
    %c0_i32_0 = arith.constant 0 : i32
    %c0_i32_1 = arith.constant 0 : i32
    %c0_i32_2 = arith.constant 0 : i32
    return %c0_i32, %c0_i32_0, %c0_i32_1 : i32, i32, i32
  }
  func.func @transform_9(%arg0: i32) -> (i32, i32, i32) {
    %c0_i32 = arith.constant 0 : i32
    %c0_i32_0 = arith.constant 0 : i32
    %c0_i32_1 = arith.constant 0 : i32
    %c0_i32_2 = arith.constant 0 : i32
    return %c0_i32, %c0_i32_0, %c0_i32_1 : i32, i32, i32
  }
  func.func @transform_10(%arg0: i32) -> (i32, i32) {
    %c0_i32 = arith.constant 0 : i32
    %c0_i32_0 = arith.constant 0 : i32
    %c0_i32_1 = arith.constant 0 : i32
    return %c0_i32, %c0_i32_0 : i32, i32
  }
  func.func @transform_11(%arg0: i32) -> (i32, i32, i32) {
    %c0_i32 = arith.constant 0 : i32
    %c0_i32_0 = arith.constant 0 : i32
    %c0_i32_1 = arith.constant 0 : i32
    %c0_i32_2 = arith.constant 0 : i32
    return %c0_i32, %c0_i32_0, %c0_i32_1 : i32, i32, i32
  }
  func.func @transform_12(%arg0: i32) -> (i32, i32) {
    %c0_i32 = arith.constant 0 : i32
    %c0_i32_0 = arith.constant 0 : i32
    %c0_i32_1 = arith.constant 0 : i32
    return %c0_i32, %c0_i32_0 : i32, i32
  }
  func.func @transform_13(%arg0: i32) -> (i32, i32, i32) {
    %c0_i32 = arith.constant 0 : i32
    %c0_i32_0 = arith.constant 0 : i32
    %c0_i32_1 = arith.constant 0 : i32
    return %arg0, %c0_i32, %c0_i32_0 : i32, i32, i32
  }
}

</mosaic_0001>

<llo_original>
// kernel: feature_generator_small.1
$region0: #{feature_generator_small.1}
  #allocation0 [shape = 'u32[]', space=smem, size = 0x4, offset = 0x4, fixed_abs, tag = 'smem constant byte address 0x4 - core index']
  #allocation1 [shape = 'u32[144,128]{1,0:T(1,128)}', space=vmem, size = 0x12000, scoped, tag = 'internal scratch']
  #allocation2 [shape = 'f32[36,96]{1,0:T(8,128)}', space=vmem, size = 0x5000, scoped, tag = 'scratch operand']
  #allocation3 [shape = 'f32[20,64]{1,0:T(8,128)}', space=vmem, size = 0x3000, scoped, tag = 'scratch operand']
  #allocation4 [shape = 'f32[12,64]{1,0:T(8,128)}', space=vmem, size = 0x2000, scoped, tag = 'scratch operand']
  %s0 = inlined_call_operand.hbm [shape: f32[2,3,32,32], index: 0, kind: input, shape index: {}]
  %s1 = inlined_call_operand.hbm [shape: f32[5,96,128], index: 1, kind: input, shape index: {}]
  %s2 = inlined_call_operand.hbm [shape: f32[1,128], index: 2, kind: input, shape index: {}]
  %s3 = inlined_call_operand.vmem [shape: f32[3,128,64], index: 3, kind: input, shape index: {}]
  %s4 = inlined_call_operand.hbm [shape: f32[3,16,32], index: 4, kind: input, shape index: {}]
  %s5 = inlined_call_operand.hbm [shape: f32[5,64,128], index: 5, kind: input, shape index: {}]
  %s6 = inlined_call_operand.hbm [shape: f32[1,128], index: 6, kind: input, shape index: {}]
  %s7 = inlined_call_operand.vmem [shape: f32[3,128,64], index: 7, kind: input, shape index: {}]
  %s8 = inlined_call_operand.hbm [shape: f32[3,8,16], index: 8, kind: input, shape index: {}]
  %s9 = inlined_call_operand.hbm [shape: f32[5,64,128], index: 9, kind: input, shape index: {}]
  %s10 = inlined_call_operand.hbm [shape: f32[1,128], index: 10, kind: input, shape index: {}]
  %s11 = inlined_call_operand.hbm [shape: f32[8,128,512], index: 11, kind: input, shape index: {}]
  %s12 = inlined_call_operand.hbm [shape: f32[1,512], index: 12, kind: input, shape index: {}]
  %s13 = inlined_call_operand.vmem [shape: f32[2,1,512], index: 13, kind: output, shape index: {}]
  %s14 = sld [smem:[#allocation0]]
  $region129: #{feature_generator_small.1} parent=0
    _
  %s16 = ssub.s32 1, %s14
  %s17 = scalar_select 0, %s16, %s14
  $region1: #{feature_generator_small.1} parent=0
    #allocation5 [shape = 'u8[98304]{0}', space=vmem, size = 0x18000, scoped, tag = 'input window, operand 0']
    #allocation6 [shape = 's32[2]{0}', space=sflag, size = 0x8, scoped, tag = 'scoped memory for feature_generator_small.1']
    #allocation7 [shape = 'u8[245760]{0}', space=vmem, size = 0x3c000, scoped, tag = 'input window, operand 1, single buffered']
    #allocation8 [shape = 's32[1]{0}', space=sflag, size = 0x4, scoped, tag = 'scoped memory for feature_generator_small.1']
    #allocation9 [shape = 'u8[512]{0}', space=vmem, size = 0x400, scoped, tag = 'input window, operand 2, single buffered']
    #allocation10 [shape = 'u8[24576]{0}', space=vmem, size = 0x6000, scoped, tag = 'input window, operand 4, single buffered']
    #allocation11 [shape = 's32[1]{0}', space=sflag, size = 0x4, scoped, tag = 'scoped memory for feature_generator_small.1']
    #allocation12 [shape = 'u8[163840]{0}', space=vmem, size = 0x28000, scoped, tag = 'input window, operand 5, single buffered']
    #allocation13 [shape = 'u8[512]{0}', space=vmem, size = 0x400, scoped, tag = 'input window, operand 6, single buffered']
    #allocation14 [shape = 's32[1]{0}', space=sflag, size = 0x4, scoped, tag = 'scoped memory for feature_generator_small.1']
    #allocation15 [shape = 'u8[12288]{0}', space=vmem, size = 0x3000, scoped, tag = 'input window, operand 8, single buffered']
    #allocation16 [shape = 'u8[163840]{0}', space=vmem, size = 0x28000, scoped, tag = 'input window, operand 9, single buffered']
    #allocation17 [shape = 's32[1]{0}', space=sflag, size = 0x4, scoped, tag = 'scoped memory for feature_generator_small.1']
    #allocation18 [shape = 'u8[512]{0}', space=vmem, size = 0x400, scoped, tag = 'input window, operand 10, single buffered']
    #allocation19 [shape = 'u8[2097152]{0}', space=vmem, size = 0x200000, scoped, tag = 'input window, operand 11, single buffered']
    #allocation20 [shape = 's32[1]{0}', space=sflag, size = 0x4, scoped, tag = 'scoped memory for feature_generator_small.1']
    #allocation21 [shape = 'u8[2048]{0}', space=vmem, size = 0x800, scoped, tag = 'input window, operand 12, single buffered']
    %18 = vsyncpa [#allocation6], 0
    %s19 = scalar_lea.sflag [#allocation6], 1
    %20 = vsyncpa %s19, 0
    %21 = vsyncpa [#allocation8], 0
    %22 = vsyncpa [#allocation11], 0
    %23 = vsyncpa [#allocation14], 0
    %24 = vsyncpa [#allocation17], 0
    %25 = vsyncpa [#allocation20], 0
    loop: start=0, step=1, limit=4
    $region2: #{feature_generator_small.1} parent=1 // loop_pre_header
      _
    $region3: #{feature_generator_small.1} parent=1 // loop_header
      %s27 = sphi 0, %s31
      %p28 = scmp.ge.s32.totalorder %s27, 4
      %s37 = sphi 0, %s39
      %s40 = sphi 0, %s37
      %s41 = sphi 0, %s40
      %s57 = sphi 0, %s41
      %s61 = sphi 0, %s61
      %s63 = sphi 0, %s61
      %s64 = sphi 0, %s63
      %s78 = sphi 0, %s64
      %s82 = sphi 0, %s82
      %s84 = sphi 0, %s82
      %s85 = sphi 0, %s84
      %s99 = sphi 0, %s85
      %s103 = sphi 0, %s103
      %s105 = sphi 0, %s103
      %s106 = sphi 0, %s105
      %s120 = sphi 0, %s106
      %s124 = sphi 0, %s124
      %s126 = sphi 0, %s124
      %s127 = sphi 0, %s126
      %s141 = sphi 0, %s127
      %s145 = sphi 0, %s145
      %s147 = sphi 0, %s145
      %s148 = sphi 0, %s147
      %s162 = sphi 0, %s148
      %s166 = sphi 0, %s166
      %s168 = sphi 0, %s166
      %s169 = sphi 0, %s168
      %s183 = sphi 0, %s169
      %s187 = sphi 0, %s187
      %s189 = sphi 0, %s187
      %s190 = sphi 0, %s189
      %s204 = sphi 0, %s190
      %s208 = sphi 0, %s208
      %s210 = sphi 0, %s208
      %s211 = sphi 0, %s210
      %s225 = sphi 0, %s211
      %s229 = sphi 0, %s229
      %s231 = sphi 0, %s229
      %s232 = sphi 0, %s231
      %s246 = sphi 0, %s232
      %s250 = sphi 0, %s250
      %s252 = sphi 0, %s250
      %s253 = sphi 0, %s252
      %s267 = sphi 0, %s253
      %s271 = sphi 0, %s271
      %s273 = sphi 0, %s271
      %s274 = sphi 0, %s273
      %s288 = sphi 0, %s274
      %s292 = sphi 0, %s292
      %s294 = sphi 0, %s292
      %s295 = sphi 0, %s294
      %s309 = sphi 0, %s295
      %s315 = sphi 0, %s317
      %s318 = sphi 0, %s315
      %s319 = sphi 0, %s318
      %s335 = sphi 0, %s319
    $region4: #{feature_generator_small.1} parent=1 // loop_header_branch
      %30 = sbr.rel (%p28) target = $region8
    $region5: #{feature_generator_small.1} parent=1 // loop_body
      %s32 = ssub.s32 %s27, 1
      %s33 = ssub.s32 %s27, 2
      %s34 = sadd.s32 %s27, 1
      %s35 = ssub.s32 %s27, %s34
      %p36 = scmp.eq.s32.totalorder %s35, 0
      %s38 = sadd.s32 %s37, 1
      %s39 = scalar_select %p36, %s37, %s38
      %p42 = pneg %p36
      %p43 = scmp.eq.s32.totalorder %s27, 1
      %p44 = por %p42, %p43
      %p45 = scmp.ne.s32.totalorder %s37, %s40
      %p46 = scmp.eq.s32.totalorder %s27, 0
      %p47 = por %p45, %p46
      %p48 = scmp.ne.s32.totalorder %s37, %s40
      %p49 = scmp.eq.s32.totalorder %s32, 1
      %p50 = por %p48, %p49
      %p51 = scmp.ne.s32.totalorder %s40, %s41
      %p52 = scmp.eq.s32.totalorder %s32, 0
      %p53 = por %p51, %p52
      %p54 = scmp.ne.s32.totalorder %s40, %s41
      %p55 = scmp.eq.s32.totalorder %s33, 1
      %p56 = por %p54, %p55
      %p58 = scmp.ne.s32.totalorder %s41, %s57
      %p59 = scmp.eq.s32.totalorder %s33, 0
      %p60 = por %p58, %p59
      %s62 = sadd.s32 %s61, 1
      %p65 = scmp.eq.s32.totalorder %s27, 1
      %p66 = scmp.ne.s32.totalorder %s61, %s63
      %p67 = scmp.eq.s32.totalorder %s27, 0
      %p68 = por %p66, %p67
      %p69 = scmp.ne.s32.totalorder %s61, %s63
      %p70 = scmp.eq.s32.totalorder %s32, 1
      %p71 = por %p69, %p70
      %p72 = scmp.ne.s32.totalorder %s63, %s64
      %p73 = scmp.eq.s32.totalorder %s32, 0
      %p74 = por %p72, %p73
      %p75 = scmp.ne.s32.totalorder %s63, %s64
      %p76 = scmp.eq.s32.totalorder %s33, 1
      %p77 = por %p75, %p76
      %p79 = scmp.ne.s32.totalorder %s64, %s78
      %p80 = scmp.eq.s32.totalorder %s33, 0
      %p81 = por %p79, %p80
      %s83 = sadd.s32 %s82, 1
      %p86 = scmp.eq.s32.totalorder %s27, 1
      %p87 = scmp.ne.s32.totalorder %s82, %s84
      %p88 = scmp.eq.s32.totalorder %s27, 0
      %p89 = por %p87, %p88
      %p90 = scmp.ne.s32.totalorder %s82, %s84
      %p91 = scmp.eq.s32.totalorder %s32, 1
      %p92 = por %p90, %p91
      %p93 = scmp.ne.s32.totalorder %s84, %s85
      %p94 = scmp.eq.s32.totalorder %s32, 0
      %p95 = por %p93, %p94
      %p96 = scmp.ne.s32.totalorder %s84, %s85
      %p97 = scmp.eq.s32.totalorder %s33, 1
      %p98 = por %p96, %p97
      %p100 = scmp.ne.s32.totalorder %s85, %s99
      %p101 = scmp.eq.s32.totalorder %s33, 0
      %p102 = por %p100, %p101
      %s104 = sadd.s32 %s103, 1
      %p107 = scmp.eq.s32.totalorder %s27, 1
      %p108 = scmp.ne.s32.totalorder %s103, %s105
      %p109 = scmp.eq.s32.totalorder %s27, 0
      %p110 = por %p108, %p109
      %p111 = scmp.ne.s32.totalorder %s103, %s105
      %p112 = scmp.eq.s32.totalorder %s32, 1
      %p113 = por %p111, %p112
      %p114 = scmp.ne.s32.totalorder %s105, %s106
      %p115 = scmp.eq.s32.totalorder %s32, 0
      %p116 = por %p114, %p115
      %p117 = scmp.ne.s32.totalorder %s105, %s106
      %p118 = scmp.eq.s32.totalorder %s33, 1
      %p119 = por %p117, %p118
      %p121 = scmp.ne.s32.totalorder %s106, %s120
      %p122 = scmp.eq.s32.totalorder %s33, 0
      %p123 = por %p121, %p122
      %s125 = sadd.s32 %s124, 1
      %p128 = scmp.eq.s32.totalorder %s27, 1
      %p129 = scmp.ne.s32.totalorder %s124, %s126
      %p130 = scmp.eq.s32.totalorder %s27, 0
      %p131 = por %p129, %p130
      %p132 = scmp.ne.s32.totalorder %s124, %s126
      %p133 = scmp.eq.s32.totalorder %s32, 1
      %p134 = por %p132, %p133
      %p135 = scmp.ne.s32.totalorder %s126, %s127
      %p136 = scmp.eq.s32.totalorder %s32, 0
      %p137 = por %p135, %p136
      %p138 = scmp.ne.s32.totalorder %s126, %s127
      %p139 = scmp.eq.s32.totalorder %s33, 1
      %p140 = por %p138, %p139
      %p142 = scmp.ne.s32.totalorder %s127, %s141
      %p143 = scmp.eq.s32.totalorder %s33, 0
      %p144 = por %p142, %p143
      %s146 = sadd.s32 %s145, 1
      %p149 = scmp.eq.s32.totalorder %s27, 1
      %p150 = scmp.ne.s32.totalorder %s145, %s147
      %p151 = scmp.eq.s32.totalorder %s27, 0
      %p152 = por %p150, %p151
      %p153 = scmp.ne.s32.totalorder %s145, %s147
      %p154 = scmp.eq.s32.totalorder %s32, 1
      %p155 = por %p153, %p154
      %p156 = scmp.ne.s32.totalorder %s147, %s148
      %p157 = scmp.eq.s32.totalorder %s32, 0
      %p158 = por %p156, %p157
      %p159 = scmp.ne.s32.totalorder %s147, %s148
      %p160 = scmp.eq.s32.totalorder %s33, 1
      %p161 = por %p159, %p160
      %p163 = scmp.ne.s32.totalorder %s148, %s162
      %p164 = scmp.eq.s32.totalorder %s33, 0
      %p165 = por %p163, %p164
      %s167 = sadd.s32 %s166, 1
      %p170 = scmp.eq.s32.totalorder %s27, 1
      %p171 = scmp.ne.s32.totalorder %s166, %s168
      %p172 = scmp.eq.s32.totalorder %s27, 0
      %p173 = por %p171, %p172
      %p174 = scmp.ne.s32.totalorder %s166, %s168
      %p175 = scmp.eq.s32.totalorder %s32, 1
      %p176 = por %p174, %p175
      %p177 = scmp.ne.s32.totalorder %s168, %s169
      %p178 = scmp.eq.s32.totalorder %s32, 0
      %p179 = por %p177, %p178
      %p180 = scmp.ne.s32.totalorder %s168, %s169
      %p181 = scmp.eq.s32.totalorder %s33, 1
      %p182 = por %p180, %p181
      %p184 = scmp.ne.s32.totalorder %s169, %s183
      %p185 = scmp.eq.s32.totalorder %s33, 0
      %p186 = por %p184, %p185
      %s188 = sadd.s32 %s187, 1
      %p191 = scmp.eq.s32.totalorder %s27, 1
      %p192 = scmp.ne.s32.totalorder %s187, %s189
      %p193 = scmp.eq.s32.totalorder %s27, 0
      %p194 = por %p192, %p193
      %p195 = scmp.ne.s32.totalorder %s187, %s189
      %p196 = scmp.eq.s32.totalorder %s32, 1
      %p197 = por %p195, %p196
      %p198 = scmp.ne.s32.totalorder %s189, %s190
      %p199 = scmp.eq.s32.totalorder %s32, 0
      %p200 = por %p198, %p199
      %p201 = scmp.ne.s32.totalorder %s189, %s190
      %p202 = scmp.eq.s32.totalorder %s33, 1
      %p203 = por %p201, %p202
      %p205 = scmp.ne.s32.totalorder %s190, %s204
      %p206 = scmp.eq.s32.totalorder %s33, 0
      %p207 = por %p205, %p206
      %s209 = sadd.s32 %s208, 1
      %p212 = scmp.eq.s32.totalorder %s27, 1
      %p213 = scmp.ne.s32.totalorder %s208, %s210
      %p214 = scmp.eq.s32.totalorder %s27, 0
      %p215 = por %p213, %p214
      %p216 = scmp.ne.s32.totalorder %s208, %s210
      %p217 = scmp.eq.s32.totalorder %s32, 1
      %p218 = por %p216, %p217
      %p219 = scmp.ne.s32.totalorder %s210, %s211
      %p220 = scmp.eq.s32.totalorder %s32, 0
      %p221 = por %p219, %p220
      %p222 = scmp.ne.s32.totalorder %s210, %s211
      %p223 = scmp.eq.s32.totalorder %s33, 1
      %p224 = por %p222, %p223
      %p226 = scmp.ne.s32.totalorder %s211, %s225
      %p227 = scmp.eq.s32.totalorder %s33, 0
      %p228 = por %p226, %p227
      %s230 = sadd.s32 %s229, 1
      %p233 = scmp.eq.s32.totalorder %s27, 1
      %p234 = scmp.ne.s32.totalorder %s229, %s231
      %p235 = scmp.eq.s32.totalorder %s27, 0
      %p236 = por %p234, %p235
      %p237 = scmp.ne.s32.totalorder %s229, %s231
      %p238 = scmp.eq.s32.totalorder %s32, 1
      %p239 = por %p237, %p238
      %p240 = scmp.ne.s32.totalorder %s231, %s232
      %p241 = scmp.eq.s32.totalorder %s32, 0
      %p242 = por %p240, %p241
      %p243 = scmp.ne.s32.totalorder %s231, %s232
      %p244 = scmp.eq.s32.totalorder %s33, 1
      %p245 = por %p243, %p244
      %p247 = scmp.ne.s32.totalorder %s232, %s246
      %p248 = scmp.eq.s32.totalorder %s33, 0
      %p249 = por %p247, %p248
      %s251 = sadd.s32 %s250, 1
      %p254 = scmp.eq.s32.totalorder %s27, 1
      %p255 = scmp.ne.s32.totalorder %s250, %s252
      %p256 = scmp.eq.s32.totalorder %s27, 0
      %p257 = por %p255, %p256
      %p258 = scmp.ne.s32.totalorder %s250, %s252
      %p259 = scmp.eq.s32.totalorder %s32, 1
      %p260 = por %p258, %p259
      %p261 = scmp.ne.s32.totalorder %s252, %s253
      %p262 = scmp.eq.s32.totalorder %s32, 0
      %p263 = por %p261, %p262
      %p264 = scmp.ne.s32.totalorder %s252, %s253
      %p265 = scmp.eq.s32.totalorder %s33, 1
      %p266 = por %p264, %p265
      %p268 = scmp.ne.s32.totalorder %s253, %s267
      %p269 = scmp.eq.s32.totalorder %s33, 0
      %p270 = por %p268, %p269
      %s272 = sadd.s32 %s271, 1
      %p275 = scmp.eq.s32.totalorder %s27, 1
      %p276 = scmp.ne.s32.totalorder %s271, %s273
      %p277 = scmp.eq.s32.totalorder %s27, 0
      %p278 = por %p276, %p277
      %p279 = scmp.ne.s32.totalorder %s271, %s273
      %p280 = scmp.eq.s32.totalorder %s32, 1
      %p281 = por %p279, %p280
      %p282 = scmp.ne.s32.totalorder %s273, %s274
      %p283 = scmp.eq.s32.totalorder %s32, 0
      %p284 = por %p282, %p283
      %p285 = scmp.ne.s32.totalorder %s273, %s274
      %p286 = scmp.eq.s32.totalorder %s33, 1
      %p287 = por %p285, %p286
      %p289 = scmp.ne.s32.totalorder %s274, %s288
      %p290 = scmp.eq.s32.totalorder %s33, 0
      %p291 = por %p289, %p290
      %s293 = sadd.s32 %s292, 1
      %p296 = scmp.eq.s32.totalorder %s27, 1
      %p297 = scmp.ne.s32.totalorder %s292, %s294
      %p298 = scmp.eq.s32.totalorder %s27, 0
      %p299 = por %p297, %p298
      %p300 = scmp.ne.s32.totalorder %s292, %s294
      %p301 = scmp.eq.s32.totalorder %s32, 1
      %p302 = por %p300, %p301
      %p303 = scmp.ne.s32.totalorder %s294, %s295
      %p304 = scmp.eq.s32.totalorder %s32, 0
      %p305 = por %p303, %p304
      %p306 = scmp.ne.s32.totalorder %s294, %s295
      %p307 = scmp.eq.s32.totalorder %s33, 1
      %p308 = por %p306, %p307
      %p310 = scmp.ne.s32.totalorder %s295, %s309
      %p311 = scmp.eq.s32.totalorder %s33, 0
      %p312 = por %p310, %p311
      %s313 = ssub.s32 %s27, %s34
      %p314 = scmp.eq.s32.totalorder %s313, 0
      %s316 = sadd.s32 %s315, 1
      %s317 = scalar_select %p314, %s315, %s316
      %p320 = pneg %p314
      %p321 = scmp.eq.s32.totalorder %s27, 1
      %p322 = por %p320, %p321
      %p323 = scmp.ne.s32.totalorder %s315, %s318
      %p324 = scmp.eq.s32.totalorder %s27, 0
      %p325 = por %p323, %p324
      %p326 = scmp.ne.s32.totalorder %s315, %s318
      %p327 = scmp.eq.s32.totalorder %s32, 1
      %p328 = por %p326, %p327
      %p329 = scmp.ne.s32.totalorder %s318, %s319
      %p330 = scmp.eq.s32.totalorder %s32, 0
      %p331 = por %p329, %p330
      %p332 = scmp.ne.s32.totalorder %s318, %s319
      %p333 = scmp.eq.s32.totalorder %s33, 1
      %p334 = por %p332, %p333
      %p336 = scmp.ne.s32.totalorder %s319, %s335
      %p337 = scmp.eq.s32.totalorder %s33, 0
      %p338 = por %p336, %p337
      %p339 = scmp.le.s32.totalorder 1, %s27
      %p340 = scmp.lt.s32.totalorder %s27, 3
      %p341 = pnand %p339, %p340
      %p342 = pneg %p341
      // Predicated region
      $region9: #{feature_generator_small.1} parent=5 // pred_check
        _
      $region10: #{feature_generator_small.1} parent=5 // pred_check_branch
        %344 = sbr.rel (%p341) target = $region12
      $region11: #{feature_generator_small.1} parent=5 // pred_region
        %s345 = ssub.s32 %s27, 1
        // Predicated region
        $region13: #{feature_generator_small.1} parent=11 // pred_check
          %p346 = pneg %p74
        $region14: #{feature_generator_small.1} parent=11 // pred_check_branch
          %348 = sbr.rel (%p346) target = $region16
        $region15: #{feature_generator_small.1} parent=11 // pred_region
          %s350 = ssub.s32 7680, 7680
          %351 = vsyncadd [#allocation8], %s350
          %s352 = sshll.u32 [#allocation7], 4
          %s353 = int_to_ptr.vmem [resolvable:$true] %s352
          %358 = dma.hbm_to_vmem [thread:$0]  %s1, 7680, %s353, [#allocation8], 128, 128, 8
        $region16: #{feature_generator_small.1} parent=11 // pred_fallthru
          _
        // Predicated region
        $region17: #{feature_generator_small.1} parent=11 // pred_check
          %p359 = pneg %p95
        $region18: #{feature_generator_small.1} parent=11 // pred_check_branch
          %361 = sbr.rel (%p359) target = $region20
        $region19: #{feature_generator_small.1} parent=11 // pred_region
          %s363 = ssub.s32 16, 16
          %364 = vsyncadd [#allocation8], %s363
          %s366 = sshll.u32 [#allocation9], 4
          %s367 = int_to_ptr.vmem [resolvable:$true] %s366
          %369 = dma.hbm_to_vmem [thread:$0]  %s2, 16, %s367, [#allocation8]
        $region20: #{feature_generator_small.1} parent=11 // pred_fallthru
          _
        // Predicated region
        $region21: #{feature_generator_small.1} parent=11 // pred_check
          %p370 = pneg %p116
        $region22: #{feature_generator_small.1} parent=11 // pred_check_branch
          %372 = sbr.rel (%p370) target = $region24
        $region23: #{feature_generator_small.1} parent=11 // pred_region
          _
        $region24: #{feature_generator_small.1} parent=11 // pred_fallthru
          _
        // Predicated region
        $region25: #{feature_generator_small.1} parent=11 // pred_check
          %p373 = pneg %p137
        $region26: #{feature_generator_small.1} parent=11 // pred_check_branch
          %375 = sbr.rel (%p373) target = $region28
        $region27: #{feature_generator_small.1} parent=11 // pred_region
          %s377 = ssub.s32 768, 768
          %378 = vsyncadd [#allocation11], %s377
          %s379 = sshll.u32 [#allocation10], 4
          %s380 = int_to_ptr.vmem [resolvable:$true] %s379
          %385 = dma.hbm_to_vmem [thread:$0]  %s4, 768, %s380, [#allocation11], 128, 128, 8
        $region28: #{feature_generator_small.1} parent=11 // pred_fallthru
          _
        // Predicated region
        $region29: #{feature_generator_small.1} parent=11 // pred_check
          %p386 = pneg %p158
        $region30: #{feature_generator_small.1} parent=11 // pred_check_branch
          %388 = sbr.rel (%p386) target = $region32
        $region31: #{feature_generator_small.1} parent=11 // pred_region
          %s390 = ssub.s32 5120, 5120
          %391 = vsyncadd [#allocation11], %s390
          %s392 = sshll.u32 [#allocation12], 4
          %s393 = int_to_ptr.vmem [resolvable:$true] %s392
          %398 = dma.hbm_to_vmem [thread:$0]  %s5, 5120, %s393, [#allocation11], 128, 128, 8
        $region32: #{feature_generator_small.1} parent=11 // pred_fallthru
          _
        // Predicated region
        $region33: #{feature_generator_small.1} parent=11 // pred_check
          %p399 = pneg %p179
        $region34: #{feature_generator_small.1} parent=11 // pred_check_branch
          %401 = sbr.rel (%p399) target = $region36
        $region35: #{feature_generator_small.1} parent=11 // pred_region
          %s403 = ssub.s32 16, 16
          %404 = vsyncadd [#allocation14], %s403
          %s406 = sshll.u32 [#allocation13], 4
          %s407 = int_to_ptr.vmem [resolvable:$true] %s406
          %409 = dma.hbm_to_vmem [thread:$0]  %s6, 16, %s407, [#allocation14]
        $region36: #{feature_generator_small.1} parent=11 // pred_fallthru
          _
        // Predicated region
        $region37: #{feature_generator_small.1} parent=11 // pred_check
          %p410 = pneg %p200
        $region38: #{feature_generator_small.1} parent=11 // pred_check_branch
          %412 = sbr.rel (%p410) target = $region40
        $region39: #{feature_generator_small.1} parent=11 // pred_region
          _
        $region40: #{feature_generator_small.1} parent=11 // pred_fallthru
          _
        // Predicated region
        $region41: #{feature_generator_small.1} parent=11 // pred_check
          %p413 = pneg %p221
        $region42: #{feature_generator_small.1} parent=11 // pred_check_branch
          %415 = sbr.rel (%p413) target = $region44
        $region43: #{feature_generator_small.1} parent=11 // pred_region
          %s417 = ssub.s32 384, 384
          %418 = vsyncadd [#allocation14], %s417
          %s419 = sshll.u32 [#allocation15], 4
          %s420 = int_to_ptr.vmem [resolvable:$true] %s419
          %425 = dma.hbm_to_vmem [thread:$0]  %s8, 384, %s420, [#allocation14], 128, 128, 8
        $region44: #{feature_generator_small.1} parent=11 // pred_fallthru
          _
        // Predicated region
        $region45: #{feature_generator_small.1} parent=11 // pred_check
          %p426 = pneg %p242
        $region46: #{feature_generator_small.1} parent=11 // pred_check_branch
          %428 = sbr.rel (%p426) target = $region48
        $region47: #{feature_generator_small.1} parent=11 // pred_region
          %s430 = ssub.s32 5120, 5120
          %431 = vsyncadd [#allocation17], %s430
          %s432 = sshll.u32 [#allocation16], 4
          %s433 = int_to_ptr.vmem [resolvable:$true] %s432
          %438 = dma.hbm_to_vmem [thread:$0]  %s9, 5120, %s433, [#allocation17], 128, 128, 8
        $region48: #{feature_generator_small.1} parent=11 // pred_fallthru
          _
        // Predicated region
        $region49: #{feature_generator_small.1} parent=11 // pred_check
          %p439 = pneg %p263
        $region50: #{feature_generator_small.1} parent=11 // pred_check_branch
          %441 = sbr.rel (%p439) target = $region52
        $region51: #{feature_generator_small.1} parent=11 // pred_region
          %s443 = ssub.s32 16, 16
          %444 = vsyncadd [#allocation17], %s443
          %s446 = sshll.u32 [#allocation18], 4
          %s447 = int_to_ptr.vmem [resolvable:$true] %s446
          %449 = dma.hbm_to_vmem [thread:$0]  %s10, 16, %s447, [#allocation17]
        $region52: #{feature_generator_small.1} parent=11 // pred_fallthru
          _
        // Predicated region
        $region53: #{feature_generator_small.1} parent=11 // pred_check
          %p450 = pneg %p284
        $region54: #{feature_generator_small.1} parent=11 // pred_check_branch
          %452 = sbr.rel (%p450) target = $region56
        $region55: #{feature_generator_small.1} parent=11 // pred_region
          %s454 = ssub.s32 65536, 65536
          %455 = vsyncadd [#allocation20], %s454
          %s456 = sshll.u32 [#allocation19], 4
          %s457 = int_to_ptr.vmem [resolvable:$true] %s456
          %462 = dma.hbm_to_vmem [thread:$0]  %s11, 65536, %s457, [#allocation20], 512, 512, 32
        $region56: #{feature_generator_small.1} parent=11 // pred_fallthru
          _
        // Predicated region
        $region57: #{feature_generator_small.1} parent=11 // pred_check
          %p463 = pneg %p305
        $region58: #{feature_generator_small.1} parent=11 // pred_check_branch
          %465 = sbr.rel (%p463) target = $region60
        $region59: #{feature_generator_small.1} parent=11 // pred_region
          %s467 = ssub.s32 64, 64
          %468 = vsyncadd [#allocation20], %s467
          %s470 = sshll.u32 [#allocation21], 4
          %s471 = int_to_ptr.vmem [resolvable:$true] %s470
          %473 = dma.hbm_to_vmem [thread:$0]  %s12, 64, %s471, [#allocation20]
        $region60: #{feature_generator_small.1} parent=11 // pred_fallthru
          _
      $region12: #{feature_generator_small.1} parent=5 // pred_fallthru
        _
      %p474 = scmp.lt.s32.totalorder %s27, 2
      // Predicated region
      $region61: #{feature_generator_small.1} parent=5 // pred_check
        %p475 = pneg %p474
      $region62: #{feature_generator_small.1} parent=5 // pred_check_branch
        %477 = sbr.rel (%p475) target = $region64
      $region63: #{feature_generator_small.1} parent=5 // pred_region
        // Predicated region
        $region65: #{feature_generator_small.1} parent=63 // pred_check
          %p478 = pneg %p47
        $region66: #{feature_generator_small.1} parent=63 // pred_check_branch
          %480 = sbr.rel (%p478) target = $region68
        $region67: #{feature_generator_small.1} parent=63 // pred_region
          %s481 = sand.u32 %s37, 1
          %s482 = scalar_lea.sflag [#allocation6], %s481
          %s483 = sand.u32 %s37, 1
          %s484 = smul.addr %s483, 96
          %s485 = scalar_lea.vmem [#allocation5], %s484
          %s487 = ssub.s32 1536, 1536
          %488 = vsyncadd %s482, %s487
          %s489 = smul.addr %s27, 12
          %s490 = smul.addr %s489, 128
          %s491 = scalar_lea.hbm %s0, %s490
          %s492 = sshll.u32 %s485, 4
          %s493 = int_to_ptr.vmem [resolvable:$true] %s492
          %498 = dma.hbm_to_vmem [thread:$0]  %s491, 1536, %s493, %s482, 128, 128, 8
        $region68: #{feature_generator_small.1} parent=63 // pred_fallthru
          _
      $region64: #{feature_generator_small.1} parent=5 // pred_fallthru
        _
      %p499 = scmp.le.s32.totalorder 1, %s27
      %p500 = scmp.lt.s32.totalorder %s27, 3
      %p501 = pnand %p499, %p500
      %p502 = pneg %p501
      // Predicated region
      $region69: #{feature_generator_small.1} parent=5 // pred_check
        _
      $region70: #{feature_generator_small.1} parent=5 // pred_check_branch
        %504 = sbr.rel (%p501) target = $region72
      $region71: #{feature_generator_small.1} parent=5 // pred_region
        %s505 = ssub.s32 %s27, 1
        %s506 = sand.u32 %s40, 1
        %s507 = scalar_lea.sflag [#allocation6], %s506
        %s508 = sand.u32 %s40, 1
        %s509 = smul.addr %s508, 96
        %s510 = scalar_lea.vmem [#allocation5], %s509
        // Predicated region
        $region73: #{feature_generator_small.1} parent=71 // pred_check
          %p511 = pneg %p53
        $region74: #{feature_generator_small.1} parent=71 // pred_check_branch
          %513 = sbr.rel (%p511) target = $region76
        $region75: #{feature_generator_small.1} parent=71 // pred_region
          %514 = dma.done %s507, 1536
        $region76: #{feature_generator_small.1} parent=71 // pred_fallthru
          _
        // Predicated region
        $region77: #{feature_generator_small.1} parent=71 // pred_check
          %p515 = pneg %p74
        $region78: #{feature_generator_small.1} parent=71 // pred_check_branch
          %517 = sbr.rel (%p515) target = $region80
        $region79: #{feature_generator_small.1} parent=71 // pred_region
          %518 = dma.done [#allocation8], 7680
        $region80: #{feature_generator_small.1} parent=71 // pred_fallthru
          _
        // Predicated region
        $region81: #{feature_generator_small.1} parent=71 // pred_check
          %p519 = pneg %p95
        $region82: #{feature_generator_small.1} parent=71 // pred_check_branch
          %521 = sbr.rel (%p519) target = $region84
        $region83: #{feature_generator_small.1} parent=71 // pred_region
          %522 = dma.done [#allocation8], 16
        $region84: #{feature_generator_small.1} parent=71 // pred_fallthru
          _
        // Predicated region
        $region85: #{feature_generator_small.1} parent=71 // pred_check
          %p523 = pneg %p137
        $region86: #{feature_generator_small.1} parent=71 // pred_check_branch
          %525 = sbr.rel (%p523) target = $region88
        $region87: #{feature_generator_small.1} parent=71 // pred_region
          %526 = dma.done [#allocation11], 768
        $region88: #{feature_generator_small.1} parent=71 // pred_fallthru
          _
        // Predicated region
        $region89: #{feature_generator_small.1} parent=71 // pred_check
          %p527 = pneg %p158
        $region90: #{feature_generator_small.1} parent=71 // pred_check_branch
          %529 = sbr.rel (%p527) target = $region92
        $region91: #{feature_generator_small.1} parent=71 // pred_region
          %530 = dma.done [#allocation11], 5120
        $region92: #{feature_generator_small.1} parent=71 // pred_fallthru
          _
        // Predicated region
        $region93: #{feature_generator_small.1} parent=71 // pred_check
          %p531 = pneg %p179
        $region94: #{feature_generator_small.1} parent=71 // pred_check_branch
          %533 = sbr.rel (%p531) target = $region96
        $region95: #{feature_generator_small.1} parent=71 // pred_region
          %534 = dma.done [#allocation14], 16
        $region96: #{feature_generator_small.1} parent=71 // pred_fallthru
          _
        // Predicated region
        $region97: #{feature_generator_small.1} parent=71 // pred_check
          %p535 = pneg %p221
        $region98: #{feature_generator_small.1} parent=71 // pred_check_branch
          %537 = sbr.rel (%p535) target = $region100
        $region99: #{feature_generator_small.1} parent=71 // pred_region
          %538 = dma.done [#allocation14], 384
        $region100: #{feature_generator_small.1} parent=71 // pred_fallthru
          _
        // Predicated region
        $region101: #{feature_generator_small.1} parent=71 // pred_check
          %p539 = pneg %p242
        $region102: #{feature_generator_small.1} parent=71 // pred_check_branch
          %541 = sbr.rel (%p539) target = $region104
        $region103: #{feature_generator_small.1} parent=71 // pred_region
          %542 = dma.done [#allocation17], 5120
        $region104: #{feature_generator_small.1} parent=71 // pred_fallthru
          _
        // Predicated region
        $region105: #{feature_generator_small.1} parent=71 // pred_check
          %p543 = pneg %p263
        $region106: #{feature_generator_small.1} parent=71 // pred_check_branch
          %545 = sbr.rel (%p543) target = $region108
        $region107: #{feature_generator_small.1} parent=71 // pred_region
          %546 = dma.done [#allocation17], 16
        $region108: #{feature_generator_small.1} parent=71 // pred_fallthru
          _
        // Predicated region
        $region109: #{feature_generator_small.1} parent=71 // pred_check
          %p547 = pneg %p284
        $region110: #{feature_generator_small.1} parent=71 // pred_check_branch
          %549 = sbr.rel (%p547) target = $region112
        $region111: #{feature_generator_small.1} parent=71 // pred_region
          %550 = dma.done [#allocation20], 65536
        $region112: #{feature_generator_small.1} parent=71 // pred_fallthru
          _
        // Predicated region
        $region113: #{feature_generator_small.1} parent=71 // pred_check
          %p551 = pneg %p305
        $region114: #{feature_generator_small.1} parent=71 // pred_check_branch
          %553 = sbr.rel (%p551) target = $region116
        $region115: #{feature_generator_small.1} parent=71 // pred_region
          %554 = dma.done [#allocation20], 64
        $region116: #{feature_generator_small.1} parent=71 // pred_fallthru
          _
        %s555 = sand.u32 %s40, 1
        %s556 = scalar_lea.sflag [#allocation6], %s555
        %s557 = sand.u32 %s40, 1
        %s558 = smul.addr %s557, 96
        %s559 = scalar_lea.vmem [#allocation5], %s558
        %p560 = pneg %p53
        %p561 = pneg %p50
        %p562 = pneg %p74
        %p563 = pneg %p71
        %p564 = pneg %p95
        %p565 = pneg %p92
        %p566 = pneg %p116
        %p567 = pneg %p113
        %p568 = pneg %p137
        %p569 = pneg %p134
        %p570 = pneg %p158
        %p571 = pneg %p155
        %p572 = pneg %p179
        %p573 = pneg %p176
        %p574 = pneg %p200
        %p575 = pneg %p197
        %p576 = pneg %p221
        %p577 = pneg %p218
        %p578 = pneg %p242
        %p579 = pneg %p239
        %p580 = pneg %p263
        %p581 = pneg %p260
        %p582 = pneg %p284
        %p583 = pneg %p281
        %p584 = pneg %p305
        %p585 = pneg %p302
        %p586 = pneg %p331
        %p587 = pneg %p328
        %p588 = scmp.lt.s32.totalorder %s32, 1
        %s589 = scalar_select %p588, %s32, 1
        %s590 = smul.addr %s589, 4
        %s591 = scalar_lea.vmem %s13, %s590
        %p592 = scmp.lt.s32.totalorder %s32, 1
        %s593 = scalar_select %p592, %s32, 1
        %s594 = smul.addr %s593, 4
        %s595 = scalar_lea.vmem %s13, %s594
        %vm596 = vcmask 779264
        %597 = vst.msk [vmem:[#allocation2] sm:$0x3] %vm596, 0.0
        %598 = vst.msk [vmem:[#allocation2 + $0x22] sm:$0x3] %vm596, 0.0
        %v599 = vld [vmem:[%s510] sm:$0xff]
        %v600 = vld [vmem:[%s510 + $0x8] sm:$0xff]
        %v601 = vld [vmem:[%s510 + $0x10] sm:$0xff]
        %v602 = vld [vmem:[%s510 + $0x18] sm:$0xff]
        %vm603 = vcmask 261120
        %604 = vst.msk [vmem:[#allocation2 + $0x2] sm:$0xff] %vm603, %v599
        %605 = vst.msk [vmem:[#allocation2 + $0xa] sm:$0xff] %vm603, %v600
        %606 = vst.msk [vmem:[#allocation2 + $0x12] sm:$0xff] %vm603, %v601
        %607 = vst.msk [vmem:[#allocation2 + $0x1a] sm:$0xff] %vm603, %v602
        %s608 = scalar_lea.vmem %s510, 32 [#allocation5]
        %v609 = vld [vmem:[%s608] sm:$0xff]
        %v610 = vld [vmem:[%s608 + $0x8] sm:$0xff]
        %v611 = vld [vmem:[%s608 + $0x10] sm:$0xff]
        %v612 = vld [vmem:[%s608 + $0x18] sm:$0xff]
        %617 = vrot.lane.b32.xlu0 %v609, 32
        %v618 = vpop.permute.xlu0 %617
        %619 = vrot.lane.b32.xlu0 %v610, 32
        %v620 = vpop.permute.xlu0 %619
        %621 = vrot.lane.b32.xlu0 %v611, 32
        %v622 = vpop.permute.xlu0 %621
        %623 = vrot.lane.b32.xlu0 %v612, 32
        %v624 = vpop.permute.xlu0 %623
        %vm629 = vcmask 523520
        %630 = vst.msk [vmem:[#allocation2 + $0x2] sm:$0xff] %vm629, %v618
        %631 = vst.msk [vmem:[#allocation2 + $0xa] sm:$0xff] %vm629, %v620
        %632 = vst.msk [vmem:[#allocation2 + $0x12] sm:$0xff] %vm629, %v622
        %633 = vst.msk [vmem:[#allocation2 + $0x1a] sm:$0xff] %vm629, %v624
        %s634 = scalar_lea.vmem %s510, 64 [#allocation5]
        %v635 = vld [vmem:[%s634] sm:$0xff]
        %v636 = vld [vmem:[%s634 + $0x8] sm:$0xff]
        %v637 = vld [vmem:[%s634 + $0x10] sm:$0xff]
        %v638 = vld [vmem:[%s634 + $0x18] sm:$0xff]
        %643 = vrot.lane.b32.xlu0 %v635, 64
        %v644 = vpop.permute.xlu0 %643
        %645 = vrot.lane.b32.xlu0 %v636, 64
        %v646 = vpop.permute.xlu0 %645
        %647 = vrot.lane.b32.xlu0 %v637, 64
        %v648 = vpop.permute.xlu0 %647
        %649 = vrot.lane.b32.xlu0 %v638, 64
        %v650 = vpop.permute.xlu0 %649
        %vm655 = vcmask 785920
        %656 = vst.msk [vmem:[#allocation2 + $0x2] sm:$0xff] %vm655, %v644
        %657 = vst.msk [vmem:[#allocation2 + $0xa] sm:$0xff] %vm655, %v646
        %658 = vst.msk [vmem:[#allocation2 + $0x12] sm:$0xff] %vm655, %v648
        %659 = vst.msk [vmem:[#allocation2 + $0x1a] sm:$0xff] %vm655, %v650
        %v660 = vld [vmem:[#allocation2] sm:$0xff]
        %v661 = vld [vmem:[#allocation2 + $0x8] sm:$0xff]
        %v662 = vld [vmem:[#allocation2 + $0x10] sm:$0xff]
        %v663 = vld [vmem:[#allocation2 + $0x18] sm:$0xff]
        %v664 = vld [vmem:[#allocation7] sm:$0xff]
        %v665 = vld [vmem:[#allocation7 + $0x8] sm:$0xff]
        %v666 = vld [vmem:[#allocation7 + $0x10] sm:$0xff]
        %v667 = vld [vmem:[#allocation7 + $0x18] sm:$0xff]
        %v668 = vld [vmem:[#allocation7 + $0x20] sm:$0xff]
        %v669 = vld [vmem:[#allocation7 + $0x28] sm:$0xff]
        %v670 = vld [vmem:[#allocation7 + $0x30] sm:$0xff]
        %v671 = vld [vmem:[#allocation7 + $0x38] sm:$0xff]
        %v672 = vld [vmem:[#allocation7 + $0x40] sm:$0xff]
        %v673 = vld [vmem:[#allocation7 + $0x48] sm:$0xff]
        %v674 = vld [vmem:[#allocation7 + $0x50] sm:$0xff]
        %v675 = vld [vmem:[#allocation7 + $0x58] sm:$0xff]
        %v676 = vld [vmem:[#allocation2 + $0x1] sm:$0xff]
        %v677 = vld [vmem:[#allocation2 + $0x9] sm:$0xff]
        %v678 = vld [vmem:[#allocation2 + $0x11] sm:$0xff]
        %v679 = vld [vmem:[#allocation2 + $0x19] sm:$0xff]
        %s680 = scalar_lea.vmem [#allocation7], 96
        %v681 = vld [vmem:[%s680] sm:$0xff]
        %v682 = vld [vmem:[%s680 + $0x8] sm:$0xff]
        %v683 = vld [vmem:[%s680 + $0x10] sm:$0xff]
        %v684 = vld [vmem:[%s680 + $0x18] sm:$0xff]
        %v685 = vld [vmem:[%s680 + $0x20] sm:$0xff]
        %v686 = vld [vmem:[%s680 + $0x28] sm:$0xff]
        %v687 = vld [vmem:[%s680 + $0x30] sm:$0xff]
        %v688 = vld [vmem:[%s680 + $0x38] sm:$0xff]
        %v689 = vld [vmem:[%s680 + $0x40] sm:$0xff]
        %v690 = vld [vmem:[%s680 + $0x48] sm:$0xff]
        %v691 = vld [vmem:[%s680 + $0x50] sm:$0xff]
        %v692 = vld [vmem:[%s680 + $0x58] sm:$0xff]
        %vm693 = vcmask 785408
        %v695 = vsel %vm693, %v676, 0
        %v698 = vsel %vm693, %v677, 0
        %v701 = vsel %vm693, %v678, 0
        %v704 = vsel %vm693, %v679, 0
        %706 = vmatprep.subr.mxu0 0.0
        %707 = vmatpush1.msra.mxu0 0.0
        %708 = vmatprep.subr.mxu0 0.0
        %709 = vmatpush1.msra.mxu0 0.0
        %710 = vmatprep.subr.mxu0 0.0
        %711 = vmatpush1.msra.mxu0 0.0
        %712 = vmatprep.subr.mxu0 0.0
        %713 = vmatpush1.msra.mxu0 0.0
        %714 = vmatprep.subr.mxu0 0.0
        %715 = vmatpush1.msra.mxu0 %v692
        %716 = vmatprep.subr.mxu0 0.0
        %717 = vmatpush1.msra.mxu0 %v691
        %718 = vmatprep.subr.mxu0 0.0
        %719 = vmatpush1.msra.mxu0 %v690
        %720 = vmatprep.subr.mxu0 0.0
        %721 = vmatpush1.msra.mxu0 %v689
        %722 = vmatprep.subr.mxu0 0.0
        %723 = vmatpush1.msra.mxu0 %v688
        %724 = vmatprep.subr.mxu0 0.0
        %725 = vmatpush1.msra.mxu0 %v687
        %726 = vmatprep.subr.mxu0 0.0
        %727 = vmatpush1.msra.mxu0 %v686
        %728 = vmatprep.subr.mxu0 0.0
        %729 = vmatpush1.msra.mxu0 %v685
        %730 = vmatprep.subr.mxu0 0.0
        %731 = vmatpush1.msra.mxu0 %v684
        %732 = vmatprep.subr.mxu0 0.0
        %733 = vmatpush1.msra.mxu0 %v683
        %734 = vmatprep.subr.mxu0 0.0
        %735 = vmatpush1.msra.mxu0 %v682
        %736 = vmatprep.subr.mxu0 0.0
        %737 = vmatpush1.msra.mxu0 %v681
        %738 = vmatprep.subr.mxu0 0.0
        %739 = vmatpush2.msra.mxu0 0.0
        %740 = vmatprep.subr.mxu0 0.0
        %741 = vmatpush2.msra.mxu0 0.0
        %742 = vmatprep.subr.mxu0 0.0
        %743 = vmatpush2.msra.mxu0 0.0
        %744 = vmatprep.subr.mxu0 0.0
        %745 = vmatpush2.msra.mxu0 0.0
        %746 = vmatprep.subr.mxu0 0.0
        %747 = vmatpush2.msra.mxu0 0.0
        %748 = vmatprep.subr.mxu0 0.0
        %749 = vmatpush2.msra.mxu0 0.0
        %750 = vmatprep.subr.mxu0 0.0
        %751 = vmatpush2.msra.mxu0 0.0
        %752 = vmatprep.subr.mxu0 0.0
        %753 = vmatpush2.msra.mxu0 0.0
        %754 = vmatprep.subr.mxu0 0.0
        %755 = vmatpush2.msra.mxu0 0.0
        %756 = vmatprep.subr.mxu0 0.0
        %757 = vmatpush2.msra.mxu0 0.0
        %758 = vmatprep.subr.mxu0 0.0
        %759 = vmatpush2.msra.mxu0 0.0
        %760 = vmatprep.subr.mxu0 0.0
        %761 = vmatpush2.msra.mxu0 0.0
        %762 = vmatprep.subr.mxu0 0.0
        %763 = vmatpush2.msra.mxu0 0.0
        %764 = vmatprep.subr.mxu0 0.0
        %765 = vmatpush2.msra.mxu0 0.0
        %766 = vmatprep.subr.mxu0 0.0
        %767 = vmatpush2.msra.mxu0 0.0
        %768 = vmatprep.subr.mxu0 0.0
        %769 = vmatpush2.msra.mxu0 0.0
        %770 = vmatprep.mubr.f32.mxu0 0.0
        %771 = vmatmul.mubr.f32.gmra.mxu0 %v695
        %v772 = vpop.f32.mrf.mxu0
        %v773 = vadd.f32 0.0, %v772
        %v774 = vpop.f32.mrf.mxu0
        %775 = vmatprep.mubr.f32.mxu0 0.0
        %776 = vmatmul.mubr.f32.gmra.mxu0 %v698
        %v777 = vpop.f32.mrf.mxu0
        %v778 = vadd.f32 0.0, %v777
        %v779 = vpop.f32.mrf.mxu0
        %780 = vmatprep.mubr.f32.mxu0 0.0
        %781 = vmatmul.mubr.f32.gmra.mxu0 %v701
        %v782 = vpop.f32.mrf.mxu0
        %v783 = vadd.f32 0.0, %v782
        %v784 = vpop.f32.mrf.mxu0
        %785 = vmatprep.mubr.f32.mxu0 0.0
        %786 = vmatmul.mubr.f32.gmra.mxu0 %v704
        %v787 = vpop.f32.mrf.mxu0
        %v788 = vadd.f32 0.0, %v787
        %v789 = vpop.f32.mrf.mxu0
        %790 = vdwg.mxu0
        %v792 = vsel %vm693, %v660, 0
        %v795 = vsel %vm693, %v661, 0
        %v798 = vsel %vm693, %v662, 0
        %v801 = vsel %vm693, %v663, 0
        %803 = vmatprep.subr.mxu0 0.0
        %804 = vmatpush1.msra.mxu0 0.0
        %805 = vmatprep.subr.mxu0 0.0
        %806 = vmatpush1.msra.mxu0 0.0
        %807 = vmatprep.subr.mxu0 0.0
        %808 = vmatpush1.msra.mxu0 0.0
        %809 = vmatprep.subr.mxu0 0.0
        %810 = vmatpush1.msra.mxu0 0.0
        %811 = vmatprep.subr.mxu0 0.0
        %812 = vmatpush1.msra.mxu0 %v675
        %813 = vmatprep.subr.mxu0 0.0
        %814 = vmatpush1.msra.mxu0 %v674
        %815 = vmatprep.subr.mxu0 0.0
        %816 = vmatpush1.msra.mxu0 %v673
        %817 = vmatprep.subr.mxu0 0.0
        %818 = vmatpush1.msra.mxu0 %v672
        %819 = vmatprep.subr.mxu0 0.0
        %820 = vmatpush1.msra.mxu0 %v671
        %821 = vmatprep.subr.mxu0 0.0
        %822 = vmatpush1.msra.mxu0 %v670
        %823 = vmatprep.subr.mxu0 0.0
        %824 = vmatpush1.msra.mxu0 %v669
        %825 = vmatprep.subr.mxu0 0.0
        %826 = vmatpush1.msra.mxu0 %v668
        %827 = vmatprep.subr.mxu0 0.0
        %828 = vmatpush1.msra.mxu0 %v667
        %829 = vmatprep.subr.mxu0 0.0
        %830 = vmatpush1.msra.mxu0 %v666
        %831 = vmatprep.subr.mxu0 0.0
        %832 = vmatpush1.msra.mxu0 %v665
        %833 = vmatprep.subr.mxu0 0.0
        %834 = vmatpush1.msra.mxu0 %v664
        %835 = vmatprep.subr.mxu0 0.0
        %836 = vmatpush2.msra.mxu0 0.0
        %837 = vmatprep.subr.mxu0 0.0
        %838 = vmatpush2.msra.mxu0 0.0
        %839 = vmatprep.subr.mxu0 0.0
        %840 = vmatpush2.msra.mxu0 0.0
        %841 = vmatprep.subr.mxu0 0.0
        %842 = vmatpush2.msra.mxu0 0.0
        %843 = vmatprep.subr.mxu0 0.0
        %844 = vmatpush2.msra.mxu0 0.0
        %845 = vmatprep.subr.mxu0 0.0
        %846 = vmatpush2.msra.mxu0 0.0
        %847 = vmatprep.subr.mxu0 0.0
        %848 = vmatpush2.msra.mxu0 0.0
        %849 = vmatprep.subr.mxu0 0.0
        %850 = vmatpush2.msra.mxu0 0.0
        %851 = vmatprep.subr.mxu0 0.0
        %852 = vmatpush2.msra.mxu0 0.0
        %853 = vmatprep.subr.mxu0 0.0
        %854 = vmatpush2.msra.mxu0 0.0
        %855 = vmatprep.subr.mxu0 0.0
        %856 = vmatpush2.msra.mxu0 0.0
        %857 = vmatprep.subr.mxu0 0.0
        %858 = vmatpush2.msra.mxu0 0.0
        %859 = vmatprep.subr.mxu0 0.0
        %860 = vmatpush2.msra.mxu0 0.0
        %861 = vmatprep.subr.mxu0 0.0
        %862 = vmatpush2.msra.mxu0 0.0
        %863 = vmatprep.subr.mxu0 0.0
        %864 = vmatpush2.msra.mxu0 0.0
        %865 = vmatprep.subr.mxu0 0.0
        %866 = vmatpush2.msra.mxu0 0.0
        %867 = vmatprep.mubr.f32.mxu0 0.0
        %868 = vmatmul.mubr.f32.gmra.mxu0 %v792
        %v869 = vpop.f32.mrf.mxu0
        %v870 = vadd.f32 %v773, %v869
        %v871 = vpop.f32.mrf.mxu0
        %872 = vmatprep.mubr.f32.mxu0 0.0
        %873 = vmatmul.mubr.f32.gmra.mxu0 %v795
        %v874 = vpop.f32.mrf.mxu0
        %v875 = vadd.f32 %v778, %v874
        %v876 = vpop.f32.mrf.mxu0
        %877 = vmatprep.mubr.f32.mxu0 0.0
        %878 = vmatmul.mubr.f32.gmra.mxu0 %v798
        %v879 = vpop.f32.mrf.mxu0
        %v880 = vadd.f32 %v783, %v879
        %v881 = vpop.f32.mrf.mxu0
        %882 = vmatprep.mubr.f32.mxu0 0.0
        %883 = vmatmul.mubr.f32.gmra.mxu0 %v801
        %v884 = vpop.f32.mrf.mxu0
        %v885 = vadd.f32 %v788, %v884
        %v886 = vpop.f32.mrf.mxu0
        %887 = vdwg.mxu0
        %v888 = vld [vmem:[#allocation2 + $0x2] sm:$0xff]
        %v889 = vld [vmem:[#allocation2 + $0xa] sm:$0xff]
        %v890 = vld [vmem:[#allocation2 + $0x12] sm:$0xff]
        %v891 = vld [vmem:[#allocation2 + $0x1a] sm:$0xff]
        %s892 = scalar_lea.vmem [#allocation7], 192
        %v893 = vld [vmem:[%s892] sm:$0xff]
        %v894 = vld [vmem:[%s892 + $0x8] sm:$0xff]
        %v895 = vld [vmem:[%s892 + $0x10] sm:$0xff]
        %v896 = vld [vmem:[%s892 + $0x18] sm:$0xff]
        %v897 = vld [vmem:[%s892 + $0x20] sm:$0xff]
        %v898 = vld [vmem:[%s892 + $0x28] sm:$0xff]
        %v899 = vld [vmem:[%s892 + $0x30] sm:$0xff]
        %v900 = vld [vmem:[%s892 + $0x38] sm:$0xff]
        %v901 = vld [vmem:[%s892 + $0x40] sm:$0xff]
        %v902 = vld [vmem:[%s892 + $0x48] sm:$0xff]
        %v903 = vld [vmem:[%s892 + $0x50] sm:$0xff]
        %v904 = vld [vmem:[%s892 + $0x58] sm:$0xff]
        %v906 = vsel %vm693, %v888, 0
        %v909 = vsel %vm693, %v889, 0
        %v912 = vsel %vm693, %v890, 0
        %v915 = vsel %vm693, %v891, 0
        %917 = vmatprep.subr.mxu0 0.0
        %918 = vmatpush1.msra.mxu0 0.0
        %919 = vmatprep.subr.mxu0 0.0
        %920 = vmatpush1.msra.mxu0 0.0
        %921 = vmatprep.subr.mxu0 0.0
        %922 = vmatpush1.msra.mxu0 0.0
        %923 = vmatprep.subr.mxu0 0.0
        %924 = vmatpush1.msra.mxu0 0.0
        %925 = vmatprep.subr.mxu0 0.0
        %926 = vmatpush1.msra.mxu0 %v904
        %927 = vmatprep.subr.mxu0 0.0
        %928 = vmatpush1.msra.mxu0 %v903
        %929 = vmatprep.subr.mxu0 0.0
        %930 = vmatpush1.msra.mxu0 %v902
        %931 = vmatprep.subr.mxu0 0.0
        %932 = vmatpush1.msra.mxu0 %v901
        %933 = vmatprep.subr.mxu0 0.0
        %934 = vmatpush1.msra.mxu0 %v900
        %935 = vmatprep.subr.mxu0 0.0
        %936 = vmatpush1.msra.mxu0 %v899
        %937 = vmatprep.subr.mxu0 0.0
        %938 = vmatpush1.msra.mxu0 %v898
        %939 = vmatprep.subr.mxu0 0.0
        %940 = vmatpush1.msra.mxu0 %v897
        %941 = vmatprep.subr.mxu0 0.0
        %942 = vmatpush1.msra.mxu0 %v896
        %943 = vmatprep.subr.mxu0 0.0
        %944 = vmatpush1.msra.mxu0 %v895
        %945 = vmatprep.subr.mxu0 0.0
        %946 = vmatpush1.msra.mxu0 %v894
        %947 = vmatprep.subr.mxu0 0.0
        %948 = vmatpush1.msra.mxu0 %v893
        %949 = vmatprep.subr.mxu0 0.0
        %950 = vmatpush2.msra.mxu0 0.0
        %951 = vmatprep.subr.mxu0 0.0
        %952 = vmatpush2.msra.mxu0 0.0
        %953 = vmatprep.subr.mxu0 0.0
        %954 = vmatpush2.msra.mxu0 0.0
        %955 = vmatprep.subr.mxu0 0.0
        %956 = vmatpush2.msra.mxu0 0.0
        %957 = vmatprep.subr.mxu0 0.0
        %958 = vmatpush2.msra.mxu0 0.0
        %959 = vmatprep.subr.mxu0 0.0
        %960 = vmatpush2.msra.mxu0 0.0
        %961 = vmatprep.subr.mxu0 0.0
        %962 = vmatpush2.msra.mxu0 0.0
        %963 = vmatprep.subr.mxu0 0.0
        %964 = vmatpush2.msra.mxu0 0.0
        %965 = vmatprep.subr.mxu0 0.0
        %966 = vmatpush2.msra.mxu0 0.0
        %967 = vmatprep.subr.mxu0 0.0
        %968 = vmatpush2.msra.mxu0 0.0
        %969 = vmatprep.subr.mxu0 0.0
        %970 = vmatpush2.msra.mxu0 0.0
        %971 = vmatprep.subr.mxu0 0.0
        %972 = vmatpush2.msra.mxu0 0.0
        %973 = vmatprep.subr.mxu0 0.0
        %974 = vmatpush2.msra.mxu0 0.0
        %975 = vmatprep.subr.mxu0 0.0
        %976 = vmatpush2.msra.mxu0 0.0
        %977 = vmatprep.subr.mxu0 0.0
        %978 = vmatpush2.msra.mxu0 0.0
        %979 = vmatprep.subr.mxu0 0.0
        %980 = vmatpush2.msra.mxu0 0.0
        %981 = vmatprep.mubr.f32.mxu0 0.0
        %982 = vmatmul.mubr.f32.gmra.mxu0 %v906
        %v983 = vpop.f32.mrf.mxu0
        %v984 = vadd.f32 0.0, %v983
        %v985 = vpop.f32.mrf.mxu0
        %986 = vmatprep.mubr.f32.mxu0 0.0
        %987 = vmatmul.mubr.f32.gmra.mxu0 %v909
        %v988 = vpop.f32.mrf.mxu0
        %v989 = vadd.f32 0.0, %v988
        %v990 = vpop.f32.mrf.mxu0
        %991 = vmatprep.mubr.f32.mxu0 0.0
        %992 = vmatmul.mubr.f32.gmra.mxu0 %v912
        %v993 = vpop.f32.mrf.mxu0
        %v994 = vadd.f32 0.0, %v993
        %v995 = vpop.f32.mrf.mxu0
        %996 = vmatprep.mubr.f32.mxu0 0.0
        %997 = vmatmul.mubr.f32.gmra.mxu0 %v915
        %v998 = vpop.f32.mrf.mxu0
        %v999 = vadd.f32 0.0, %v998
        %v1000 = vpop.f32.mrf.mxu0
        %1001 = vdwg.mxu0
        %v1002 = vadd.f32 %v870, %v984
        %v1003 = vadd.f32 %v875, %v989
        %v1004 = vadd.f32 %v880, %v994
        %v1005 = vadd.f32 %v885, %v999
        %v1006 = vld [vmem:[#allocation2 + $0x3] sm:$0xff]
        %v1007 = vld [vmem:[#allocation2 + $0xb] sm:$0xff]
        %v1008 = vld [vmem:[#allocation2 + $0x13] sm:$0xff]
        %v1009 = vld [vmem:[#allocation2 + $0x1b] sm:$0xff]
        %s1010 = scalar_lea.vmem [#allocation7], 288
        %v1011 = vld [vmem:[%s1010] sm:$0xff]
        %v1012 = vld [vmem:[%s1010 + $0x8] sm:$0xff]
        %v1013 = vld [vmem:[%s1010 + $0x10] sm:$0xff]
        %v1014 = vld [vmem:[%s1010 + $0x18] sm:$0xff]
        %v1015 = vld [vmem:[%s1010 + $0x20] sm:$0xff]
        %v1016 = vld [vmem:[%s1010 + $0x28] sm:$0xff]
        %v1017 = vld [vmem:[%s1010 + $0x30] sm:$0xff]
        %v1018 = vld [vmem:[%s1010 + $0x38] sm:$0xff]
        %v1019 = vld [vmem:[%s1010 + $0x40] sm:$0xff]
        %v1020 = vld [vmem:[%s1010 + $0x48] sm:$0xff]
        %v1021 = vld [vmem:[%s1010 + $0x50] sm:$0xff]
        %v1022 = vld [vmem:[%s1010 + $0x58] sm:$0xff]
        %v1024 = vsel %vm693, %v1006, 0
        %v1027 = vsel %vm693, %v1007, 0
        %v1030 = vsel %vm693, %v1008, 0
        %v1033 = vsel %vm693, %v1009, 0
        %1035 = vmatprep.subr.mxu0 0.0
        %1036 = vmatpush1.msra.mxu0 0.0
        %1037 = vmatprep.subr.mxu0 0.0
        %1038 = vmatpush1.msra.mxu0 0.0
        %1039 = vmatprep.subr.mxu0 0.0
        %1040 = vmatpush1.msra.mxu0 0.0
        %1041 = vmatprep.subr.mxu0 0.0
        %1042 = vmatpush1.msra.mxu0 0.0
        %1043 = vmatprep.subr.mxu0 0.0
        %1044 = vmatpush1.msra.mxu0 %v1022
        %1045 = vmatprep.subr.mxu0 0.0
        %1046 = vmatpush1.msra.mxu0 %v1021
        %1047 = vmatprep.subr.mxu0 0.0
        %1048 = vmatpush1.msra.mxu0 %v1020
        %1049 = vmatprep.subr.mxu0 0.0
        %1050 = vmatpush1.msra.mxu0 %v1019
        %1051 = vmatprep.subr.mxu0 0.0
        %1052 = vmatpush1.msra.mxu0 %v1018
        %1053 = vmatprep.subr.mxu0 0.0
        %1054 = vmatpush1.msra.mxu0 %v1017
        %1055 = vmatprep.subr.mxu0 0.0
        %1056 = vmatpush1.msra.mxu0 %v1016
        %1057 = vmatprep.subr.mxu0 0.0
        %1058 = vmatpush1.msra.mxu0 %v1015
        %1059 = vmatprep.subr.mxu0 0.0
        %1060 = vmatpush1.msra.mxu0 %v1014
        %1061 = vmatprep.subr.mxu0 0.0
        %1062 = vmatpush1.msra.mxu0 %v1013
        %1063 = vmatprep.subr.mxu0 0.0
        %1064 = vmatpush1.msra.mxu0 %v1012
        %1065 = vmatprep.subr.mxu0 0.0
        %1066 = vmatpush1.msra.mxu0 %v1011
        %1067 = vmatprep.subr.mxu0 0.0
        %1068 = vmatpush2.msra.mxu0 0.0
        %1069 = vmatprep.subr.mxu0 0.0
        %1070 = vmatpush2.msra.mxu0 0.0
        %1071 = vmatprep.subr.mxu0 0.0
        %1072 = vmatpush2.msra.mxu0 0.0
        %1073 = vmatprep.subr.mxu0 0.0
        %1074 = vmatpush2.msra.mxu0 0.0
        %1075 = vmatprep.subr.mxu0 0.0
        %1076 = vmatpush2.msra.mxu0 0.0
        %1077 = vmatprep.subr.mxu0 0.0
        %1078 = vmatpush2.msra.mxu0 0.0
        %1079 = vmatprep.subr.mxu0 0.0
        %1080 = vmatpush2.msra.mxu0 0.0
        %1081 = vmatprep.subr.mxu0 0.0
        %1082 = vmatpush2.msra.mxu0 0.0
        %1083 = vmatprep.subr.mxu0 0.0
        %1084 = vmatpush2.msra.mxu0 0.0
        %1085 = vmatprep.subr.mxu0 0.0
        %1086 = vmatpush2.msra.mxu0 0.0
        %1087 = vmatprep.subr.mxu0 0.0
        %1088 = vmatpush2.msra.mxu0 0.0
        %1089 = vmatprep.subr.mxu0 0.0
        %1090 = vmatpush2.msra.mxu0 0.0
        %1091 = vmatprep.subr.mxu0 0.0
        %1092 = vmatpush2.msra.mxu0 0.0
        %1093 = vmatprep.subr.mxu0 0.0
        %1094 = vmatpush2.msra.mxu0 0.0
        %1095 = vmatprep.subr.mxu0 0.0
        %1096 = vmatpush2.msra.mxu0 0.0
        %1097 = vmatprep.subr.mxu0 0.0
        %1098 = vmatpush2.msra.mxu0 0.0
        %1099 = vmatprep.mubr.f32.mxu0 0.0
        %1100 = vmatmul.mubr.f32.gmra.mxu0 %v1024
        %v1101 = vpop.f32.mrf.mxu0
        %v1102 = vadd.f32 0.0, %v1101
        %v1103 = vpop.f32.mrf.mxu0
        %1104 = vmatprep.mubr.f32.mxu0 0.0
        %1105 = vmatmul.mubr.f32.gmra.mxu0 %v1027
        %v1106 = vpop.f32.mrf.mxu0
        %v1107 = vadd.f32 0.0, %v1106
        %v1108 = vpop.f32.mrf.mxu0
        %1109 = vmatprep.mubr.f32.mxu0 0.0
        %1110 = vmatmul.mubr.f32.gmra.mxu0 %v1030
        %v1111 = vpop.f32.mrf.mxu0
        %v1112 = vadd.f32 0.0, %v1111
        %v1113 = vpop.f32.mrf.mxu0
        %1114 = vmatprep.mubr.f32.mxu0 0.0
        %1115 = vmatmul.mubr.f32.gmra.mxu0 %v1033
        %v1116 = vpop.f32.mrf.mxu0
        %v1117 = vadd.f32 0.0, %v1116
        %v1118 = vpop.f32.mrf.mxu0
        %1119 = vdwg.mxu0
        %v1120 = vadd.f32 %v1002, %v1102
        %v1121 = vadd.f32 %v1003, %v1107
        %v1122 = vadd.f32 %v1004, %v1112
        %v1123 = vadd.f32 %v1005, %v1117
        %v1124 = vld [vmem:[#allocation2 + $0x4] sm:$0xff]
        %v1125 = vld [vmem:[#allocation2 + $0xc] sm:$0xff]
        %v1126 = vld [vmem:[#allocation2 + $0x14] sm:$0xff]
        %v1127 = vld [vmem:[#allocation2 + $0x1c] sm:$0xff]
        %s1128 = scalar_lea.vmem [#allocation7], 384
        %v1129 = vld [vmem:[%s1128] sm:$0xff]
        %v1130 = vld [vmem:[%s1128 + $0x8] sm:$0xff]
        %v1131 = vld [vmem:[%s1128 + $0x10] sm:$0xff]
        %v1132 = vld [vmem:[%s1128 + $0x18] sm:$0xff]
        %v1133 = vld [vmem:[%s1128 + $0x20] sm:$0xff]
        %v1134 = vld [vmem:[%s1128 + $0x28] sm:$0xff]
        %v1135 = vld [vmem:[%s1128 + $0x30] sm:$0xff]
        %v1136 = vld [vmem:[%s1128 + $0x38] sm:$0xff]
        %v1137 = vld [vmem:[%s1128 + $0x40] sm:$0xff]
        %v1138 = vld [vmem:[%s1128 + $0x48] sm:$0xff]
        %v1139 = vld [vmem:[%s1128 + $0x50] sm:$0xff]
        %v1140 = vld [vmem:[%s1128 + $0x58] sm:$0xff]
        %v1142 = vsel %vm693, %v1124, 0
        %v1145 = vsel %vm693, %v1125, 0
        %v1148 = vsel %vm693, %v1126, 0
        %v1151 = vsel %vm693, %v1127, 0
        %1153 = vmatprep.subr.mxu0 0.0
        %1154 = vmatpush1.msra.mxu0 0.0
        %1155 = vmatprep.subr.mxu0 0.0
        %1156 = vmatpush1.msra.mxu0 0.0
        %1157 = vmatprep.subr.mxu0 0.0
        %1158 = vmatpush1.msra.mxu0 0.0
        %1159 = vmatprep.subr.mxu0 0.0
        %1160 = vmatpush1.msra.mxu0 0.0
        %1161 = vmatprep.subr.mxu0 0.0
        %1162 = vmatpush1.msra.mxu0 %v1140
        %1163 = vmatprep.subr.mxu0 0.0
        %1164 = vmatpush1.msra.mxu0 %v1139
        %1165 = vmatprep.subr.mxu0 0.0
        %1166 = vmatpush1.msra.mxu0 %v1138
        %1167 = vmatprep.subr.mxu0 0.0
        %1168 = vmatpush1.msra.mxu0 %v1137
        %1169 = vmatprep.subr.mxu0 0.0
        %1170 = vmatpush1.msra.mxu0 %v1136
        %1171 = vmatprep.subr.mxu0 0.0
        %1172 = vmatpush1.msra.mxu0 %v1135
        %1173 = vmatprep.subr.mxu0 0.0
        %1174 = vmatpush1.msra.mxu0 %v1134
        %1175 = vmatprep.subr.mxu0 0.0
        %1176 = vmatpush1.msra.mxu0 %v1133
        %1177 = vmatprep.subr.mxu0 0.0
        %1178 = vmatpush1.msra.mxu0 %v1132
        %1179 = vmatprep.subr.mxu0 0.0
        %1180 = vmatpush1.msra.mxu0 %v1131
        %1181 = vmatprep.subr.mxu0 0.0
        %1182 = vmatpush1.msra.mxu0 %v1130
        %1183 = vmatprep.subr.mxu0 0.0
        %1184 = vmatpush1.msra.mxu0 %v1129
        %1185 = vmatprep.subr.mxu0 0.0
        %1186 = vmatpush2.msra.mxu0 0.0
        %1187 = vmatprep.subr.mxu0 0.0
        %1188 = vmatpush2.msra.mxu0 0.0
        %1189 = vmatprep.subr.mxu0 0.0
        %1190 = vmatpush2.msra.mxu0 0.0
        %1191 = vmatprep.subr.mxu0 0.0
        %1192 = vmatpush2.msra.mxu0 0.0
        %1193 = vmatprep.subr.mxu0 0.0
        %1194 = vmatpush2.msra.mxu0 0.0
        %1195 = vmatprep.subr.mxu0 0.0
        %1196 = vmatpush2.msra.mxu0 0.0
        %1197 = vmatprep.subr.mxu0 0.0
        %1198 = vmatpush2.msra.mxu0 0.0
        %1199 = vmatprep.subr.mxu0 0.0
        %1200 = vmatpush2.msra.mxu0 0.0
        %1201 = vmatprep.subr.mxu0 0.0
        %1202 = vmatpush2.msra.mxu0 0.0
        %1203 = vmatprep.subr.mxu0 0.0
        %1204 = vmatpush2.msra.mxu0 0.0
        %1205 = vmatprep.subr.mxu0 0.0
        %1206 = vmatpush2.msra.mxu0 0.0
        %1207 = vmatprep.subr.mxu0 0.0
        %1208 = vmatpush2.msra.mxu0 0.0
        %1209 = vmatprep.subr.mxu0 0.0
        %1210 = vmatpush2.msra.mxu0 0.0
        %1211 = vmatprep.subr.mxu0 0.0
        %1212 = vmatpush2.msra.mxu0 0.0
        %1213 = vmatprep.subr.mxu0 0.0
        %1214 = vmatpush2.msra.mxu0 0.0
        %1215 = vmatprep.subr.mxu0 0.0
        %1216 = vmatpush2.msra.mxu0 0.0
        %1217 = vmatprep.mubr.f32.mxu0 0.0
        %1218 = vmatmul.mubr.f32.gmra.mxu0 %v1142
        %v1219 = vpop.f32.mrf.mxu0
        %v1220 = vadd.f32 0.0, %v1219
        %v1221 = vpop.f32.mrf.mxu0
        %1222 = vmatprep.mubr.f32.mxu0 0.0
        %1223 = vmatmul.mubr.f32.gmra.mxu0 %v1145
        %v1224 = vpop.f32.mrf.mxu0
        %v1225 = vadd.f32 0.0, %v1224
        %v1226 = vpop.f32.mrf.mxu0
        %1227 = vmatprep.mubr.f32.mxu0 0.0
        %1228 = vmatmul.mubr.f32.gmra.mxu0 %v1148
        %v1229 = vpop.f32.mrf.mxu0
        %v1230 = vadd.f32 0.0, %v1229
        %v1231 = vpop.f32.mrf.mxu0
        %1232 = vmatprep.mubr.f32.mxu0 0.0
        %1233 = vmatmul.mubr.f32.gmra.mxu0 %v1151
        %v1234 = vpop.f32.mrf.mxu0
        %v1235 = vadd.f32 0.0, %v1234
        %v1236 = vpop.f32.mrf.mxu0
        %1237 = vdwg.mxu0
        %v1238 = vadd.f32 %v1120, %v1220
        %v1239 = vadd.f32 %v1121, %v1225
        %v1240 = vadd.f32 %v1122, %v1230
        %v1241 = vadd.f32 %v1123, %v1235
        %v1242 = vld [vmem:[#allocation9] sm:$0x1]
        %v1244 = vlaneseq
        %v1245 = vshrl.u32 %v1244, 7
        %v1246 = vsub.s32 0, %v1245
        %v1247 = vrot.slane %v1242, %v1246
        %v1249 = vadd.f32 %v1238, %v1247
        %v1250 = vadd.f32 %v1239, %v1247
        %v1251 = vadd.f32 %v1240, %v1247
        %v1252 = vadd.f32 %v1241, %v1247
        %v1253 = vmax.f32 %v1249, 0.0
        %v1254 = vmax.f32 %v1250, 0.0
        %v1255 = vmax.f32 %v1251, 0.0
        %v1256 = vmax.f32 %v1252, 0.0
        %v1257 = vld [vmem:[%s3] sm:$0xff]
        %v1258 = vld [vmem:[%s3 + $0x8] sm:$0xff]
        %v1259 = vld [vmem:[%s3 + $0x10] sm:$0xff]
        %v1260 = vld [vmem:[%s3 + $0x18] sm:$0xff]
        %v1261 = vld [vmem:[%s3 + $0x20] sm:$0xff]
        %v1262 = vld [vmem:[%s3 + $0x28] sm:$0xff]
        %v1263 = vld [vmem:[%s3 + $0x30] sm:$0xff]
        %v1264 = vld [vmem:[%s3 + $0x38] sm:$0xff]
        %v1265 = vld [vmem:[%s3 + $0x40] sm:$0xff]
        %v1266 = vld [vmem:[%s3 + $0x48] sm:$0xff]
        %v1267 = vld [vmem:[%s3 + $0x50] sm:$0xff]
        %v1268 = vld [vmem:[%s3 + $0x58] sm:$0xff]
        %v1269 = vld [vmem:[%s3 + $0x60] sm:$0xff]
        %v1270 = vld [vmem:[%s3 + $0x68] sm:$0xff]
        %v1271 = vld [vmem:[%s3 + $0x70] sm:$0xff]
        %v1272 = vld [vmem:[%s3 + $0x78] sm:$0xff]
        %1273 = vmatprep.subr.mxu0 0.0
        %1274 = vmatpush1.msra.mxu0 %v1272
        %1275 = vmatprep.subr.mxu0 0.0
        %1276 = vmatpush1.msra.mxu0 %v1271
        %1277 = vmatprep.subr.mxu0 0.0
        %1278 = vmatpush1.msra.mxu0 %v1270
        %1279 = vmatprep.subr.mxu0 0.0
        %1280 = vmatpush1.msra.mxu0 %v1269
        %1281 = vmatprep.subr.mxu0 0.0
        %1282 = vmatpush1.msra.mxu0 %v1268
        %1283 = vmatprep.subr.mxu0 0.0
        %1284 = vmatpush1.msra.mxu0 %v1267
        %1285 = vmatprep.subr.mxu0 0.0
        %1286 = vmatpush1.msra.mxu0 %v1266
        %1287 = vmatprep.subr.mxu0 0.0
        %1288 = vmatpush1.msra.mxu0 %v1265
        %1289 = vmatprep.subr.mxu0 0.0
        %1290 = vmatpush1.msra.mxu0 %v1264
        %1291 = vmatprep.subr.mxu0 0.0
        %1292 = vmatpush1.msra.mxu0 %v1263
        %1293 = vmatprep.subr.mxu0 0.0
        %1294 = vmatpush1.msra.mxu0 %v1262
        %1295 = vmatprep.subr.mxu0 0.0
        %1296 = vmatpush1.msra.mxu0 %v1261
        %1297 = vmatprep.subr.mxu0 0.0
        %1298 = vmatpush1.msra.mxu0 %v1260
        %1299 = vmatprep.subr.mxu0 0.0
        %1300 = vmatpush1.msra.mxu0 %v1259
        %1301 = vmatprep.subr.mxu0 0.0
        %1302 = vmatpush1.msra.mxu0 %v1258
        %1303 = vmatprep.subr.mxu0 0.0
        %1304 = vmatpush1.msra.mxu0 %v1257
        %1305 = vmatprep.subr.mxu0 0.0
        %1306 = vmatpush2.msra.mxu0 0.0
        %1307 = vmatprep.subr.mxu0 0.0
        %1308 = vmatpush2.msra.mxu0 0.0
        %1309 = vmatprep.subr.mxu0 0.0
        %1310 = vmatpush2.msra.mxu0 0.0
        %1311 = vmatprep.subr.mxu0 0.0
        %1312 = vmatpush2.msra.mxu0 0.0
        %1313 = vmatprep.subr.mxu0 0.0
        %1314 = vmatpush2.msra.mxu0 0.0
        %1315 = vmatprep.subr.mxu0 0.0
        %1316 = vmatpush2.msra.mxu0 0.0
        %1317 = vmatprep.subr.mxu0 0.0
        %1318 = vmatpush2.msra.mxu0 0.0
        %1319 = vmatprep.subr.mxu0 0.0
        %1320 = vmatpush2.msra.mxu0 0.0
        %1321 = vmatprep.subr.mxu0 0.0
        %1322 = vmatpush2.msra.mxu0 0.0
        %1323 = vmatprep.subr.mxu0 0.0
        %1324 = vmatpush2.msra.mxu0 0.0
        %1325 = vmatprep.subr.mxu0 0.0
        %1326 = vmatpush2.msra.mxu0 0.0
        %1327 = vmatprep.subr.mxu0 0.0
        %1328 = vmatpush2.msra.mxu0 0.0
        %1329 = vmatprep.subr.mxu0 0.0
        %1330 = vmatpush2.msra.mxu0 0.0
        %1331 = vmatprep.subr.mxu0 0.0
        %1332 = vmatpush2.msra.mxu0 0.0
        %1333 = vmatprep.subr.mxu0 0.0
        %1334 = vmatpush2.msra.mxu0 0.0
        %1335 = vmatprep.subr.mxu0 0.0
        %1336 = vmatpush2.msra.mxu0 0.0
        %1337 = vmatprep.mubr.f32.mxu0 0.0
        %1338 = vmatmul.mubr.f32.gmra.mxu0 %v1253
        %v1339 = vpop.f32.mrf.mxu0
        %v1340 = vadd.f32 0.0, %v1339
        %v1341 = vpop.f32.mrf.mxu0
        %1342 = vmatprep.mubr.f32.mxu0 0.0
        %1343 = vmatmul.mubr.f32.gmra.mxu0 %v1254
        %v1344 = vpop.f32.mrf.mxu0
        %v1345 = vadd.f32 0.0, %v1344
        %v1346 = vpop.f32.mrf.mxu0
        %1347 = vmatprep.mubr.f32.mxu0 0.0
        %1348 = vmatmul.mubr.f32.gmra.mxu0 %v1255
        %v1349 = vpop.f32.mrf.mxu0
        %v1350 = vadd.f32 0.0, %v1349
        %v1351 = vpop.f32.mrf.mxu0
        %1352 = vmatprep.mubr.f32.mxu0 0.0
        %1353 = vmatmul.mubr.f32.gmra.mxu0 %v1256
        %v1354 = vpop.f32.mrf.mxu0
        %v1355 = vadd.f32 0.0, %v1354
        %v1356 = vpop.f32.mrf.mxu0
        %1357 = vdwg.mxu0
        %s1358 = scalar_lea.vmem %s3, 128
        %v1359 = vld [vmem:[%s1358] sm:$0xff]
        %v1360 = vld [vmem:[%s1358 + $0x8] sm:$0xff]
        %v1361 = vld [vmem:[%s1358 + $0x10] sm:$0xff]
        %v1362 = vld [vmem:[%s1358 + $0x18] sm:$0xff]
        %v1363 = vld [vmem:[%s1358 + $0x20] sm:$0xff]
        %v1364 = vld [vmem:[%s1358 + $0x28] sm:$0xff]
        %v1365 = vld [vmem:[%s1358 + $0x30] sm:$0xff]
        %v1366 = vld [vmem:[%s1358 + $0x38] sm:$0xff]
        %v1367 = vld [vmem:[%s1358 + $0x40] sm:$0xff]
        %v1368 = vld [vmem:[%s1358 + $0x48] sm:$0xff]
        %v1369 = vld [vmem:[%s1358 + $0x50] sm:$0xff]
        %v1370 = vld [vmem:[%s1358 + $0x58] sm:$0xff]
        %v1371 = vld [vmem:[%s1358 + $0x60] sm:$0xff]
        %v1372 = vld [vmem:[%s1358 + $0x68] sm:$0xff]
        %v1373 = vld [vmem:[%s1358 + $0x70] sm:$0xff]
        %v1374 = vld [vmem:[%s1358 + $0x78] sm:$0xff]
        %1375 = vmatprep.subr.mxu0 0.0
        %1376 = vmatpush1.msra.mxu0 %v1374
        %1377 = vmatprep.subr.mxu0 0.0
        %1378 = vmatpush1.msra.mxu0 %v1373
        %1379 = vmatprep.subr.mxu0 0.0
        %1380 = vmatpush1.msra.mxu0 %v1372
        %1381 = vmatprep.subr.mxu0 0.0
        %1382 = vmatpush1.msra.mxu0 %v1371
        %1383 = vmatprep.subr.mxu0 0.0
        %1384 = vmatpush1.msra.mxu0 %v1370
        %1385 = vmatprep.subr.mxu0 0.0
        %1386 = vmatpush1.msra.mxu0 %v1369
        %1387 = vmatprep.subr.mxu0 0.0
        %1388 = vmatpush1.msra.mxu0 %v1368
        %1389 = vmatprep.subr.mxu0 0.0
        %1390 = vmatpush1.msra.mxu0 %v1367
        %1391 = vmatprep.subr.mxu0 0.0
        %1392 = vmatpush1.msra.mxu0 %v1366
        %1393 = vmatprep.subr.mxu0 0.0
        %1394 = vmatpush1.msra.mxu0 %v1365
        %1395 = vmatprep.subr.mxu0 0.0
        %1396 = vmatpush1.msra.mxu0 %v1364
        %1397 = vmatprep.subr.mxu0 0.0
        %1398 = vmatpush1.msra.mxu0 %v1363
        %1399 = vmatprep.subr.mxu0 0.0
        %1400 = vmatpush1.msra.mxu0 %v1362
        %1401 = vmatprep.subr.mxu0 0.0
        %1402 = vmatpush1.msra.mxu0 %v1361
        %1403 = vmatprep.subr.mxu0 0.0
        %1404 = vmatpush1.msra.mxu0 %v1360
        %1405 = vmatprep.subr.mxu0 0.0
        %1406 = vmatpush1.msra.mxu0 %v1359
        %1407 = vmatprep.subr.mxu0 0.0
        %1408 = vmatpush2.msra.mxu0 0.0
        %1409 = vmatprep.subr.mxu0 0.0
        %1410 = vmatpush2.msra.mxu0 0.0
        %1411 = vmatprep.subr.mxu0 0.0
        %1412 = vmatpush2.msra.mxu0 0.0
        %1413 = vmatprep.subr.mxu0 0.0
        %1414 = vmatpush2.msra.mxu0 0.0
        %1415 = vmatprep.subr.mxu0 0.0
        %1416 = vmatpush2.msra.mxu0 0.0
        %1417 = vmatprep.subr.mxu0 0.0
        %1418 = vmatpush2.msra.mxu0 0.0
        %1419 = vmatprep.subr.mxu0 0.0
        %1420 = vmatpush2.msra.mxu0 0.0
        %1421 = vmatprep.subr.mxu0 0.0
        %1422 = vmatpush2.msra.mxu0 0.0
        %1423 = vmatprep.subr.mxu0 0.0
        %1424 = vmatpush2.msra.mxu0 0.0
        %1425 = vmatprep.subr.mxu0 0.0
        %1426 = vmatpush2.msra.mxu0 0.0
        %1427 = vmatprep.subr.mxu0 0.0
        %1428 = vmatpush2.msra.mxu0 0.0
        %1429 = vmatprep.subr.mxu0 0.0
        %1430 = vmatpush2.msra.mxu0 0.0
        %1431 = vmatprep.subr.mxu0 0.0
        %1432 = vmatpush2.msra.mxu0 0.0
        %1433 = vmatprep.subr.mxu0 0.0
        %1434 = vmatpush2.msra.mxu0 0.0
        %1435 = vmatprep.subr.mxu0 0.0
        %1436 = vmatpush2.msra.mxu0 0.0
        %1437 = vmatprep.subr.mxu0 0.0
        %1438 = vmatpush2.msra.mxu0 0.0
        %1439 = vmatprep.mubr.f32.mxu0 0.0
        %1440 = vmatmul.mubr.f32.gmra.mxu0 %v1253
        %v1441 = vpop.f32.mrf.mxu0
        %v1442 = vadd.f32 0.0, %v1441
        %v1443 = vpop.f32.mrf.mxu0
        %1444 = vmatprep.mubr.f32.mxu0 0.0
        %1445 = vmatmul.mubr.f32.gmra.mxu0 %v1254
        %v1446 = vpop.f32.mrf.mxu0
        %v1447 = vadd.f32 0.0, %v1446
        %v1448 = vpop.f32.mrf.mxu0
        %1449 = vmatprep.mubr.f32.mxu0 0.0
        %1450 = vmatmul.mubr.f32.gmra.mxu0 %v1255
        %v1451 = vpop.f32.mrf.mxu0
        %v1452 = vadd.f32 0.0, %v1451
        %v1453 = vpop.f32.mrf.mxu0
        %1454 = vmatprep.mubr.f32.mxu0 0.0
        %1455 = vmatmul.mubr.f32.gmra.mxu0 %v1256
        %v1456 = vpop.f32.mrf.mxu0
        %v1457 = vadd.f32 0.0, %v1456
        %v1458 = vpop.f32.mrf.mxu0
        %1459 = vdwg.mxu0
        %s1460 = scalar_lea.vmem %s3, 256
        %v1461 = vld [vmem:[%s1460] sm:$0xff]
        %v1462 = vld [vmem:[%s1460 + $0x8] sm:$0xff]
        %v1463 = vld [vmem:[%s1460 + $0x10] sm:$0xff]
        %v1464 = vld [vmem:[%s1460 + $0x18] sm:$0xff]
        %v1465 = vld [vmem:[%s1460 + $0x20] sm:$0xff]
        %v1466 = vld [vmem:[%s1460 + $0x28] sm:$0xff]
        %v1467 = vld [vmem:[%s1460 + $0x30] sm:$0xff]
        %v1468 = vld [vmem:[%s1460 + $0x38] sm:$0xff]
        %v1469 = vld [vmem:[%s1460 + $0x40] sm:$0xff]
        %v1470 = vld [vmem:[%s1460 + $0x48] sm:$0xff]
        %v1471 = vld [vmem:[%s1460 + $0x50] sm:$0xff]
        %v1472 = vld [vmem:[%s1460 + $0x58] sm:$0xff]
        %v1473 = vld [vmem:[%s1460 + $0x60] sm:$0xff]
        %v1474 = vld [vmem:[%s1460 + $0x68] sm:$0xff]
        %v1475 = vld [vmem:[%s1460 + $0x70] sm:$0xff]
        %v1476 = vld [vmem:[%s1460 + $0x78] sm:$0xff]
        %1477 = vmatprep.subr.mxu0 0.0
        %1478 = vmatpush1.msra.mxu0 %v1476
        %1479 = vmatprep.subr.mxu0 0.0
        %1480 = vmatpush1.msra.mxu0 %v1475
        %1481 = vmatprep.subr.mxu0 0.0
        %1482 = vmatpush1.msra.mxu0 %v1474
        %1483 = vmatprep.subr.mxu0 0.0
        %1484 = vmatpush1.msra.mxu0 %v1473
        %1485 = vmatprep.subr.mxu0 0.0
        %1486 = vmatpush1.msra.mxu0 %v1472
        %1487 = vmatprep.subr.mxu0 0.0
        %1488 = vmatpush1.msra.mxu0 %v1471
        %1489 = vmatprep.subr.mxu0 0.0
        %1490 = vmatpush1.msra.mxu0 %v1470
        %1491 = vmatprep.subr.mxu0 0.0
        %1492 = vmatpush1.msra.mxu0 %v1469
        %1493 = vmatprep.subr.mxu0 0.0
        %1494 = vmatpush1.msra.mxu0 %v1468
        %1495 = vmatprep.subr.mxu0 0.0
        %1496 = vmatpush1.msra.mxu0 %v1467
        %1497 = vmatprep.subr.mxu0 0.0
        %1498 = vmatpush1.msra.mxu0 %v1466
        %1499 = vmatprep.subr.mxu0 0.0
        %1500 = vmatpush1.msra.mxu0 %v1465
        %1501 = vmatprep.subr.mxu0 0.0
        %1502 = vmatpush1.msra.mxu0 %v1464
        %1503 = vmatprep.subr.mxu0 0.0
        %1504 = vmatpush1.msra.mxu0 %v1463
        %1505 = vmatprep.subr.mxu0 0.0
        %1506 = vmatpush1.msra.mxu0 %v1462
        %1507 = vmatprep.subr.mxu0 0.0
        %1508 = vmatpush1.msra.mxu0 %v1461
        %1509 = vmatprep.subr.mxu0 0.0
        %1510 = vmatpush2.msra.mxu0 0.0
        %1511 = vmatprep.subr.mxu0 0.0
        %1512 = vmatpush2.msra.mxu0 0.0
        %1513 = vmatprep.subr.mxu0 0.0
        %1514 = vmatpush2.msra.mxu0 0.0
        %1515 = vmatprep.subr.mxu0 0.0
        %1516 = vmatpush2.msra.mxu0 0.0
        %1517 = vmatprep.subr.mxu0 0.0
        %1518 = vmatpush2.msra.mxu0 0.0
        %1519 = vmatprep.subr.mxu0 0.0
        %1520 = vmatpush2.msra.mxu0 0.0
        %1521 = vmatprep.subr.mxu0 0.0
        %1522 = vmatpush2.msra.mxu0 0.0
        %1523 = vmatprep.subr.mxu0 0.0
        %1524 = vmatpush2.msra.mxu0 0.0
        %1525 = vmatprep.subr.mxu0 0.0
        %1526 = vmatpush2.msra.mxu0 0.0
        %1527 = vmatprep.subr.mxu0 0.0
        %1528 = vmatpush2.msra.mxu0 0.0
        %1529 = vmatprep.subr.mxu0 0.0
        %1530 = vmatpush2.msra.mxu0 0.0
        %1531 = vmatprep.subr.mxu0 0.0
        %1532 = vmatpush2.msra.mxu0 0.0
        %1533 = vmatprep.subr.mxu0 0.0
        %1534 = vmatpush2.msra.mxu0 0.0
        %1535 = vmatprep.subr.mxu0 0.0
        %1536 = vmatpush2.msra.mxu0 0.0
        %1537 = vmatprep.subr.mxu0 0.0
        %1538 = vmatpush2.msra.mxu0 0.0
        %1539 = vmatprep.subr.mxu0 0.0
        %1540 = vmatpush2.msra.mxu0 0.0
        %1541 = vmatprep.mubr.f32.mxu0 0.0
        %1542 = vmatmul.mubr.f32.gmra.mxu0 %v1253
        %v1543 = vpop.f32.mrf.mxu0
        %v1544 = vadd.f32 0.0, %v1543
        %v1545 = vpop.f32.mrf.mxu0
        %1546 = vmatprep.mubr.f32.mxu0 0.0
        %1547 = vmatmul.mubr.f32.gmra.mxu0 %v1254
        %v1548 = vpop.f32.mrf.mxu0
        %v1549 = vadd.f32 0.0, %v1548
        %v1550 = vpop.f32.mrf.mxu0
        %1551 = vmatprep.mubr.f32.mxu0 0.0
        %1552 = vmatmul.mubr.f32.gmra.mxu0 %v1255
        %v1553 = vpop.f32.mrf.mxu0
        %v1554 = vadd.f32 0.0, %v1553
        %v1555 = vpop.f32.mrf.mxu0
        %1556 = vmatprep.mubr.f32.mxu0 0.0
        %1557 = vmatmul.mubr.f32.gmra.mxu0 %v1256
        %v1558 = vpop.f32.mrf.mxu0
        %v1559 = vadd.f32 0.0, %v1558
        %v1560 = vpop.f32.mrf.mxu0
        %1561 = vdwg.mxu0
        %v1562 = vmax.f32 %v1340, %v1442
        %v1563 = vmax.f32 %v1345, %v1447
        %v1564 = vmax.f32 %v1350, %v1452
        %v1565 = vmax.f32 %v1355, %v1457
        %v1566 = vmax.f32 %v1562, %v1544
        %v1567 = vmax.f32 %v1563, %v1549
        %v1568 = vmax.f32 %v1564, %v1554
        %v1569 = vmax.f32 %v1565, %v1559
        %v1570 = vld [vmem:[#allocation10] sm:$0xff]
        %v1571 = vld [vmem:[#allocation10 + $0x8] sm:$0xff]
        %v1573 = vsel %vm603, %v1570, 0
        %v1576 = vsel %vm603, %v1571, 0
        %1578 = vmatprep.subr.mxu0 0.0
        %1579 = vmatpush1.msra.mxu0 0.0
        %1580 = vmatprep.subr.mxu0 0.0
        %1581 = vmatpush1.msra.mxu0 0.0
        %1582 = vmatprep.subr.mxu0 0.0
        %1583 = vmatpush1.msra.mxu0 0.0
        %1584 = vmatprep.subr.mxu0 0.0
        %1585 = vmatpush1.msra.mxu0 0.0
        %1586 = vmatprep.subr.mxu0 0.0
        %1587 = vmatpush1.msra.mxu0 0.0
        %1588 = vmatprep.subr.mxu0 0.0
        %1589 = vmatpush1.msra.mxu0 0.0
        %1590 = vmatprep.subr.mxu0 0.0
        %1591 = vmatpush1.msra.mxu0 0.0
        %1592 = vmatprep.subr.mxu0 0.0
        %1593 = vmatpush1.msra.mxu0 0.0
        %1594 = vmatprep.subr.mxu0 0.0
        %1595 = vmatpush1.msra.mxu0 0.0
        %1596 = vmatprep.subr.mxu0 0.0
        %1597 = vmatpush1.msra.mxu0 0.0
        %1598 = vmatprep.subr.mxu0 0.0
        %1599 = vmatpush1.msra.mxu0 0.0
        %1600 = vmatprep.subr.mxu0 0.0
        %1601 = vmatpush1.msra.mxu0 0.0
        %1602 = vmatprep.subr.mxu0 0.0
        %1603 = vmatpush1.msra.mxu0 %v1569
        %1604 = vmatprep.subr.mxu0 0.0
        %1605 = vmatpush1.msra.mxu0 %v1568
        %1606 = vmatprep.subr.mxu0 0.0
        %1607 = vmatpush1.msra.mxu0 %v1567
        %1608 = vmatprep.subr.mxu0 0.0
        %1609 = vmatpush1.msra.mxu0 %v1566
        %1610 = vmatprep.subr.mxu0 0.0
        %1611 = vmatpush2.msra.mxu0 0.0
        %1612 = vmatprep.subr.mxu0 0.0
        %1613 = vmatpush2.msra.mxu0 0.0
        %1614 = vmatprep.subr.mxu0 0.0
        %1615 = vmatpush2.msra.mxu0 0.0
        %1616 = vmatprep.subr.mxu0 0.0
        %1617 = vmatpush2.msra.mxu0 0.0
        %1618 = vmatprep.subr.mxu0 0.0
        %1619 = vmatpush2.msra.mxu0 0.0
        %1620 = vmatprep.subr.mxu0 0.0
        %1621 = vmatpush2.msra.mxu0 0.0
        %1622 = vmatprep.subr.mxu0 0.0
        %1623 = vmatpush2.msra.mxu0 0.0
        %1624 = vmatprep.subr.mxu0 0.0
        %1625 = vmatpush2.msra.mxu0 0.0
        %1626 = vmatprep.subr.mxu0 0.0
        %1627 = vmatpush2.msra.mxu0 0.0
        %1628 = vmatprep.subr.mxu0 0.0
        %1629 = vmatpush2.msra.mxu0 0.0
        %1630 = vmatprep.subr.mxu0 0.0
        %1631 = vmatpush2.msra.mxu0 0.0
        %1632 = vmatprep.subr.mxu0 0.0
        %1633 = vmatpush2.msra.mxu0 0.0
        %1634 = vmatprep.subr.mxu0 0.0
        %1635 = vmatpush2.msra.mxu0 0.0
        %1636 = vmatprep.subr.mxu0 0.0
        %1637 = vmatpush2.msra.mxu0 0.0
        %1638 = vmatprep.subr.mxu0 0.0
        %1639 = vmatpush2.msra.mxu0 0.0
        %1640 = vmatprep.subr.mxu0 0.0
        %1641 = vmatpush2.msra.mxu0 0.0
        %1642 = vmatprep.mubr.f32.mxu0 0.0
        %1643 = vmatmul.mubr.f32.gmra.mxu0 %v1573
        %v1644 = vpop.f32.mrf.mxu0
        %v1645 = vadd.f32 0.0, %v1644
        %v1646 = vpop.f32.mrf.mxu0
        %1647 = vmatprep.mubr.f32.mxu0 0.0
        %1648 = vmatmul.mubr.f32.gmra.mxu0 %v1576
        %v1649 = vpop.f32.mrf.mxu0
        %v1650 = vadd.f32 0.0, %v1649
        %v1651 = vpop.f32.mrf.mxu0
        %1652 = vdwg.mxu0
        %s1653 = scalar_lea.vmem [#allocation10], 16
        %v1654 = vld [vmem:[%s1653] sm:$0xff]
        %v1655 = vld [vmem:[%s1653 + $0x8] sm:$0xff]
        %v1657 = vsel %vm603, %v1654, 0
        %v1660 = vsel %vm603, %v1655, 0
        %1662 = vmatprep.subr.mxu0 0.0
        %1663 = vmatpush1.msra.mxu0 0.0
        %1664 = vmatprep.subr.mxu0 0.0
        %1665 = vmatpush1.msra.mxu0 0.0
        %1666 = vmatprep.subr.mxu0 0.0
        %1667 = vmatpush1.msra.mxu0 0.0
        %1668 = vmatprep.subr.mxu0 0.0
        %1669 = vmatpush1.msra.mxu0 0.0
        %1670 = vmatprep.subr.mxu0 0.0
        %1671 = vmatpush1.msra.mxu0 0.0
        %1672 = vmatprep.subr.mxu0 0.0
        %1673 = vmatpush1.msra.mxu0 0.0
        %1674 = vmatprep.subr.mxu0 0.0
        %1675 = vmatpush1.msra.mxu0 0.0
        %1676 = vmatprep.subr.mxu0 0.0
        %1677 = vmatpush1.msra.mxu0 0.0
        %1678 = vmatprep.subr.mxu0 0.0
        %1679 = vmatpush1.msra.mxu0 0.0
        %1680 = vmatprep.subr.mxu0 0.0
        %1681 = vmatpush1.msra.mxu0 0.0
        %1682 = vmatprep.subr.mxu0 0.0
        %1683 = vmatpush1.msra.mxu0 0.0
        %1684 = vmatprep.subr.mxu0 0.0
        %1685 = vmatpush1.msra.mxu0 0.0
        %1686 = vmatprep.subr.mxu0 0.0
        %1687 = vmatpush1.msra.mxu0 %v1569
        %1688 = vmatprep.subr.mxu0 0.0
        %1689 = vmatpush1.msra.mxu0 %v1568
        %1690 = vmatprep.subr.mxu0 0.0
        %1691 = vmatpush1.msra.mxu0 %v1567
        %1692 = vmatprep.subr.mxu0 0.0
        %1693 = vmatpush1.msra.mxu0 %v1566
        %1694 = vmatprep.subr.mxu0 0.0
        %1695 = vmatpush2.msra.mxu0 0.0
        %1696 = vmatprep.subr.mxu0 0.0
        %1697 = vmatpush2.msra.mxu0 0.0
        %1698 = vmatprep.subr.mxu0 0.0
        %1699 = vmatpush2.msra.mxu0 0.0
        %1700 = vmatprep.subr.mxu0 0.0
        %1701 = vmatpush2.msra.mxu0 0.0
        %1702 = vmatprep.subr.mxu0 0.0
        %1703 = vmatpush2.msra.mxu0 0.0
        %1704 = vmatprep.subr.mxu0 0.0
        %1705 = vmatpush2.msra.mxu0 0.0
        %1706 = vmatprep.subr.mxu0 0.0
        %1707 = vmatpush2.msra.mxu0 0.0
        %1708 = vmatprep.subr.mxu0 0.0
        %1709 = vmatpush2.msra.mxu0 0.0
        %1710 = vmatprep.subr.mxu0 0.0
        %1711 = vmatpush2.msra.mxu0 0.0
        %1712 = vmatprep.subr.mxu0 0.0
        %1713 = vmatpush2.msra.mxu0 0.0
        %1714 = vmatprep.subr.mxu0 0.0
        %1715 = vmatpush2.msra.mxu0 0.0
        %1716 = vmatprep.subr.mxu0 0.0
        %1717 = vmatpush2.msra.mxu0 0.0
        %1718 = vmatprep.subr.mxu0 0.0
        %1719 = vmatpush2.msra.mxu0 0.0
        %1720 = vmatprep.subr.mxu0 0.0
        %1721 = vmatpush2.msra.mxu0 0.0
        %1722 = vmatprep.subr.mxu0 0.0
        %1723 = vmatpush2.msra.mxu0 0.0
        %1724 = vmatprep.subr.mxu0 0.0
        %1725 = vmatpush2.msra.mxu0 0.0
        %1726 = vmatprep.mubr.f32.mxu0 0.0
        %1727 = vmatmul.mubr.f32.gmra.mxu0 %v1657
        %v1728 = vpop.f32.mrf.mxu0
        %v1729 = vadd.f32 0.0, %v1728
        %v1730 = vpop.f32.mrf.mxu0
        %1731 = vmatprep.mubr.f32.mxu0 0.0
        %1732 = vmatmul.mubr.f32.gmra.mxu0 %v1660
        %v1733 = vpop.f32.mrf.mxu0
        %v1734 = vadd.f32 0.0, %v1733
        %v1735 = vpop.f32.mrf.mxu0
        %1736 = vdwg.mxu0
        %s1737 = scalar_lea.vmem [#allocation10], 32
        %v1738 = vld [vmem:[%s1737] sm:$0xff]
        %v1739 = vld [vmem:[%s1737 + $0x8] sm:$0xff]
        %v1741 = vsel %vm603, %v1738, 0
        %v1744 = vsel %vm603, %v1739, 0
        %1746 = vmatprep.subr.mxu0 0.0
        %1747 = vmatpush1.msra.mxu0 0.0
        %1748 = vmatprep.subr.mxu0 0.0
        %1749 = vmatpush1.msra.mxu0 0.0
        %1750 = vmatprep.subr.mxu0 0.0
        %1751 = vmatpush1.msra.mxu0 0.0
        %1752 = vmatprep.subr.mxu0 0.0
        %1753 = vmatpush1.msra.mxu0 0.0
        %1754 = vmatprep.subr.mxu0 0.0
        %1755 = vmatpush1.msra.mxu0 0.0
        %1756 = vmatprep.subr.mxu0 0.0
        %1757 = vmatpush1.msra.mxu0 0.0
        %1758 = vmatprep.subr.mxu0 0.0
        %1759 = vmatpush1.msra.mxu0 0.0
        %1760 = vmatprep.subr.mxu0 0.0
        %1761 = vmatpush1.msra.mxu0 0.0
        %1762 = vmatprep.subr.mxu0 0.0
        %1763 = vmatpush1.msra.mxu0 0.0
        %1764 = vmatprep.subr.mxu0 0.0
        %1765 = vmatpush1.msra.mxu0 0.0
        %1766 = vmatprep.subr.mxu0 0.0
        %1767 = vmatpush1.msra.mxu0 0.0
        %1768 = vmatprep.subr.mxu0 0.0
        %1769 = vmatpush1.msra.mxu0 0.0
        %1770 = vmatprep.subr.mxu0 0.0
        %1771 = vmatpush1.msra.mxu0 %v1569
        %1772 = vmatprep.subr.mxu0 0.0
        %1773 = vmatpush1.msra.mxu0 %v1568
        %1774 = vmatprep.subr.mxu0 0.0
        %1775 = vmatpush1.msra.mxu0 %v1567
        %1776 = vmatprep.subr.mxu0 0.0
        %1777 = vmatpush1.msra.mxu0 %v1566
        %1778 = vmatprep.subr.mxu0 0.0
        %1779 = vmatpush2.msra.mxu0 0.0
        %1780 = vmatprep.subr.mxu0 0.0
        %1781 = vmatpush2.msra.mxu0 0.0
        %1782 = vmatprep.subr.mxu0 0.0
        %1783 = vmatpush2.msra.mxu0 0.0
        %1784 = vmatprep.subr.mxu0 0.0
        %1785 = vmatpush2.msra.mxu0 0.0
        %1786 = vmatprep.subr.mxu0 0.0
        %1787 = vmatpush2.msra.mxu0 0.0
        %1788 = vmatprep.subr.mxu0 0.0
        %1789 = vmatpush2.msra.mxu0 0.0
        %1790 = vmatprep.subr.mxu0 0.0
        %1791 = vmatpush2.msra.mxu0 0.0
        %1792 = vmatprep.subr.mxu0 0.0
        %1793 = vmatpush2.msra.mxu0 0.0
        %1794 = vmatprep.subr.mxu0 0.0
        %1795 = vmatpush2.msra.mxu0 0.0
        %1796 = vmatprep.subr.mxu0 0.0
        %1797 = vmatpush2.msra.mxu0 0.0
        %1798 = vmatprep.subr.mxu0 0.0
        %1799 = vmatpush2.msra.mxu0 0.0
        %1800 = vmatprep.subr.mxu0 0.0
        %1801 = vmatpush2.msra.mxu0 0.0
        %1802 = vmatprep.subr.mxu0 0.0
        %1803 = vmatpush2.msra.mxu0 0.0
        %1804 = vmatprep.subr.mxu0 0.0
        %1805 = vmatpush2.msra.mxu0 0.0
        %1806 = vmatprep.subr.mxu0 0.0
        %1807 = vmatpush2.msra.mxu0 0.0
        %1808 = vmatprep.subr.mxu0 0.0
        %1809 = vmatpush2.msra.mxu0 0.0
        %1810 = vmatprep.mubr.f32.mxu0 0.0
        %1811 = vmatmul.mubr.f32.gmra.mxu0 %v1741
        %v1812 = vpop.f32.mrf.mxu0
        %v1813 = vadd.f32 0.0, %v1812
        %v1814 = vpop.f32.mrf.mxu0
        %1815 = vmatprep.mubr.f32.mxu0 0.0
        %1816 = vmatmul.mubr.f32.gmra.mxu0 %v1744
        %v1817 = vpop.f32.mrf.mxu0
        %v1818 = vadd.f32 0.0, %v1817
        %v1819 = vpop.f32.mrf.mxu0
        %1820 = vdwg.mxu0
        %v1821 = vmax.f32 %v1645, %v1729
        %v1822 = vmax.f32 %v1650, %v1734
        %v1823 = vmax.f32 %v1821, %v1813
        %v1824 = vmax.f32 %v1822, %v1818
        %vm1825 = vcmask 517120
        %1826 = vst.msk [vmem:[#allocation3] sm:$0x3] %vm1825, 0.0
        %1827 = vst.msk [vmem:[#allocation3 + $0x12] sm:$0x3] %vm1825, 0.0
        %vm1828 = vcmask 523264
        %1829 = vst.msk [vmem:[#allocation3 + $0x2] sm:$0xff] %vm1828, %v1823
        %1830 = vst.msk [vmem:[#allocation3 + $0xa] sm:$0xff] %vm1828, %v1824
        %v1831 = vld [vmem:[#allocation3] sm:$0xff]
        %v1832 = vld [vmem:[#allocation3 + $0x8] sm:$0xff]
        %v1833 = vld [vmem:[#allocation12] sm:$0xff]
        %v1834 = vld [vmem:[#allocation12 + $0x8] sm:$0xff]
        %v1835 = vld [vmem:[#allocation12 + $0x10] sm:$0xff]
        %v1836 = vld [vmem:[#allocation12 + $0x18] sm:$0xff]
        %v1837 = vld [vmem:[#allocation12 + $0x20] sm:$0xff]
        %v1838 = vld [vmem:[#allocation12 + $0x28] sm:$0xff]
        %v1839 = vld [vmem:[#allocation12 + $0x30] sm:$0xff]
        %v1840 = vld [vmem:[#allocation12 + $0x38] sm:$0xff]
        %v1841 = vld [vmem:[#allocation3 + $0x1] sm:$0xff]
        %v1842 = vld [vmem:[#allocation3 + $0x9] sm:$0xff]
        %s1843 = scalar_lea.vmem [#allocation12], 64
        %v1844 = vld [vmem:[%s1843] sm:$0xff]
        %v1845 = vld [vmem:[%s1843 + $0x8] sm:$0xff]
        %v1846 = vld [vmem:[%s1843 + $0x10] sm:$0xff]
        %v1847 = vld [vmem:[%s1843 + $0x18] sm:$0xff]
        %v1848 = vld [vmem:[%s1843 + $0x20] sm:$0xff]
        %v1849 = vld [vmem:[%s1843 + $0x28] sm:$0xff]
        %v1850 = vld [vmem:[%s1843 + $0x30] sm:$0xff]
        %v1851 = vld [vmem:[%s1843 + $0x38] sm:$0xff]
        %v1853 = vsel %vm1828, %v1841, 0
        %v1856 = vsel %vm1828, %v1842, 0
        %1858 = vmatprep.subr.mxu0 0.0
        %1859 = vmatpush1.msra.mxu0 0.0
        %1860 = vmatprep.subr.mxu0 0.0
        %1861 = vmatpush1.msra.mxu0 0.0
        %1862 = vmatprep.subr.mxu0 0.0
        %1863 = vmatpush1.msra.mxu0 0.0
        %1864 = vmatprep.subr.mxu0 0.0
        %1865 = vmatpush1.msra.mxu0 0.0
        %1866 = vmatprep.subr.mxu0 0.0
        %1867 = vmatpush1.msra.mxu0 0.0
        %1868 = vmatprep.subr.mxu0 0.0
        %1869 = vmatpush1.msra.mxu0 0.0
        %1870 = vmatprep.subr.mxu0 0.0
        %1871 = vmatpush1.msra.mxu0 0.0
        %1872 = vmatprep.subr.mxu0 0.0
        %1873 = vmatpush1.msra.mxu0 0.0
        %1874 = vmatprep.subr.mxu0 0.0
        %1875 = vmatpush1.msra.mxu0 %v1851
        %1876 = vmatprep.subr.mxu0 0.0
        %1877 = vmatpush1.msra.mxu0 %v1850
        %1878 = vmatprep.subr.mxu0 0.0
        %1879 = vmatpush1.msra.mxu0 %v1849
        %1880 = vmatprep.subr.mxu0 0.0
        %1881 = vmatpush1.msra.mxu0 %v1848
        %1882 = vmatprep.subr.mxu0 0.0
        %1883 = vmatpush1.msra.mxu0 %v1847
        %1884 = vmatprep.subr.mxu0 0.0
        %1885 = vmatpush1.msra.mxu0 %v1846
        %1886 = vmatprep.subr.mxu0 0.0
        %1887 = vmatpush1.msra.mxu0 %v1845
        %1888 = vmatprep.subr.mxu0 0.0
        %1889 = vmatpush1.msra.mxu0 %v1844
        %1890 = vmatprep.subr.mxu0 0.0
        %1891 = vmatpush2.msra.mxu0 0.0
        %1892 = vmatprep.subr.mxu0 0.0
        %1893 = vmatpush2.msra.mxu0 0.0
        %1894 = vmatprep.subr.mxu0 0.0
        %1895 = vmatpush2.msra.mxu0 0.0
        %1896 = vmatprep.subr.mxu0 0.0
        %1897 = vmatpush2.msra.mxu0 0.0
        %1898 = vmatprep.subr.mxu0 0.0
        %1899 = vmatpush2.msra.mxu0 0.0
        %1900 = vmatprep.subr.mxu0 0.0
        %1901 = vmatpush2.msra.mxu0 0.0
        %1902 = vmatprep.subr.mxu0 0.0
        %1903 = vmatpush2.msra.mxu0 0.0
        %1904 = vmatprep.subr.mxu0 0.0
        %1905 = vmatpush2.msra.mxu0 0.0
        %1906 = vmatprep.subr.mxu0 0.0
        %1907 = vmatpush2.msra.mxu0 0.0
        %1908 = vmatprep.subr.mxu0 0.0
        %1909 = vmatpush2.msra.mxu0 0.0
        %1910 = vmatprep.subr.mxu0 0.0
        %1911 = vmatpush2.msra.mxu0 0.0
        %1912 = vmatprep.subr.mxu0 0.0
        %1913 = vmatpush2.msra.mxu0 0.0
        %1914 = vmatprep.subr.mxu0 0.0
        %1915 = vmatpush2.msra.mxu0 0.0
        %1916 = vmatprep.subr.mxu0 0.0
        %1917 = vmatpush2.msra.mxu0 0.0
        %1918 = vmatprep.subr.mxu0 0.0
        %1919 = vmatpush2.msra.mxu0 0.0
        %1920 = vmatprep.subr.mxu0 0.0
        %1921 = vmatpush2.msra.mxu0 0.0
        %1922 = vmatprep.mubr.f32.mxu0 0.0
        %1923 = vmatmul.mubr.f32.gmra.mxu0 %v1853
        %v1924 = vpop.f32.mrf.mxu0
        %v1925 = vadd.f32 0.0, %v1924
        %v1926 = vpop.f32.mrf.mxu0
        %1927 = vmatprep.mubr.f32.mxu0 0.0
        %1928 = vmatmul.mubr.f32.gmra.mxu0 %v1856
        %v1929 = vpop.f32.mrf.mxu0
        %v1930 = vadd.f32 0.0, %v1929
        %v1931 = vpop.f32.mrf.mxu0
        %1932 = vdwg.mxu0
        %v1934 = vsel %vm1828, %v1831, 0
        %v1937 = vsel %vm1828, %v1832, 0
        %1939 = vmatprep.subr.mxu0 0.0
        %1940 = vmatpush1.msra.mxu0 0.0
        %1941 = vmatprep.subr.mxu0 0.0
        %1942 = vmatpush1.msra.mxu0 0.0
        %1943 = vmatprep.subr.mxu0 0.0
        %1944 = vmatpush1.msra.mxu0 0.0
        %1945 = vmatprep.subr.mxu0 0.0
        %1946 = vmatpush1.msra.mxu0 0.0
        %1947 = vmatprep.subr.mxu0 0.0
        %1948 = vmatpush1.msra.mxu0 0.0
        %1949 = vmatprep.subr.mxu0 0.0
        %1950 = vmatpush1.msra.mxu0 0.0
        %1951 = vmatprep.subr.mxu0 0.0
        %1952 = vmatpush1.msra.mxu0 0.0
        %1953 = vmatprep.subr.mxu0 0.0
        %1954 = vmatpush1.msra.mxu0 0.0
        %1955 = vmatprep.subr.mxu0 0.0
        %1956 = vmatpush1.msra.mxu0 %v1840
        %1957 = vmatprep.subr.mxu0 0.0
        %1958 = vmatpush1.msra.mxu0 %v1839
        %1959 = vmatprep.subr.mxu0 0.0
        %1960 = vmatpush1.msra.mxu0 %v1838
        %1961 = vmatprep.subr.mxu0 0.0
        %1962 = vmatpush1.msra.mxu0 %v1837
        %1963 = vmatprep.subr.mxu0 0.0
        %1964 = vmatpush1.msra.mxu0 %v1836
        %1965 = vmatprep.subr.mxu0 0.0
        %1966 = vmatpush1.msra.mxu0 %v1835
        %1967 = vmatprep.subr.mxu0 0.0
        %1968 = vmatpush1.msra.mxu0 %v1834
        %1969 = vmatprep.subr.mxu0 0.0
        %1970 = vmatpush1.msra.mxu0 %v1833
        %1971 = vmatprep.subr.mxu0 0.0
        %1972 = vmatpush2.msra.mxu0 0.0
        %1973 = vmatprep.subr.mxu0 0.0
        %1974 = vmatpush2.msra.mxu0 0.0
        %1975 = vmatprep.subr.mxu0 0.0
        %1976 = vmatpush2.msra.mxu0 0.0
        %1977 = vmatprep.subr.mxu0 0.0
        %1978 = vmatpush2.msra.mxu0 0.0
        %1979 = vmatprep.subr.mxu0 0.0
        %1980 = vmatpush2.msra.mxu0 0.0
        %1981 = vmatprep.subr.mxu0 0.0
        %1982 = vmatpush2.msra.mxu0 0.0
        %1983 = vmatprep.subr.mxu0 0.0
        %1984 = vmatpush2.msra.mxu0 0.0
        %1985 = vmatprep.subr.mxu0 0.0
        %1986 = vmatpush2.msra.mxu0 0.0
        %1987 = vmatprep.subr.mxu0 0.0
        %1988 = vmatpush2.msra.mxu0 0.0
        %1989 = vmatprep.subr.mxu0 0.0
        %1990 = vmatpush2.msra.mxu0 0.0
        %1991 = vmatprep.subr.mxu0 0.0
        %1992 = vmatpush2.msra.mxu0 0.0
        %1993 = vmatprep.subr.mxu0 0.0
        %1994 = vmatpush2.msra.mxu0 0.0
        %1995 = vmatprep.subr.mxu0 0.0
        %1996 = vmatpush2.msra.mxu0 0.0
        %1997 = vmatprep.subr.mxu0 0.0
        %1998 = vmatpush2.msra.mxu0 0.0
        %1999 = vmatprep.subr.mxu0 0.0
        %2000 = vmatpush2.msra.mxu0 0.0
        %2001 = vmatprep.subr.mxu0 0.0
        %2002 = vmatpush2.msra.mxu0 0.0
        %2003 = vmatprep.mubr.f32.mxu0 0.0
        %2004 = vmatmul.mubr.f32.gmra.mxu0 %v1934
        %v2005 = vpop.f32.mrf.mxu0
        %v2006 = vadd.f32 %v1925, %v2005
        %v2007 = vpop.f32.mrf.mxu0
        %2008 = vmatprep.mubr.f32.mxu0 0.0
        %2009 = vmatmul.mubr.f32.gmra.mxu0 %v1937
        %v2010 = vpop.f32.mrf.mxu0
        %v2011 = vadd.f32 %v1930, %v2010
        %v2012 = vpop.f32.mrf.mxu0
        %2013 = vdwg.mxu0
        %v2014 = vld [vmem:[#allocation3 + $0x2] sm:$0xff]
        %v2015 = vld [vmem:[#allocation3 + $0xa] sm:$0xff]
        %s2016 = scalar_lea.vmem [#allocation12], 128
        %v2017 = vld [vmem:[%s2016] sm:$0xff]
        %v2018 = vld [vmem:[%s2016 + $0x8] sm:$0xff]
        %v2019 = vld [vmem:[%s2016 + $0x10] sm:$0xff]
        %v2020 = vld [vmem:[%s2016 + $0x18] sm:$0xff]
        %v2021 = vld [vmem:[%s2016 + $0x20] sm:$0xff]
        %v2022 = vld [vmem:[%s2016 + $0x28] sm:$0xff]
        %v2023 = vld [vmem:[%s2016 + $0x30] sm:$0xff]
        %v2024 = vld [vmem:[%s2016 + $0x38] sm:$0xff]
        %v2026 = vsel %vm1828, %v2014, 0
        %v2029 = vsel %vm1828, %v2015, 0
        %2031 = vmatprep.subr.mxu0 0.0
        %2032 = vmatpush1.msra.mxu0 0.0
        %2033 = vmatprep.subr.mxu0 0.0
        %2034 = vmatpush1.msra.mxu0 0.0
        %2035 = vmatprep.subr.mxu0 0.0
        %2036 = vmatpush1.msra.mxu0 0.0
        %2037 = vmatprep.subr.mxu0 0.0
        %2038 = vmatpush1.msra.mxu0 0.0
        %2039 = vmatprep.subr.mxu0 0.0
        %2040 = vmatpush1.msra.mxu0 0.0
        %2041 = vmatprep.subr.mxu0 0.0
        %2042 = vmatpush1.msra.mxu0 0.0
        %2043 = vmatprep.subr.mxu0 0.0
        %2044 = vmatpush1.msra.mxu0 0.0
        %2045 = vmatprep.subr.mxu0 0.0
        %2046 = vmatpush1.msra.mxu0 0.0
        %2047 = vmatprep.subr.mxu0 0.0
        %2048 = vmatpush1.msra.mxu0 %v2024
        %2049 = vmatprep.subr.mxu0 0.0
        %2050 = vmatpush1.msra.mxu0 %v2023
        %2051 = vmatprep.subr.mxu0 0.0
        %2052 = vmatpush1.msra.mxu0 %v2022
        %2053 = vmatprep.subr.mxu0 0.0
        %2054 = vmatpush1.msra.mxu0 %v2021
        %2055 = vmatprep.subr.mxu0 0.0
        %2056 = vmatpush1.msra.mxu0 %v2020
        %2057 = vmatprep.subr.mxu0 0.0
        %2058 = vmatpush1.msra.mxu0 %v2019
        %2059 = vmatprep.subr.mxu0 0.0
        %2060 = vmatpush1.msra.mxu0 %v2018
        %2061 = vmatprep.subr.mxu0 0.0
        %2062 = vmatpush1.msra.mxu0 %v2017
        %2063 = vmatprep.subr.mxu0 0.0
        %2064 = vmatpush2.msra.mxu0 0.0
        %2065 = vmatprep.subr.mxu0 0.0
        %2066 = vmatpush2.msra.mxu0 0.0
        %2067 = vmatprep.subr.mxu0 0.0
        %2068 = vmatpush2.msra.mxu0 0.0
        %2069 = vmatprep.subr.mxu0 0.0
        %2070 = vmatpush2.msra.mxu0 0.0
        %2071 = vmatprep.subr.mxu0 0.0
        %2072 = vmatpush2.msra.mxu0 0.0
        %2073 = vmatprep.subr.mxu0 0.0
        %2074 = vmatpush2.msra.mxu0 0.0
        %2075 = vmatprep.subr.mxu0 0.0
        %2076 = vmatpush2.msra.mxu0 0.0
        %2077 = vmatprep.subr.mxu0 0.0
        %2078 = vmatpush2.msra.mxu0 0.0
        %2079 = vmatprep.subr.mxu0 0.0
        %2080 = vmatpush2.msra.mxu0 0.0
        %2081 = vmatprep.subr.mxu0 0.0
        %2082 = vmatpush2.msra.mxu0 0.0
        %2083 = vmatprep.subr.mxu0 0.0
        %2084 = vmatpush2.msra.mxu0 0.0
        %2085 = vmatprep.subr.mxu0 0.0
        %2086 = vmatpush2.msra.mxu0 0.0
        %2087 = vmatprep.subr.mxu0 0.0
        %2088 = vmatpush2.msra.mxu0 0.0
        %2089 = vmatprep.subr.mxu0 0.0
        %2090 = vmatpush2.msra.mxu0 0.0
        %2091 = vmatprep.subr.mxu0 0.0
        %2092 = vmatpush2.msra.mxu0 0.0
        %2093 = vmatprep.subr.mxu0 0.0
        %2094 = vmatpush2.msra.mxu0 0.0
        %2095 = vmatprep.mubr.f32.mxu0 0.0
        %2096 = vmatmul.mubr.f32.gmra.mxu0 %v2026
        %v2097 = vpop.f32.mrf.mxu0
        %v2098 = vadd.f32 0.0, %v2097
        %v2099 = vpop.f32.mrf.mxu0
        %2100 = vmatprep.mubr.f32.mxu0 0.0
        %2101 = vmatmul.mubr.f32.gmra.mxu0 %v2029
        %v2102 = vpop.f32.mrf.mxu0
        %v2103 = vadd.f32 0.0, %v2102
        %v2104 = vpop.f32.mrf.mxu0
        %2105 = vdwg.mxu0
        %v2106 = vadd.f32 %v2006, %v2098
        %v2107 = vadd.f32 %v2011, %v2103
        %v2108 = vld [vmem:[#allocation3 + $0x3] sm:$0xff]
        %v2109 = vld [vmem:[#allocation3 + $0xb] sm:$0xff]
        %s2110 = scalar_lea.vmem [#allocation12], 192
        %v2111 = vld [vmem:[%s2110] sm:$0xff]
        %v2112 = vld [vmem:[%s2110 + $0x8] sm:$0xff]
        %v2113 = vld [vmem:[%s2110 + $0x10] sm:$0xff]
        %v2114 = vld [vmem:[%s2110 + $0x18] sm:$0xff]
        %v2115 = vld [vmem:[%s2110 + $0x20] sm:$0xff]
        %v2116 = vld [vmem:[%s2110 + $0x28] sm:$0xff]
        %v2117 = vld [vmem:[%s2110 + $0x30] sm:$0xff]
        %v2118 = vld [vmem:[%s2110 + $0x38] sm:$0xff]
        %v2120 = vsel %vm1828, %v2108, 0
        %v2123 = vsel %vm1828, %v2109, 0
        %2125 = vmatprep.subr.mxu0 0.0
        %2126 = vmatpush1.msra.mxu0 0.0
        %2127 = vmatprep.subr.mxu0 0.0
        %2128 = vmatpush1.msra.mxu0 0.0
        %2129 = vmatprep.subr.mxu0 0.0
        %2130 = vmatpush1.msra.mxu0 0.0
        %2131 = vmatprep.subr.mxu0 0.0
        %2132 = vmatpush1.msra.mxu0 0.0
        %2133 = vmatprep.subr.mxu0 0.0
        %2134 = vmatpush1.msra.mxu0 0.0
        %2135 = vmatprep.subr.mxu0 0.0
        %2136 = vmatpush1.msra.mxu0 0.0
        %2137 = vmatprep.subr.mxu0 0.0
        %2138 = vmatpush1.msra.mxu0 0.0
        %2139 = vmatprep.subr.mxu0 0.0
        %2140 = vmatpush1.msra.mxu0 0.0
        %2141 = vmatprep.subr.mxu0 0.0
        %2142 = vmatpush1.msra.mxu0 %v2118
        %2143 = vmatprep.subr.mxu0 0.0
        %2144 = vmatpush1.msra.mxu0 %v2117
        %2145 = vmatprep.subr.mxu0 0.0
        %2146 = vmatpush1.msra.mxu0 %v2116
        %2147 = vmatprep.subr.mxu0 0.0
        %2148 = vmatpush1.msra.mxu0 %v2115
        %2149 = vmatprep.subr.mxu0 0.0
        %2150 = vmatpush1.msra.mxu0 %v2114
        %2151 = vmatprep.subr.mxu0 0.0
        %2152 = vmatpush1.msra.mxu0 %v2113
        %2153 = vmatprep.subr.mxu0 0.0
        %2154 = vmatpush1.msra.mxu0 %v2112
        %2155 = vmatprep.subr.mxu0 0.0
        %2156 = vmatpush1.msra.mxu0 %v2111
        %2157 = vmatprep.subr.mxu0 0.0
        %2158 = vmatpush2.msra.mxu0 0.0
        %2159 = vmatprep.subr.mxu0 0.0
        %2160 = vmatpush2.msra.mxu0 0.0
        %2161 = vmatprep.subr.mxu0 0.0
        %2162 = vmatpush2.msra.mxu0 0.0
        %2163 = vmatprep.subr.mxu0 0.0
        %2164 = vmatpush2.msra.mxu0 0.0
        %2165 = vmatprep.subr.mxu0 0.0
        %2166 = vmatpush2.msra.mxu0 0.0
        %2167 = vmatprep.subr.mxu0 0.0
        %2168 = vmatpush2.msra.mxu0 0.0
        %2169 = vmatprep.subr.mxu0 0.0
        %2170 = vmatpush2.msra.mxu0 0.0
        %2171 = vmatprep.subr.mxu0 0.0
        %2172 = vmatpush2.msra.mxu0 0.0
        %2173 = vmatprep.subr.mxu0 0.0
        %2174 = vmatpush2.msra.mxu0 0.0
        %2175 = vmatprep.subr.mxu0 0.0
        %2176 = vmatpush2.msra.mxu0 0.0
        %2177 = vmatprep.subr.mxu0 0.0
        %2178 = vmatpush2.msra.mxu0 0.0
        %2179 = vmatprep.subr.mxu0 0.0
        %2180 = vmatpush2.msra.mxu0 0.0
        %2181 = vmatprep.subr.mxu0 0.0
        %2182 = vmatpush2.msra.mxu0 0.0
        %2183 = vmatprep.subr.mxu0 0.0
        %2184 = vmatpush2.msra.mxu0 0.0
        %2185 = vmatprep.subr.mxu0 0.0
        %2186 = vmatpush2.msra.mxu0 0.0
        %2187 = vmatprep.subr.mxu0 0.0
        %2188 = vmatpush2.msra.mxu0 0.0
        %2189 = vmatprep.mubr.f32.mxu0 0.0
        %2190 = vmatmul.mubr.f32.gmra.mxu0 %v2120
        %v2191 = vpop.f32.mrf.mxu0
        %v2192 = vadd.f32 0.0, %v2191
        %v2193 = vpop.f32.mrf.mxu0
        %2194 = vmatprep.mubr.f32.mxu0 0.0
        %2195 = vmatmul.mubr.f32.gmra.mxu0 %v2123
        %v2196 = vpop.f32.mrf.mxu0
        %v2197 = vadd.f32 0.0, %v2196
        %v2198 = vpop.f32.mrf.mxu0
        %2199 = vdwg.mxu0
        %v2200 = vadd.f32 %v2106, %v2192
        %v2201 = vadd.f32 %v2107, %v2197
        %v2202 = vld [vmem:[#allocation3 + $0x4] sm:$0xff]
        %v2203 = vld [vmem:[#allocation3 + $0xc] sm:$0xff]
        %s2204 = scalar_lea.vmem [#allocation12], 256
        %v2205 = vld [vmem:[%s2204] sm:$0xff]
        %v2206 = vld [vmem:[%s2204 + $0x8] sm:$0xff]
        %v2207 = vld [vmem:[%s2204 + $0x10] sm:$0xff]
        %v2208 = vld [vmem:[%s2204 + $0x18] sm:$0xff]
        %v2209 = vld [vmem:[%s2204 + $0x20] sm:$0xff]
        %v2210 = vld [vmem:[%s2204 + $0x28] sm:$0xff]
        %v2211 = vld [vmem:[%s2204 + $0x30] sm:$0xff]
        %v2212 = vld [vmem:[%s2204 + $0x38] sm:$0xff]
        %v2214 = vsel %vm1828, %v2202, 0
        %v2217 = vsel %vm1828, %v2203, 0
        %2219 = vmatprep.subr.mxu0 0.0
        %2220 = vmatpush1.msra.mxu0 0.0
        %2221 = vmatprep.subr.mxu0 0.0
        %2222 = vmatpush1.msra.mxu0 0.0
        %2223 = vmatprep.subr.mxu0 0.0
        %2224 = vmatpush1.msra.mxu0 0.0
        %2225 = vmatprep.subr.mxu0 0.0
        %2226 = vmatpush1.msra.mxu0 0.0
        %2227 = vmatprep.subr.mxu0 0.0
        %2228 = vmatpush1.msra.mxu0 0.0
        %2229 = vmatprep.subr.mxu0 0.0
        %2230 = vmatpush1.msra.mxu0 0.0
        %2231 = vmatprep.subr.mxu0 0.0
        %2232 = vmatpush1.msra.mxu0 0.0
        %2233 = vmatprep.subr.mxu0 0.0
        %2234 = vmatpush1.msra.mxu0 0.0
        %2235 = vmatprep.subr.mxu0 0.0
        %2236 = vmatpush1.msra.mxu0 %v2212
        %2237 = vmatprep.subr.mxu0 0.0
        %2238 = vmatpush1.msra.mxu0 %v2211
        %2239 = vmatprep.subr.mxu0 0.0
        %2240 = vmatpush1.msra.mxu0 %v2210
        %2241 = vmatprep.subr.mxu0 0.0
        %2242 = vmatpush1.msra.mxu0 %v2209
        %2243 = vmatprep.subr.mxu0 0.0
        %2244 = vmatpush1.msra.mxu0 %v2208
        %2245 = vmatprep.subr.mxu0 0.0
        %2246 = vmatpush1.msra.mxu0 %v2207
        %2247 = vmatprep.subr.mxu0 0.0
        %2248 = vmatpush1.msra.mxu0 %v2206
        %2249 = vmatprep.subr.mxu0 0.0
        %2250 = vmatpush1.msra.mxu0 %v2205
        %2251 = vmatprep.subr.mxu0 0.0
        %2252 = vmatpush2.msra.mxu0 0.0
        %2253 = vmatprep.subr.mxu0 0.0
        %2254 = vmatpush2.msra.mxu0 0.0
        %2255 = vmatprep.subr.mxu0 0.0
        %2256 = vmatpush2.msra.mxu0 0.0
        %2257 = vmatprep.subr.mxu0 0.0
        %2258 = vmatpush2.msra.mxu0 0.0
        %2259 = vmatprep.subr.mxu0 0.0
        %2260 = vmatpush2.msra.mxu0 0.0
        %2261 = vmatprep.subr.mxu0 0.0
        %2262 = vmatpush2.msra.mxu0 0.0
        %2263 = vmatprep.subr.mxu0 0.0
        %2264 = vmatpush2.msra.mxu0 0.0
        %2265 = vmatprep.subr.mxu0 0.0
        %2266 = vmatpush2.msra.mxu0 0.0
        %2267 = vmatprep.subr.mxu0 0.0
        %2268 = vmatpush2.msra.mxu0 0.0
        %2269 = vmatprep.subr.mxu0 0.0
        %2270 = vmatpush2.msra.mxu0 0.0
        %2271 = vmatprep.subr.mxu0 0.0
        %2272 = vmatpush2.msra.mxu0 0.0
        %2273 = vmatprep.subr.mxu0 0.0
        %2274 = vmatpush2.msra.mxu0 0.0
        %2275 = vmatprep.subr.mxu0 0.0
        %2276 = vmatpush2.msra.mxu0 0.0
        %2277 = vmatprep.subr.mxu0 0.0
        %2278 = vmatpush2.msra.mxu0 0.0
        %2279 = vmatprep.subr.mxu0 0.0
        %2280 = vmatpush2.msra.mxu0 0.0
        %2281 = vmatprep.subr.mxu0 0.0
        %2282 = vmatpush2.msra.mxu0 0.0
        %2283 = vmatprep.mubr.f32.mxu0 0.0
        %2284 = vmatmul.mubr.f32.gmra.mxu0 %v2214
        %v2285 = vpop.f32.mrf.mxu0
        %v2286 = vadd.f32 0.0, %v2285
        %v2287 = vpop.f32.mrf.mxu0
        %2288 = vmatprep.mubr.f32.mxu0 0.0
        %2289 = vmatmul.mubr.f32.gmra.mxu0 %v2217
        %v2290 = vpop.f32.mrf.mxu0
        %v2291 = vadd.f32 0.0, %v2290
        %v2292 = vpop.f32.mrf.mxu0
        %2293 = vdwg.mxu0
        %v2294 = vadd.f32 %v2200, %v2286
        %v2295 = vadd.f32 %v2201, %v2291
        %v2296 = vld [vmem:[#allocation13] sm:$0x1]
        %v2298 = vlaneseq
        %v2299 = vshrl.u32 %v2298, 7
        %v2300 = vsub.s32 0, %v2299
        %v2301 = vrot.slane %v2296, %v2300
        %v2303 = vadd.f32 %v2294, %v2301
        %v2304 = vadd.f32 %v2295, %v2301
        %v2305 = vmax.f32 %v2303, 0.0
        %v2306 = vmax.f32 %v2304, 0.0
        %v2307 = vld [vmem:[%s7] sm:$0xff]
        %v2308 = vld [vmem:[%s7 + $0x8] sm:$0xff]
        %v2309 = vld [vmem:[%s7 + $0x10] sm:$0xff]
        %v2310 = vld [vmem:[%s7 + $0x18] sm:$0xff]
        %v2311 = vld [vmem:[%s7 + $0x20] sm:$0xff]
        %v2312 = vld [vmem:[%s7 + $0x28] sm:$0xff]
        %v2313 = vld [vmem:[%s7 + $0x30] sm:$0xff]
        %v2314 = vld [vmem:[%s7 + $0x38] sm:$0xff]
        %v2315 = vld [vmem:[%s7 + $0x40] sm:$0xff]
        %v2316 = vld [vmem:[%s7 + $0x48] sm:$0xff]
        %v2317 = vld [vmem:[%s7 + $0x50] sm:$0xff]
        %v2318 = vld [vmem:[%s7 + $0x58] sm:$0xff]
        %v2319 = vld [vmem:[%s7 + $0x60] sm:$0xff]
        %v2320 = vld [vmem:[%s7 + $0x68] sm:$0xff]
        %v2321 = vld [vmem:[%s7 + $0x70] sm:$0xff]
        %v2322 = vld [vmem:[%s7 + $0x78] sm:$0xff]
        %2323 = vmatprep.subr.mxu0 0.0
        %2324 = vmatpush1.msra.mxu0 %v2322
        %2325 = vmatprep.subr.mxu0 0.0
        %2326 = vmatpush1.msra.mxu0 %v2321
        %2327 = vmatprep.subr.mxu0 0.0
        %2328 = vmatpush1.msra.mxu0 %v2320
        %2329 = vmatprep.subr.mxu0 0.0
        %2330 = vmatpush1.msra.mxu0 %v2319
        %2331 = vmatprep.subr.mxu0 0.0
        %2332 = vmatpush1.msra.mxu0 %v2318
        %2333 = vmatprep.subr.mxu0 0.0
        %2334 = vmatpush1.msra.mxu0 %v2317
        %2335 = vmatprep.subr.mxu0 0.0
        %2336 = vmatpush1.msra.mxu0 %v2316
        %2337 = vmatprep.subr.mxu0 0.0
        %2338 = vmatpush1.msra.mxu0 %v2315
        %2339 = vmatprep.subr.mxu0 0.0
        %2340 = vmatpush1.msra.mxu0 %v2314
        %2341 = vmatprep.subr.mxu0 0.0
        %2342 = vmatpush1.msra.mxu0 %v2313
        %2343 = vmatprep.subr.mxu0 0.0
        %2344 = vmatpush1.msra.mxu0 %v2312
        %2345 = vmatprep.subr.mxu0 0.0
        %2346 = vmatpush1.msra.mxu0 %v2311
        %2347 = vmatprep.subr.mxu0 0.0
        %2348 = vmatpush1.msra.mxu0 %v2310
        %2349 = vmatprep.subr.mxu0 0.0
        %2350 = vmatpush1.msra.mxu0 %v2309
        %2351 = vmatprep.subr.mxu0 0.0
        %2352 = vmatpush1.msra.mxu0 %v2308
        %2353 = vmatprep.subr.mxu0 0.0
        %2354 = vmatpush1.msra.mxu0 %v2307
        %2355 = vmatprep.subr.mxu0 0.0
        %2356 = vmatpush2.msra.mxu0 0.0
        %2357 = vmatprep.subr.mxu0 0.0
        %2358 = vmatpush2.msra.mxu0 0.0
        %2359 = vmatprep.subr.mxu0 0.0
        %2360 = vmatpush2.msra.mxu0 0.0
        %2361 = vmatprep.subr.mxu0 0.0
        %2362 = vmatpush2.msra.mxu0 0.0
        %2363 = vmatprep.subr.mxu0 0.0
        %2364 = vmatpush2.msra.mxu0 0.0
        %2365 = vmatprep.subr.mxu0 0.0
        %2366 = vmatpush2.msra.mxu0 0.0
        %2367 = vmatprep.subr.mxu0 0.0
        %2368 = vmatpush2.msra.mxu0 0.0
        %2369 = vmatprep.subr.mxu0 0.0
        %2370 = vmatpush2.msra.mxu0 0.0
        %2371 = vmatprep.subr.mxu0 0.0
        %2372 = vmatpush2.msra.mxu0 0.0
        %2373 = vmatprep.subr.mxu0 0.0
        %2374 = vmatpush2.msra.mxu0 0.0
        %2375 = vmatprep.subr.mxu0 0.0
        %2376 = vmatpush2.msra.mxu0 0.0
        %2377 = vmatprep.subr.mxu0 0.0
        %2378 = vmatpush2.msra.mxu0 0.0
        %2379 = vmatprep.subr.mxu0 0.0
        %2380 = vmatpush2.msra.mxu0 0.0
        %2381 = vmatprep.subr.mxu0 0.0
        %2382 = vmatpush2.msra.mxu0 0.0
        %2383 = vmatprep.subr.mxu0 0.0
        %2384 = vmatpush2.msra.mxu0 0.0
        %2385 = vmatprep.subr.mxu0 0.0
        %2386 = vmatpush2.msra.mxu0 0.0
        %2387 = vmatprep.mubr.f32.mxu0 0.0
        %2388 = vmatmul.mubr.f32.gmra.mxu0 %v2305
        %v2389 = vpop.f32.mrf.mxu0
        %v2390 = vadd.f32 0.0, %v2389
        %v2391 = vpop.f32.mrf.mxu0
        %2392 = vmatprep.mubr.f32.mxu0 0.0
        %2393 = vmatmul.mubr.f32.gmra.mxu0 %v2306
        %v2394 = vpop.f32.mrf.mxu0
        %v2395 = vadd.f32 0.0, %v2394
        %v2396 = vpop.f32.mrf.mxu0
        %2397 = vdwg.mxu0
        %s2398 = scalar_lea.vmem %s7, 128
        %v2399 = vld [vmem:[%s2398] sm:$0xff]
        %v2400 = vld [vmem:[%s2398 + $0x8] sm:$0xff]
        %v2401 = vld [vmem:[%s2398 + $0x10] sm:$0xff]
        %v2402 = vld [vmem:[%s2398 + $0x18] sm:$0xff]
        %v2403 = vld [vmem:[%s2398 + $0x20] sm:$0xff]
        %v2404 = vld [vmem:[%s2398 + $0x28] sm:$0xff]
        %v2405 = vld [vmem:[%s2398 + $0x30] sm:$0xff]
        %v2406 = vld [vmem:[%s2398 + $0x38] sm:$0xff]
        %v2407 = vld [vmem:[%s2398 + $0x40] sm:$0xff]
        %v2408 = vld [vmem:[%s2398 + $0x48] sm:$0xff]
        %v2409 = vld [vmem:[%s2398 + $0x50] sm:$0xff]
        %v2410 = vld [vmem:[%s2398 + $0x58] sm:$0xff]
        %v2411 = vld [vmem:[%s2398 + $0x60] sm:$0xff]
        %v2412 = vld [vmem:[%s2398 + $0x68] sm:$0xff]
        %v2413 = vld [vmem:[%s2398 + $0x70] sm:$0xff]
        %v2414 = vld [vmem:[%s2398 + $0x78] sm:$0xff]
        %2415 = vmatprep.subr.mxu0 0.0
        %2416 = vmatpush1.msra.mxu0 %v2414
        %2417 = vmatprep.subr.mxu0 0.0
        %2418 = vmatpush1.msra.mxu0 %v2413
        %2419 = vmatprep.subr.mxu0 0.0
        %2420 = vmatpush1.msra.mxu0 %v2412
        %2421 = vmatprep.subr.mxu0 0.0
        %2422 = vmatpush1.msra.mxu0 %v2411
        %2423 = vmatprep.subr.mxu0 0.0
        %2424 = vmatpush1.msra.mxu0 %v2410
        %2425 = vmatprep.subr.mxu0 0.0
        %2426 = vmatpush1.msra.mxu0 %v2409
        %2427 = vmatprep.subr.mxu0 0.0
        %2428 = vmatpush1.msra.mxu0 %v2408
        %2429 = vmatprep.subr.mxu0 0.0
        %2430 = vmatpush1.msra.mxu0 %v2407
        %2431 = vmatprep.subr.mxu0 0.0
        %2432 = vmatpush1.msra.mxu0 %v2406
        %2433 = vmatprep.subr.mxu0 0.0
        %2434 = vmatpush1.msra.mxu0 %v2405
        %2435 = vmatprep.subr.mxu0 0.0
        %2436 = vmatpush1.msra.mxu0 %v2404
        %2437 = vmatprep.subr.mxu0 0.0
        %2438 = vmatpush1.msra.mxu0 %v2403
        %2439 = vmatprep.subr.mxu0 0.0
        %2440 = vmatpush1.msra.mxu0 %v2402
        %2441 = vmatprep.subr.mxu0 0.0
        %2442 = vmatpush1.msra.mxu0 %v2401
        %2443 = vmatprep.subr.mxu0 0.0
        %2444 = vmatpush1.msra.mxu0 %v2400
        %2445 = vmatprep.subr.mxu0 0.0
        %2446 = vmatpush1.msra.mxu0 %v2399
        %2447 = vmatprep.subr.mxu0 0.0
        %2448 = vmatpush2.msra.mxu0 0.0
        %2449 = vmatprep.subr.mxu0 0.0
        %2450 = vmatpush2.msra.mxu0 0.0
        %2451 = vmatprep.subr.mxu0 0.0
        %2452 = vmatpush2.msra.mxu0 0.0
        %2453 = vmatprep.subr.mxu0 0.0
        %2454 = vmatpush2.msra.mxu0 0.0
        %2455 = vmatprep.subr.mxu0 0.0
        %2456 = vmatpush2.msra.mxu0 0.0
        %2457 = vmatprep.subr.mxu0 0.0
        %2458 = vmatpush2.msra.mxu0 0.0
        %2459 = vmatprep.subr.mxu0 0.0
        %2460 = vmatpush2.msra.mxu0 0.0
        %2461 = vmatprep.subr.mxu0 0.0
        %2462 = vmatpush2.msra.mxu0 0.0
        %2463 = vmatprep.subr.mxu0 0.0
        %2464 = vmatpush2.msra.mxu0 0.0
        %2465 = vmatprep.subr.mxu0 0.0
        %2466 = vmatpush2.msra.mxu0 0.0
        %2467 = vmatprep.subr.mxu0 0.0
        %2468 = vmatpush2.msra.mxu0 0.0
        %2469 = vmatprep.subr.mxu0 0.0
        %2470 = vmatpush2.msra.mxu0 0.0
        %2471 = vmatprep.subr.mxu0 0.0
        %2472 = vmatpush2.msra.mxu0 0.0
        %2473 = vmatprep.subr.mxu0 0.0
        %2474 = vmatpush2.msra.mxu0 0.0
        %2475 = vmatprep.subr.mxu0 0.0
        %2476 = vmatpush2.msra.mxu0 0.0
        %2477 = vmatprep.subr.mxu0 0.0
        %2478 = vmatpush2.msra.mxu0 0.0
        %2479 = vmatprep.mubr.f32.mxu0 0.0
        %2480 = vmatmul.mubr.f32.gmra.mxu0 %v2305
        %v2481 = vpop.f32.mrf.mxu0
        %v2482 = vadd.f32 0.0, %v2481
        %v2483 = vpop.f32.mrf.mxu0
        %2484 = vmatprep.mubr.f32.mxu0 0.0
        %2485 = vmatmul.mubr.f32.gmra.mxu0 %v2306
        %v2486 = vpop.f32.mrf.mxu0
        %v2487 = vadd.f32 0.0, %v2486
        %v2488 = vpop.f32.mrf.mxu0
        %2489 = vdwg.mxu0
        %s2490 = scalar_lea.vmem %s7, 256
        %v2491 = vld [vmem:[%s2490] sm:$0xff]
        %v2492 = vld [vmem:[%s2490 + $0x8] sm:$0xff]
        %v2493 = vld [vmem:[%s2490 + $0x10] sm:$0xff]
        %v2494 = vld [vmem:[%s2490 + $0x18] sm:$0xff]
        %v2495 = vld [vmem:[%s2490 + $0x20] sm:$0xff]
        %v2496 = vld [vmem:[%s2490 + $0x28] sm:$0xff]
        %v2497 = vld [vmem:[%s2490 + $0x30] sm:$0xff]
        %v2498 = vld [vmem:[%s2490 + $0x38] sm:$0xff]
        %v2499 = vld [vmem:[%s2490 + $0x40] sm:$0xff]
        %v2500 = vld [vmem:[%s2490 + $0x48] sm:$0xff]
        %v2501 = vld [vmem:[%s2490 + $0x50] sm:$0xff]
        %v2502 = vld [vmem:[%s2490 + $0x58] sm:$0xff]
        %v2503 = vld [vmem:[%s2490 + $0x60] sm:$0xff]
        %v2504 = vld [vmem:[%s2490 + $0x68] sm:$0xff]
        %v2505 = vld [vmem:[%s2490 + $0x70] sm:$0xff]
        %v2506 = vld [vmem:[%s2490 + $0x78] sm:$0xff]
        %2507 = vmatprep.subr.mxu0 0.0
        %2508 = vmatpush1.msra.mxu0 %v2506
        %2509 = vmatprep.subr.mxu0 0.0
        %2510 = vmatpush1.msra.mxu0 %v2505
        %2511 = vmatprep.subr.mxu0 0.0
        %2512 = vmatpush1.msra.mxu0 %v2504
        %2513 = vmatprep.subr.mxu0 0.0
        %2514 = vmatpush1.msra.mxu0 %v2503
        %2515 = vmatprep.subr.mxu0 0.0
        %2516 = vmatpush1.msra.mxu0 %v2502
        %2517 = vmatprep.subr.mxu0 0.0
        %2518 = vmatpush1.msra.mxu0 %v2501
        %2519 = vmatprep.subr.mxu0 0.0
        %2520 = vmatpush1.msra.mxu0 %v2500
        %2521 = vmatprep.subr.mxu0 0.0
        %2522 = vmatpush1.msra.mxu0 %v2499
        %2523 = vmatprep.subr.mxu0 0.0
        %2524 = vmatpush1.msra.mxu0 %v2498
        %2525 = vmatprep.subr.mxu0 0.0
        %2526 = vmatpush1.msra.mxu0 %v2497
        %2527 = vmatprep.subr.mxu0 0.0
        %2528 = vmatpush1.msra.mxu0 %v2496
        %2529 = vmatprep.subr.mxu0 0.0
        %2530 = vmatpush1.msra.mxu0 %v2495
        %2531 = vmatprep.subr.mxu0 0.0
        %2532 = vmatpush1.msra.mxu0 %v2494
        %2533 = vmatprep.subr.mxu0 0.0
        %2534 = vmatpush1.msra.mxu0 %v2493
        %2535 = vmatprep.subr.mxu0 0.0
        %2536 = vmatpush1.msra.mxu0 %v2492
        %2537 = vmatprep.subr.mxu0 0.0
        %2538 = vmatpush1.msra.mxu0 %v2491
        %2539 = vmatprep.subr.mxu0 0.0
        %2540 = vmatpush2.msra.mxu0 0.0
        %2541 = vmatprep.subr.mxu0 0.0
        %2542 = vmatpush2.msra.mxu0 0.0
        %2543 = vmatprep.subr.mxu0 0.0
        %2544 = vmatpush2.msra.mxu0 0.0
        %2545 = vmatprep.subr.mxu0 0.0
        %2546 = vmatpush2.msra.mxu0 0.0
        %2547 = vmatprep.subr.mxu0 0.0
        %2548 = vmatpush2.msra.mxu0 0.0
        %2549 = vmatprep.subr.mxu0 0.0
        %2550 = vmatpush2.msra.mxu0 0.0
        %2551 = vmatprep.subr.mxu0 0.0
        %2552 = vmatpush2.msra.mxu0 0.0
        %2553 = vmatprep.subr.mxu0 0.0
        %2554 = vmatpush2.msra.mxu0 0.0
        %2555 = vmatprep.subr.mxu0 0.0
        %2556 = vmatpush2.msra.mxu0 0.0
        %2557 = vmatprep.subr.mxu0 0.0
        %2558 = vmatpush2.msra.mxu0 0.0
        %2559 = vmatprep.subr.mxu0 0.0
        %2560 = vmatpush2.msra.mxu0 0.0
        %2561 = vmatprep.subr.mxu0 0.0
        %2562 = vmatpush2.msra.mxu0 0.0
        %2563 = vmatprep.subr.mxu0 0.0
        %2564 = vmatpush2.msra.mxu0 0.0
        %2565 = vmatprep.subr.mxu0 0.0
        %2566 = vmatpush2.msra.mxu0 0.0
        %2567 = vmatprep.subr.mxu0 0.0
        %2568 = vmatpush2.msra.mxu0 0.0
        %2569 = vmatprep.subr.mxu0 0.0
        %2570 = vmatpush2.msra.mxu0 0.0
        %2571 = vmatprep.mubr.f32.mxu0 0.0
        %2572 = vmatmul.mubr.f32.gmra.mxu0 %v2305
        %v2573 = vpop.f32.mrf.mxu0
        %v2574 = vadd.f32 0.0, %v2573
        %v2575 = vpop.f32.mrf.mxu0
        %2576 = vmatprep.mubr.f32.mxu0 0.0
        %2577 = vmatmul.mubr.f32.gmra.mxu0 %v2306
        %v2578 = vpop.f32.mrf.mxu0
        %v2579 = vadd.f32 0.0, %v2578
        %v2580 = vpop.f32.mrf.mxu0
        %2581 = vdwg.mxu0
        %v2582 = vmax.f32 %v2390, %v2482
        %v2583 = vmax.f32 %v2395, %v2487
        %v2584 = vmax.f32 %v2582, %v2574
        %v2585 = vmax.f32 %v2583, %v2579
        %v2586 = vld [vmem:[#allocation15] sm:$0xff]
        %vm2587 = vcmask 130048
        %v2589 = vsel %vm2587, %v2586, 0
        %2591 = vmatprep.subr.mxu0 0.0
        %2592 = vmatpush1.msra.mxu0 0.0
        %2593 = vmatprep.subr.mxu0 0.0
        %2594 = vmatpush1.msra.mxu0 0.0
        %2595 = vmatprep.subr.mxu0 0.0
        %2596 = vmatpush1.msra.mxu0 0.0
        %2597 = vmatprep.subr.mxu0 0.0
        %2598 = vmatpush1.msra.mxu0 0.0
        %2599 = vmatprep.subr.mxu0 0.0
        %2600 = vmatpush1.msra.mxu0 0.0
        %2601 = vmatprep.subr.mxu0 0.0
        %2602 = vmatpush1.msra.mxu0 0.0
        %2603 = vmatprep.subr.mxu0 0.0
        %2604 = vmatpush1.msra.mxu0 0.0
        %2605 = vmatprep.subr.mxu0 0.0
        %2606 = vmatpush1.msra.mxu0 0.0
        %2607 = vmatprep.subr.mxu0 0.0
        %2608 = vmatpush1.msra.mxu0 0.0
        %2609 = vmatprep.subr.mxu0 0.0
        %2610 = vmatpush1.msra.mxu0 0.0
        %2611 = vmatprep.subr.mxu0 0.0
        %2612 = vmatpush1.msra.mxu0 0.0
        %2613 = vmatprep.subr.mxu0 0.0
        %2614 = vmatpush1.msra.mxu0 0.0
        %2615 = vmatprep.subr.mxu0 0.0
        %2616 = vmatpush1.msra.mxu0 0.0
        %2617 = vmatprep.subr.mxu0 0.0
        %2618 = vmatpush1.msra.mxu0 0.0
        %2619 = vmatprep.subr.mxu0 0.0
        %2620 = vmatpush1.msra.mxu0 %v2585
        %2621 = vmatprep.subr.mxu0 0.0
        %2622 = vmatpush1.msra.mxu0 %v2584
        %2623 = vmatprep.subr.mxu0 0.0
        %2624 = vmatpush2.msra.mxu0 0.0
        %2625 = vmatprep.subr.mxu0 0.0
        %2626 = vmatpush2.msra.mxu0 0.0
        %2627 = vmatprep.subr.mxu0 0.0
        %2628 = vmatpush2.msra.mxu0 0.0
        %2629 = vmatprep.subr.mxu0 0.0
        %2630 = vmatpush2.msra.mxu0 0.0
        %2631 = vmatprep.subr.mxu0 0.0
        %2632 = vmatpush2.msra.mxu0 0.0
        %2633 = vmatprep.subr.mxu0 0.0
        %2634 = vmatpush2.msra.mxu0 0.0
        %2635 = vmatprep.subr.mxu0 0.0
        %2636 = vmatpush2.msra.mxu0 0.0
        %2637 = vmatprep.subr.mxu0 0.0
        %2638 = vmatpush2.msra.mxu0 0.0
        %2639 = vmatprep.subr.mxu0 0.0
        %2640 = vmatpush2.msra.mxu0 0.0
        %2641 = vmatprep.subr.mxu0 0.0
        %2642 = vmatpush2.msra.mxu0 0.0
        %2643 = vmatprep.subr.mxu0 0.0
        %2644 = vmatpush2.msra.mxu0 0.0
        %2645 = vmatprep.subr.mxu0 0.0
        %2646 = vmatpush2.msra.mxu0 0.0
        %2647 = vmatprep.subr.mxu0 0.0
        %2648 = vmatpush2.msra.mxu0 0.0
        %2649 = vmatprep.subr.mxu0 0.0
        %2650 = vmatpush2.msra.mxu0 0.0
        %2651 = vmatprep.subr.mxu0 0.0
        %2652 = vmatpush2.msra.mxu0 0.0
        %2653 = vmatprep.subr.mxu0 0.0
        %2654 = vmatpush2.msra.mxu0 0.0
        %2655 = vmatprep.mubr.f32.mxu0 0.0
        %2656 = vmatmul.mubr.f32.gmra.mxu0 %v2589
        %v2657 = vpop.f32.mrf.mxu0
        %v2658 = vadd.f32 0.0, %v2657
        %v2659 = vpop.f32.mrf.mxu0
        %2660 = vdwg.mxu0
        %s2661 = scalar_lea.vmem [#allocation15], 8
        %v2662 = vld [vmem:[%s2661] sm:$0xff]
        %v2664 = vsel %vm2587, %v2662, 0
        %2666 = vmatprep.subr.mxu0 0.0
        %2667 = vmatpush1.msra.mxu0 0.0
        %2668 = vmatprep.subr.mxu0 0.0
        %2669 = vmatpush1.msra.mxu0 0.0
        %2670 = vmatprep.subr.mxu0 0.0
        %2671 = vmatpush1.msra.mxu0 0.0
        %2672 = vmatprep.subr.mxu0 0.0
        %2673 = vmatpush1.msra.mxu0 0.0
        %2674 = vmatprep.subr.mxu0 0.0
        %2675 = vmatpush1.msra.mxu0 0.0
        %2676 = vmatprep.subr.mxu0 0.0
        %2677 = vmatpush1.msra.mxu0 0.0
        %2678 = vmatprep.subr.mxu0 0.0
        %2679 = vmatpush1.msra.mxu0 0.0
        %2680 = vmatprep.subr.mxu0 0.0
        %2681 = vmatpush1.msra.mxu0 0.0
        %2682 = vmatprep.subr.mxu0 0.0
        %2683 = vmatpush1.msra.mxu0 0.0
        %2684 = vmatprep.subr.mxu0 0.0
        %2685 = vmatpush1.msra.mxu0 0.0
        %2686 = vmatprep.subr.mxu0 0.0
        %2687 = vmatpush1.msra.mxu0 0.0
        %2688 = vmatprep.subr.mxu0 0.0
        %2689 = vmatpush1.msra.mxu0 0.0
        %2690 = vmatprep.subr.mxu0 0.0
        %2691 = vmatpush1.msra.mxu0 0.0
        %2692 = vmatprep.subr.mxu0 0.0
        %2693 = vmatpush1.msra.mxu0 0.0
        %2694 = vmatprep.subr.mxu0 0.0
        %2695 = vmatpush1.msra.mxu0 %v2585
        %2696 = vmatprep.subr.mxu0 0.0
        %2697 = vmatpush1.msra.mxu0 %v2584
        %2698 = vmatprep.subr.mxu0 0.0
        %2699 = vmatpush2.msra.mxu0 0.0
        %2700 = vmatprep.subr.mxu0 0.0
        %2701 = vmatpush2.msra.mxu0 0.0
        %2702 = vmatprep.subr.mxu0 0.0
        %2703 = vmatpush2.msra.mxu0 0.0
        %2704 = vmatprep.subr.mxu0 0.0
        %2705 = vmatpush2.msra.mxu0 0.0
        %2706 = vmatprep.subr.mxu0 0.0
        %2707 = vmatpush2.msra.mxu0 0.0
        %2708 = vmatprep.subr.mxu0 0.0
        %2709 = vmatpush2.msra.mxu0 0.0
        %2710 = vmatprep.subr.mxu0 0.0
        %2711 = vmatpush2.msra.mxu0 0.0
        %2712 = vmatprep.subr.mxu0 0.0
        %2713 = vmatpush2.msra.mxu0 0.0
        %2714 = vmatprep.subr.mxu0 0.0
        %2715 = vmatpush2.msra.mxu0 0.0
        %2716 = vmatprep.subr.mxu0 0.0
        %2717 = vmatpush2.msra.mxu0 0.0
        %2718 = vmatprep.subr.mxu0 0.0
        %2719 = vmatpush2.msra.mxu0 0.0
        %2720 = vmatprep.subr.mxu0 0.0
        %2721 = vmatpush2.msra.mxu0 0.0
        %2722 = vmatprep.subr.mxu0 0.0
        %2723 = vmatpush2.msra.mxu0 0.0
        %2724 = vmatprep.subr.mxu0 0.0
        %2725 = vmatpush2.msra.mxu0 0.0
        %2726 = vmatprep.subr.mxu0 0.0
        %2727 = vmatpush2.msra.mxu0 0.0
        %2728 = vmatprep.subr.mxu0 0.0
        %2729 = vmatpush2.msra.mxu0 0.0
        %2730 = vmatprep.mubr.f32.mxu0 0.0
        %2731 = vmatmul.mubr.f32.gmra.mxu0 %v2664
        %v2732 = vpop.f32.mrf.mxu0
        %v2733 = vadd.f32 0.0, %v2732
        %v2734 = vpop.f32.mrf.mxu0
        %2735 = vdwg.mxu0
        %s2736 = scalar_lea.vmem [#allocation15], 16
        %v2737 = vld [vmem:[%s2736] sm:$0xff]
        %v2739 = vsel %vm2587, %v2737, 0
        %2741 = vmatprep.subr.mxu0 0.0
        %2742 = vmatpush1.msra.mxu0 0.0
        %2743 = vmatprep.subr.mxu0 0.0
        %2744 = vmatpush1.msra.mxu0 0.0
        %2745 = vmatprep.subr.mxu0 0.0
        %2746 = vmatpush1.msra.mxu0 0.0
        %2747 = vmatprep.subr.mxu0 0.0
        %2748 = vmatpush1.msra.mxu0 0.0
        %2749 = vmatprep.subr.mxu0 0.0
        %2750 = vmatpush1.msra.mxu0 0.0
        %2751 = vmatprep.subr.mxu0 0.0
        %2752 = vmatpush1.msra.mxu0 0.0
        %2753 = vmatprep.subr.mxu0 0.0
        %2754 = vmatpush1.msra.mxu0 0.0
        %2755 = vmatprep.subr.mxu0 0.0
        %2756 = vmatpush1.msra.mxu0 0.0
        %2757 = vmatprep.subr.mxu0 0.0
        %2758 = vmatpush1.msra.mxu0 0.0
        %2759 = vmatprep.subr.mxu0 0.0
        %2760 = vmatpush1.msra.mxu0 0.0
        %2761 = vmatprep.subr.mxu0 0.0
        %2762 = vmatpush1.msra.mxu0 0.0
        %2763 = vmatprep.subr.mxu0 0.0
        %2764 = vmatpush1.msra.mxu0 0.0
        %2765 = vmatprep.subr.mxu0 0.0
        %2766 = vmatpush1.msra.mxu0 0.0
        %2767 = vmatprep.subr.mxu0 0.0
        %2768 = vmatpush1.msra.mxu0 0.0
        %2769 = vmatprep.subr.mxu0 0.0
        %2770 = vmatpush1.msra.mxu0 %v2585
        %2771 = vmatprep.subr.mxu0 0.0
        %2772 = vmatpush1.msra.mxu0 %v2584
        %2773 = vmatprep.subr.mxu0 0.0
        %2774 = vmatpush2.msra.mxu0 0.0
        %2775 = vmatprep.subr.mxu0 0.0
        %2776 = vmatpush2.msra.mxu0 0.0
        %2777 = vmatprep.subr.mxu0 0.0
        %2778 = vmatpush2.msra.mxu0 0.0
        %2779 = vmatprep.subr.mxu0 0.0
        %2780 = vmatpush2.msra.mxu0 0.0
        %2781 = vmatprep.subr.mxu0 0.0
        %2782 = vmatpush2.msra.mxu0 0.0
        %2783 = vmatprep.subr.mxu0 0.0
        %2784 = vmatpush2.msra.mxu0 0.0
        %2785 = vmatprep.subr.mxu0 0.0
        %2786 = vmatpush2.msra.mxu0 0.0
        %2787 = vmatprep.subr.mxu0 0.0
        %2788 = vmatpush2.msra.mxu0 0.0
        %2789 = vmatprep.subr.mxu0 0.0
        %2790 = vmatpush2.msra.mxu0 0.0
        %2791 = vmatprep.subr.mxu0 0.0
        %2792 = vmatpush2.msra.mxu0 0.0
        %2793 = vmatprep.subr.mxu0 0.0
        %2794 = vmatpush2.msra.mxu0 0.0
        %2795 = vmatprep.subr.mxu0 0.0
        %2796 = vmatpush2.msra.mxu0 0.0
        %2797 = vmatprep.subr.mxu0 0.0
        %2798 = vmatpush2.msra.mxu0 0.0
        %2799 = vmatprep.subr.mxu0 0.0
        %2800 = vmatpush2.msra.mxu0 0.0
        %2801 = vmatprep.subr.mxu0 0.0
        %2802 = vmatpush2.msra.mxu0 0.0
        %2803 = vmatprep.subr.mxu0 0.0
        %2804 = vmatpush2.msra.mxu0 0.0
        %2805 = vmatprep.mubr.f32.mxu0 0.0
        %2806 = vmatmul.mubr.f32.gmra.mxu0 %v2739
        %v2807 = vpop.f32.mrf.mxu0
        %v2808 = vadd.f32 0.0, %v2807
        %v2809 = vpop.f32.mrf.mxu0
        %2810 = vdwg.mxu0
        %v2811 = vmax.f32 %v2658, %v2733
        %v2812 = vmax.f32 %v2811, %v2808
        %2813 = vst.msk [vmem:[#allocation4] sm:$0x3] %vm1825, 0.0
        %2814 = vst.msk [vmem:[#allocation4 + $0xa] sm:$0x3] %vm1825, 0.0
        %2815 = vst.msk [vmem:[#allocation4 + $0x2] sm:$0xff] %vm1828, %v2812
        %v2816 = vld [vmem:[#allocation4] sm:$0xff]
        %v2817 = vld [vmem:[#allocation16] sm:$0xff]
        %v2818 = vld [vmem:[#allocation16 + $0x8] sm:$0xff]
        %v2819 = vld [vmem:[#allocation16 + $0x10] sm:$0xff]
        %v2820 = vld [vmem:[#allocation16 + $0x18] sm:$0xff]
        %v2821 = vld [vmem:[#allocation16 + $0x20] sm:$0xff]
        %v2822 = vld [vmem:[#allocation16 + $0x28] sm:$0xff]
        %v2823 = vld [vmem:[#allocation16 + $0x30] sm:$0xff]
        %v2824 = vld [vmem:[#allocation16 + $0x38] sm:$0xff]
        %v2825 = vld [vmem:[#allocation4 + $0x1] sm:$0xff]
        %s2826 = scalar_lea.vmem [#allocation16], 64
        %v2827 = vld [vmem:[%s2826] sm:$0xff]
        %v2828 = vld [vmem:[%s2826 + $0x8] sm:$0xff]
        %v2829 = vld [vmem:[%s2826 + $0x10] sm:$0xff]
        %v2830 = vld [vmem:[%s2826 + $0x18] sm:$0xff]
        %v2831 = vld [vmem:[%s2826 + $0x20] sm:$0xff]
        %v2832 = vld [vmem:[%s2826 + $0x28] sm:$0xff]
        %v2833 = vld [vmem:[%s2826 + $0x30] sm:$0xff]
        %v2834 = vld [vmem:[%s2826 + $0x38] sm:$0xff]
        %v2836 = vsel %vm1828, %v2825, 0
        %2838 = vmatprep.subr.mxu0 0.0
        %2839 = vmatpush1.msra.mxu0 0.0
        %2840 = vmatprep.subr.mxu0 0.0
        %2841 = vmatpush1.msra.mxu0 0.0
        %2842 = vmatprep.subr.mxu0 0.0
        %2843 = vmatpush1.msra.mxu0 0.0
        %2844 = vmatprep.subr.mxu0 0.0
        %2845 = vmatpush1.msra.mxu0 0.0
        %2846 = vmatprep.subr.mxu0 0.0
        %2847 = vmatpush1.msra.mxu0 0.0
        %2848 = vmatprep.subr.mxu0 0.0
        %2849 = vmatpush1.msra.mxu0 0.0
        %2850 = vmatprep.subr.mxu0 0.0
        %2851 = vmatpush1.msra.mxu0 0.0
        %2852 = vmatprep.subr.mxu0 0.0
        %2853 = vmatpush1.msra.mxu0 0.0
        %2854 = vmatprep.subr.mxu0 0.0
        %2855 = vmatpush1.msra.mxu0 %v2834
        %2856 = vmatprep.subr.mxu0 0.0
        %2857 = vmatpush1.msra.mxu0 %v2833
        %2858 = vmatprep.subr.mxu0 0.0
        %2859 = vmatpush1.msra.mxu0 %v2832
        %2860 = vmatprep.subr.mxu0 0.0
        %2861 = vmatpush1.msra.mxu0 %v2831
        %2862 = vmatprep.subr.mxu0 0.0
        %2863 = vmatpush1.msra.mxu0 %v2830
        %2864 = vmatprep.subr.mxu0 0.0
        %2865 = vmatpush1.msra.mxu0 %v2829
        %2866 = vmatprep.subr.mxu0 0.0
        %2867 = vmatpush1.msra.mxu0 %v2828
        %2868 = vmatprep.subr.mxu0 0.0
        %2869 = vmatpush1.msra.mxu0 %v2827
        %2870 = vmatprep.subr.mxu0 0.0
        %2871 = vmatpush2.msra.mxu0 0.0
        %2872 = vmatprep.subr.mxu0 0.0
        %2873 = vmatpush2.msra.mxu0 0.0
        %2874 = vmatprep.subr.mxu0 0.0
        %2875 = vmatpush2.msra.mxu0 0.0
        %2876 = vmatprep.subr.mxu0 0.0
        %2877 = vmatpush2.msra.mxu0 0.0
        %2878 = vmatprep.subr.mxu0 0.0
        %2879 = vmatpush2.msra.mxu0 0.0
        %2880 = vmatprep.subr.mxu0 0.0
        %2881 = vmatpush2.msra.mxu0 0.0
        %2882 = vmatprep.subr.mxu0 0.0
        %2883 = vmatpush2.msra.mxu0 0.0
        %2884 = vmatprep.subr.mxu0 0.0
        %2885 = vmatpush2.msra.mxu0 0.0
        %2886 = vmatprep.subr.mxu0 0.0
        %2887 = vmatpush2.msra.mxu0 0.0
        %2888 = vmatprep.subr.mxu0 0.0
        %2889 = vmatpush2.msra.mxu0 0.0
        %2890 = vmatprep.subr.mxu0 0.0
        %2891 = vmatpush2.msra.mxu0 0.0
        %2892 = vmatprep.subr.mxu0 0.0
        %2893 = vmatpush2.msra.mxu0 0.0
        %2894 = vmatprep.subr.mxu0 0.0
        %2895 = vmatpush2.msra.mxu0 0.0
        %2896 = vmatprep.subr.mxu0 0.0
        %2897 = vmatpush2.msra.mxu0 0.0
        %2898 = vmatprep.subr.mxu0 0.0
        %2899 = vmatpush2.msra.mxu0 0.0
        %2900 = vmatprep.subr.mxu0 0.0
        %2901 = vmatpush2.msra.mxu0 0.0
        %2902 = vmatprep.mubr.f32.mxu0 0.0
        %2903 = vmatmul.mubr.f32.gmra.mxu0 %v2836
        %v2904 = vpop.f32.mrf.mxu0
        %v2905 = vadd.f32 0.0, %v2904
        %v2906 = vpop.f32.mrf.mxu0
        %2907 = vdwg.mxu0
        %v2909 = vsel %vm1828, %v2816, 0
        %2911 = vmatprep.subr.mxu0 0.0
        %2912 = vmatpush1.msra.mxu0 0.0
        %2913 = vmatprep.subr.mxu0 0.0
        %2914 = vmatpush1.msra.mxu0 0.0
        %2915 = vmatprep.subr.mxu0 0.0
        %2916 = vmatpush1.msra.mxu0 0.0
        %2917 = vmatprep.subr.mxu0 0.0
        %2918 = vmatpush1.msra.mxu0 0.0
        %2919 = vmatprep.subr.mxu0 0.0
        %2920 = vmatpush1.msra.mxu0 0.0
        %2921 = vmatprep.subr.mxu0 0.0
        %2922 = vmatpush1.msra.mxu0 0.0
        %2923 = vmatprep.subr.mxu0 0.0
        %2924 = vmatpush1.msra.mxu0 0.0
        %2925 = vmatprep.subr.mxu0 0.0
        %2926 = vmatpush1.msra.mxu0 0.0
        %2927 = vmatprep.subr.mxu0 0.0
        %2928 = vmatpush1.msra.mxu0 %v2824
        %2929 = vmatprep.subr.mxu0 0.0
        %2930 = vmatpush1.msra.mxu0 %v2823
        %2931 = vmatprep.subr.mxu0 0.0
        %2932 = vmatpush1.msra.mxu0 %v2822
        %2933 = vmatprep.subr.mxu0 0.0
        %2934 = vmatpush1.msra.mxu0 %v2821
        %2935 = vmatprep.subr.mxu0 0.0
        %2936 = vmatpush1.msra.mxu0 %v2820
        %2937 = vmatprep.subr.mxu0 0.0
        %2938 = vmatpush1.msra.mxu0 %v2819
        %2939 = vmatprep.subr.mxu0 0.0
        %2940 = vmatpush1.msra.mxu0 %v2818
        %2941 = vmatprep.subr.mxu0 0.0
        %2942 = vmatpush1.msra.mxu0 %v2817
        %2943 = vmatprep.subr.mxu0 0.0
        %2944 = vmatpush2.msra.mxu0 0.0
        %2945 = vmatprep.subr.mxu0 0.0
        %2946 = vmatpush2.msra.mxu0 0.0
        %2947 = vmatprep.subr.mxu0 0.0
        %2948 = vmatpush2.msra.mxu0 0.0
        %2949 = vmatprep.subr.mxu0 0.0
        %2950 = vmatpush2.msra.mxu0 0.0
        %2951 = vmatprep.subr.mxu0 0.0
        %2952 = vmatpush2.msra.mxu0 0.0
        %2953 = vmatprep.subr.mxu0 0.0
        %2954 = vmatpush2.msra.mxu0 0.0
        %2955 = vmatprep.subr.mxu0 0.0
        %2956 = vmatpush2.msra.mxu0 0.0
        %2957 = vmatprep.subr.mxu0 0.0
        %2958 = vmatpush2.msra.mxu0 0.0
        %2959 = vmatprep.subr.mxu0 0.0
        %2960 = vmatpush2.msra.mxu0 0.0
        %2961 = vmatprep.subr.mxu0 0.0
        %2962 = vmatpush2.msra.mxu0 0.0
        %2963 = vmatprep.subr.mxu0 0.0
        %2964 = vmatpush2.msra.mxu0 0.0
        %2965 = vmatprep.subr.mxu0 0.0
        %2966 = vmatpush2.msra.mxu0 0.0
        %2967 = vmatprep.subr.mxu0 0.0
        %2968 = vmatpush2.msra.mxu0 0.0
        %2969 = vmatprep.subr.mxu0 0.0
        %2970 = vmatpush2.msra.mxu0 0.0
        %2971 = vmatprep.subr.mxu0 0.0
        %2972 = vmatpush2.msra.mxu0 0.0
        %2973 = vmatprep.subr.mxu0 0.0
        %2974 = vmatpush2.msra.mxu0 0.0
        %2975 = vmatprep.mubr.f32.mxu0 0.0
        %2976 = vmatmul.mubr.f32.gmra.mxu0 %v2909
        %v2977 = vpop.f32.mrf.mxu0
        %v2978 = vadd.f32 %v2905, %v2977
        %v2979 = vpop.f32.mrf.mxu0
        %2980 = vdwg.mxu0
        %v2981 = vld [vmem:[#allocation4 + $0x2] sm:$0xff]
        %s2982 = scalar_lea.vmem [#allocation16], 128
        %v2983 = vld [vmem:[%s2982] sm:$0xff]
        %v2984 = vld [vmem:[%s2982 + $0x8] sm:$0xff]
        %v2985 = vld [vmem:[%s2982 + $0x10] sm:$0xff]
        %v2986 = vld [vmem:[%s2982 + $0x18] sm:$0xff]
        %v2987 = vld [vmem:[%s2982 + $0x20] sm:$0xff]
        %v2988 = vld [vmem:[%s2982 + $0x28] sm:$0xff]
        %v2989 = vld [vmem:[%s2982 + $0x30] sm:$0xff]
        %v2990 = vld [vmem:[%s2982 + $0x38] sm:$0xff]
        %v2992 = vsel %vm1828, %v2981, 0
        %2994 = vmatprep.subr.mxu0 0.0
        %2995 = vmatpush1.msra.mxu0 0.0
        %2996 = vmatprep.subr.mxu0 0.0
        %2997 = vmatpush1.msra.mxu0 0.0
        %2998 = vmatprep.subr.mxu0 0.0
        %2999 = vmatpush1.msra.mxu0 0.0
        %3000 = vmatprep.subr.mxu0 0.0
        %3001 = vmatpush1.msra.mxu0 0.0
        %3002 = vmatprep.subr.mxu0 0.0
        %3003 = vmatpush1.msra.mxu0 0.0
        %3004 = vmatprep.subr.mxu0 0.0
        %3005 = vmatpush1.msra.mxu0 0.0
        %3006 = vmatprep.subr.mxu0 0.0
        %3007 = vmatpush1.msra.mxu0 0.0
        %3008 = vmatprep.subr.mxu0 0.0
        %3009 = vmatpush1.msra.mxu0 0.0
        %3010 = vmatprep.subr.mxu0 0.0
        %3011 = vmatpush1.msra.mxu0 %v2990
        %3012 = vmatprep.subr.mxu0 0.0
        %3013 = vmatpush1.msra.mxu0 %v2989
        %3014 = vmatprep.subr.mxu0 0.0
        %3015 = vmatpush1.msra.mxu0 %v2988
        %3016 = vmatprep.subr.mxu0 0.0
        %3017 = vmatpush1.msra.mxu0 %v2987
        %3018 = vmatprep.subr.mxu0 0.0
        %3019 = vmatpush1.msra.mxu0 %v2986
        %3020 = vmatprep.subr.mxu0 0.0
        %3021 = vmatpush1.msra.mxu0 %v2985
        %3022 = vmatprep.subr.mxu0 0.0
        %3023 = vmatpush1.msra.mxu0 %v2984
        %3024 = vmatprep.subr.mxu0 0.0
        %3025 = vmatpush1.msra.mxu0 %v2983
        %3026 = vmatprep.subr.mxu0 0.0
        %3027 = vmatpush2.msra.mxu0 0.0
        %3028 = vmatprep.subr.mxu0 0.0
        %3029 = vmatpush2.msra.mxu0 0.0
        %3030 = vmatprep.subr.mxu0 0.0
        %3031 = vmatpush2.msra.mxu0 0.0
        %3032 = vmatprep.subr.mxu0 0.0
        %3033 = vmatpush2.msra.mxu0 0.0
        %3034 = vmatprep.subr.mxu0 0.0
        %3035 = vmatpush2.msra.mxu0 0.0
        %3036 = vmatprep.subr.mxu0 0.0
        %3037 = vmatpush2.msra.mxu0 0.0
        %3038 = vmatprep.subr.mxu0 0.0
        %3039 = vmatpush2.msra.mxu0 0.0
        %3040 = vmatprep.subr.mxu0 0.0
        %3041 = vmatpush2.msra.mxu0 0.0
        %3042 = vmatprep.subr.mxu0 0.0
        %3043 = vmatpush2.msra.mxu0 0.0
        %3044 = vmatprep.subr.mxu0 0.0
        %3045 = vmatpush2.msra.mxu0 0.0
        %3046 = vmatprep.subr.mxu0 0.0
        %3047 = vmatpush2.msra.mxu0 0.0
        %3048 = vmatprep.subr.mxu0 0.0
        %3049 = vmatpush2.msra.mxu0 0.0
        %3050 = vmatprep.subr.mxu0 0.0
        %3051 = vmatpush2.msra.mxu0 0.0
        %3052 = vmatprep.subr.mxu0 0.0
        %3053 = vmatpush2.msra.mxu0 0.0
        %3054 = vmatprep.subr.mxu0 0.0
        %3055 = vmatpush2.msra.mxu0 0.0
        %3056 = vmatprep.subr.mxu0 0.0
        %3057 = vmatpush2.msra.mxu0 0.0
        %3058 = vmatprep.mubr.f32.mxu0 0.0
        %3059 = vmatmul.mubr.f32.gmra.mxu0 %v2992
        %v3060 = vpop.f32.mrf.mxu0
        %v3061 = vadd.f32 0.0, %v3060
        %v3062 = vpop.f32.mrf.mxu0
        %3063 = vdwg.mxu0
        %v3064 = vadd.f32 %v2978, %v3061
        %v3065 = vld [vmem:[#allocation4 + $0x3] sm:$0xff]
        %s3066 = scalar_lea.vmem [#allocation16], 192
        %v3067 = vld [vmem:[%s3066] sm:$0xff]
        %v3068 = vld [vmem:[%s3066 + $0x8] sm:$0xff]
        %v3069 = vld [vmem:[%s3066 + $0x10] sm:$0xff]
        %v3070 = vld [vmem:[%s3066 + $0x18] sm:$0xff]
        %v3071 = vld [vmem:[%s3066 + $0x20] sm:$0xff]
        %v3072 = vld [vmem:[%s3066 + $0x28] sm:$0xff]
        %v3073 = vld [vmem:[%s3066 + $0x30] sm:$0xff]
        %v3074 = vld [vmem:[%s3066 + $0x38] sm:$0xff]
        %v3076 = vsel %vm1828, %v3065, 0
        %3078 = vmatprep.subr.mxu0 0.0
        %3079 = vmatpush1.msra.mxu0 0.0
        %3080 = vmatprep.subr.mxu0 0.0
        %3081 = vmatpush1.msra.mxu0 0.0
        %3082 = vmatprep.subr.mxu0 0.0
        %3083 = vmatpush1.msra.mxu0 0.0
        %3084 = vmatprep.subr.mxu0 0.0
        %3085 = vmatpush1.msra.mxu0 0.0
        %3086 = vmatprep.subr.mxu0 0.0
        %3087 = vmatpush1.msra.mxu0 0.0
        %3088 = vmatprep.subr.mxu0 0.0
        %3089 = vmatpush1.msra.mxu0 0.0
        %3090 = vmatprep.subr.mxu0 0.0
        %3091 = vmatpush1.msra.mxu0 0.0
        %3092 = vmatprep.subr.mxu0 0.0
        %3093 = vmatpush1.msra.mxu0 0.0
        %3094 = vmatprep.subr.mxu0 0.0
        %3095 = vmatpush1.msra.mxu0 %v3074
        %3096 = vmatprep.subr.mxu0 0.0
        %3097 = vmatpush1.msra.mxu0 %v3073
        %3098 = vmatprep.subr.mxu0 0.0
        %3099 = vmatpush1.msra.mxu0 %v3072
        %3100 = vmatprep.subr.mxu0 0.0
        %3101 = vmatpush1.msra.mxu0 %v3071
        %3102 = vmatprep.subr.mxu0 0.0
        %3103 = vmatpush1.msra.mxu0 %v3070
        %3104 = vmatprep.subr.mxu0 0.0
        %3105 = vmatpush1.msra.mxu0 %v3069
        %3106 = vmatprep.subr.mxu0 0.0
        %3107 = vmatpush1.msra.mxu0 %v3068
        %3108 = vmatprep.subr.mxu0 0.0
        %3109 = vmatpush1.msra.mxu0 %v3067
        %3110 = vmatprep.subr.mxu0 0.0
        %3111 = vmatpush2.msra.mxu0 0.0
        %3112 = vmatprep.subr.mxu0 0.0
        %3113 = vmatpush2.msra.mxu0 0.0
        %3114 = vmatprep.subr.mxu0 0.0
        %3115 = vmatpush2.msra.mxu0 0.0
        %3116 = vmatprep.subr.mxu0 0.0
        %3117 = vmatpush2.msra.mxu0 0.0
        %3118 = vmatprep.subr.mxu0 0.0
        %3119 = vmatpush2.msra.mxu0 0.0
        %3120 = vmatprep.subr.mxu0 0.0
        %3121 = vmatpush2.msra.mxu0 0.0
        %3122 = vmatprep.subr.mxu0 0.0
        %3123 = vmatpush2.msra.mxu0 0.0
        %3124 = vmatprep.subr.mxu0 0.0
        %3125 = vmatpush2.msra.mxu0 0.0
        %3126 = vmatprep.subr.mxu0 0.0
        %3127 = vmatpush2.msra.mxu0 0.0
        %3128 = vmatprep.subr.mxu0 0.0
        %3129 = vmatpush2.msra.mxu0 0.0
        %3130 = vmatprep.subr.mxu0 0.0
        %3131 = vmatpush2.msra.mxu0 0.0
        %3132 = vmatprep.subr.mxu0 0.0
        %3133 = vmatpush2.msra.mxu0 0.0
        %3134 = vmatprep.subr.mxu0 0.0
        %3135 = vmatpush2.msra.mxu0 0.0
        %3136 = vmatprep.subr.mxu0 0.0
        %3137 = vmatpush2.msra.mxu0 0.0
        %3138 = vmatprep.subr.mxu0 0.0
        %3139 = vmatpush2.msra.mxu0 0.0
        %3140 = vmatprep.subr.mxu0 0.0
        %3141 = vmatpush2.msra.mxu0 0.0
        %3142 = vmatprep.mubr.f32.mxu0 0.0
        %3143 = vmatmul.mubr.f32.gmra.mxu0 %v3076
        %v3144 = vpop.f32.mrf.mxu0
        %v3145 = vadd.f32 0.0, %v3144
        %v3146 = vpop.f32.mrf.mxu0
        %3147 = vdwg.mxu0
        %v3148 = vadd.f32 %v3064, %v3145
        %v3149 = vld [vmem:[#allocation4 + $0x4] sm:$0xff]
        %s3150 = scalar_lea.vmem [#allocation16], 256
        %v3151 = vld [vmem:[%s3150] sm:$0xff]
        %v3152 = vld [vmem:[%s3150 + $0x8] sm:$0xff]
        %v3153 = vld [vmem:[%s3150 + $0x10] sm:$0xff]
        %v3154 = vld [vmem:[%s3150 + $0x18] sm:$0xff]
        %v3155 = vld [vmem:[%s3150 + $0x20] sm:$0xff]
        %v3156 = vld [vmem:[%s3150 + $0x28] sm:$0xff]
        %v3157 = vld [vmem:[%s3150 + $0x30] sm:$0xff]
        %v3158 = vld [vmem:[%s3150 + $0x38] sm:$0xff]
        %v3160 = vsel %vm1828, %v3149, 0
        %3162 = vmatprep.subr.mxu0 0.0
        %3163 = vmatpush1.msra.mxu0 0.0
        %3164 = vmatprep.subr.mxu0 0.0
        %3165 = vmatpush1.msra.mxu0 0.0
        %3166 = vmatprep.subr.mxu0 0.0
        %3167 = vmatpush1.msra.mxu0 0.0
        %3168 = vmatprep.subr.mxu0 0.0
        %3169 = vmatpush1.msra.mxu0 0.0
        %3170 = vmatprep.subr.mxu0 0.0
        %3171 = vmatpush1.msra.mxu0 0.0
        %3172 = vmatprep.subr.mxu0 0.0
        %3173 = vmatpush1.msra.mxu0 0.0
        %3174 = vmatprep.subr.mxu0 0.0
        %3175 = vmatpush1.msra.mxu0 0.0
        %3176 = vmatprep.subr.mxu0 0.0
        %3177 = vmatpush1.msra.mxu0 0.0
        %3178 = vmatprep.subr.mxu0 0.0
        %3179 = vmatpush1.msra.mxu0 %v3158
        %3180 = vmatprep.subr.mxu0 0.0
        %3181 = vmatpush1.msra.mxu0 %v3157
        %3182 = vmatprep.subr.mxu0 0.0
        %3183 = vmatpush1.msra.mxu0 %v3156
        %3184 = vmatprep.subr.mxu0 0.0
        %3185 = vmatpush1.msra.mxu0 %v3155
        %3186 = vmatprep.subr.mxu0 0.0
        %3187 = vmatpush1.msra.mxu0 %v3154
        %3188 = vmatprep.subr.mxu0 0.0
        %3189 = vmatpush1.msra.mxu0 %v3153
        %3190 = vmatprep.subr.mxu0 0.0
        %3191 = vmatpush1.msra.mxu0 %v3152
        %3192 = vmatprep.subr.mxu0 0.0
        %3193 = vmatpush1.msra.mxu0 %v3151
        %3194 = vmatprep.subr.mxu0 0.0
        %3195 = vmatpush2.msra.mxu0 0.0
        %3196 = vmatprep.subr.mxu0 0.0
        %3197 = vmatpush2.msra.mxu0 0.0
        %3198 = vmatprep.subr.mxu0 0.0
        %3199 = vmatpush2.msra.mxu0 0.0
        %3200 = vmatprep.subr.mxu0 0.0
        %3201 = vmatpush2.msra.mxu0 0.0
        %3202 = vmatprep.subr.mxu0 0.0
        %3203 = vmatpush2.msra.mxu0 0.0
        %3204 = vmatprep.subr.mxu0 0.0
        %3205 = vmatpush2.msra.mxu0 0.0
        %3206 = vmatprep.subr.mxu0 0.0
        %3207 = vmatpush2.msra.mxu0 0.0
        %3208 = vmatprep.subr.mxu0 0.0
        %3209 = vmatpush2.msra.mxu0 0.0
        %3210 = vmatprep.subr.mxu0 0.0
        %3211 = vmatpush2.msra.mxu0 0.0
        %3212 = vmatprep.subr.mxu0 0.0
        %3213 = vmatpush2.msra.mxu0 0.0
        %3214 = vmatprep.subr.mxu0 0.0
        %3215 = vmatpush2.msra.mxu0 0.0
        %3216 = vmatprep.subr.mxu0 0.0
        %3217 = vmatpush2.msra.mxu0 0.0
        %3218 = vmatprep.subr.mxu0 0.0
        %3219 = vmatpush2.msra.mxu0 0.0
        %3220 = vmatprep.subr.mxu0 0.0
        %3221 = vmatpush2.msra.mxu0 0.0
        %3222 = vmatprep.subr.mxu0 0.0
        %3223 = vmatpush2.msra.mxu0 0.0
        %3224 = vmatprep.subr.mxu0 0.0
        %3225 = vmatpush2.msra.mxu0 0.0
        %3226 = vmatprep.mubr.f32.mxu0 0.0
        %3227 = vmatmul.mubr.f32.gmra.mxu0 %v3160
        %v3228 = vpop.f32.mrf.mxu0
        %v3229 = vadd.f32 0.0, %v3228
        %v3230 = vpop.f32.mrf.mxu0
        %3231 = vdwg.mxu0
        %v3232 = vadd.f32 %v3148, %v3229
        %v3233 = vld [vmem:[#allocation18] sm:$0x1]
        %v3235 = vlaneseq
        %v3236 = vshrl.u32 %v3235, 7
        %v3237 = vsub.s32 0, %v3236
        %v3238 = vrot.slane %v3233, %v3237
        %v3240 = vadd.f32 %v3232, %v3238
        %v3241 = vmax.f32 %v3240, 0.0
        %v3242 = vld [vmem:[#allocation19] sm:$0xff]
        %v3243 = vld [vmem:[#allocation19 + $0x8] sm:$0xff]
        %v3244 = vld [vmem:[#allocation19 + $0x10] sm:$0xff]
        %v3245 = vld [vmem:[#allocation19 + $0x18] sm:$0xff]
        %v3246 = vld [vmem:[#allocation19 + $0x20] sm:$0xff]
        %v3247 = vld [vmem:[#allocation19 + $0x28] sm:$0xff]
        %v3248 = vld [vmem:[#allocation19 + $0x30] sm:$0xff]
        %v3249 = vld [vmem:[#allocation19 + $0x38] sm:$0xff]
        %v3250 = vld [vmem:[#allocation19 + $0x40] sm:$0xff]
        %v3251 = vld [vmem:[#allocation19 + $0x48] sm:$0xff]
        %v3252 = vld [vmem:[#allocation19 + $0x50] sm:$0xff]
        %v3253 = vld [vmem:[#allocation19 + $0x58] sm:$0xff]
        %v3254 = vld [vmem:[#allocation19 + $0x60] sm:$0xff]
        %v3255 = vld [vmem:[#allocation19 + $0x68] sm:$0xff]
        %v3256 = vld [vmem:[#allocation19 + $0x70] sm:$0xff]
        %v3257 = vld [vmem:[#allocation19 + $0x78] sm:$0xff]
        %v3258 = vld [vmem:[#allocation19 + $0x80] sm:$0xff]
        %v3259 = vld [vmem:[#allocation19 + $0x88] sm:$0xff]
        %v3260 = vld [vmem:[#allocation19 + $0x90] sm:$0xff]
        %v3261 = vld [vmem:[#allocation19 + $0x98] sm:$0xff]
        %v3262 = vld [vmem:[#allocation19 + $0xa0] sm:$0xff]
        %v3263 = vld [vmem:[#allocation19 + $0xa8] sm:$0xff]
        %v3264 = vld [vmem:[#allocation19 + $0xb0] sm:$0xff]
        %v3265 = vld [vmem:[#allocation19 + $0xb8] sm:$0xff]
        %v3266 = vld [vmem:[#allocation19 + $0xc0] sm:$0xff]
        %v3267 = vld [vmem:[#allocation19 + $0xc8] sm:$0xff]
        %v3268 = vld [vmem:[#allocation19 + $0xd0] sm:$0xff]
        %v3269 = vld [vmem:[#allocation19 + $0xd8] sm:$0xff]
        %v3270 = vld [vmem:[#allocation19 + $0xe0] sm:$0xff]
        %v3271 = vld [vmem:[#allocation19 + $0xe8] sm:$0xff]
        %v3272 = vld [vmem:[#allocation19 + $0xf0] sm:$0xff]
        %v3273 = vld [vmem:[#allocation19 + $0xf8] sm:$0xff]
        %v3274 = vld [vmem:[#allocation19 + $0x100] sm:$0xff]
        %v3275 = vld [vmem:[#allocation19 + $0x108] sm:$0xff]
        %v3276 = vld [vmem:[#allocation19 + $0x110] sm:$0xff]
        %v3277 = vld [vmem:[#allocation19 + $0x118] sm:$0xff]
        %v3278 = vld [vmem:[#allocation19 + $0x120] sm:$0xff]
        %v3279 = vld [vmem:[#allocation19 + $0x128] sm:$0xff]
        %v3280 = vld [vmem:[#allocation19 + $0x130] sm:$0xff]
        %v3281 = vld [vmem:[#allocation19 + $0x138] sm:$0xff]
        %v3282 = vld [vmem:[#allocation19 + $0x140] sm:$0xff]
        %v3283 = vld [vmem:[#allocation19 + $0x148] sm:$0xff]
        %v3284 = vld [vmem:[#allocation19 + $0x150] sm:$0xff]
        %v3285 = vld [vmem:[#allocation19 + $0x158] sm:$0xff]
        %v3286 = vld [vmem:[#allocation19 + $0x160] sm:$0xff]
        %v3287 = vld [vmem:[#allocation19 + $0x168] sm:$0xff]
        %v3288 = vld [vmem:[#allocation19 + $0x170] sm:$0xff]
        %v3289 = vld [vmem:[#allocation19 + $0x178] sm:$0xff]
        %v3290 = vld [vmem:[#allocation19 + $0x180] sm:$0xff]
        %v3291 = vld [vmem:[#allocation19 + $0x188] sm:$0xff]
        %v3292 = vld [vmem:[#allocation19 + $0x190] sm:$0xff]
        %v3293 = vld [vmem:[#allocation19 + $0x198] sm:$0xff]
        %v3294 = vld [vmem:[#allocation19 + $0x1a0] sm:$0xff]
        %v3295 = vld [vmem:[#allocation19 + $0x1a8] sm:$0xff]
        %v3296 = vld [vmem:[#allocation19 + $0x1b0] sm:$0xff]
        %v3297 = vld [vmem:[#allocation19 + $0x1b8] sm:$0xff]
        %v3298 = vld [vmem:[#allocation19 + $0x1c0] sm:$0xff]
        %v3299 = vld [vmem:[#allocation19 + $0x1c8] sm:$0xff]
        %v3300 = vld [vmem:[#allocation19 + $0x1d0] sm:$0xff]
        %v3301 = vld [vmem:[#allocation19 + $0x1d8] sm:$0xff]
        %v3302 = vld [vmem:[#allocation19 + $0x1e0] sm:$0xff]
        %v3303 = vld [vmem:[#allocation19 + $0x1e8] sm:$0xff]
        %v3304 = vld [vmem:[#allocation19 + $0x1f0] sm:$0xff]
        %v3305 = vld [vmem:[#allocation19 + $0x1f8] sm:$0xff]
        %s3306 = scalar_lea.vmem [#allocation19], 512
        %v3307 = vld [vmem:[%s3306] sm:$0xff]
        %v3308 = vld [vmem:[%s3306 + $0x8] sm:$0xff]
        %v3309 = vld [vmem:[%s3306 + $0x10] sm:$0xff]
        %v3310 = vld [vmem:[%s3306 + $0x18] sm:$0xff]
        %v3311 = vld [vmem:[%s3306 + $0x20] sm:$0xff]
        %v3312 = vld [vmem:[%s3306 + $0x28] sm:$0xff]
        %v3313 = vld [vmem:[%s3306 + $0x30] sm:$0xff]
        %v3314 = vld [vmem:[%s3306 + $0x38] sm:$0xff]
        %v3315 = vld [vmem:[%s3306 + $0x40] sm:$0xff]
        %v3316 = vld [vmem:[%s3306 + $0x48] sm:$0xff]
        %v3317 = vld [vmem:[%s3306 + $0x50] sm:$0xff]
        %v3318 = vld [vmem:[%s3306 + $0x58] sm:$0xff]
        %v3319 = vld [vmem:[%s3306 + $0x60] sm:$0xff]
        %v3320 = vld [vmem:[%s3306 + $0x68] sm:$0xff]
        %v3321 = vld [vmem:[%s3306 + $0x70] sm:$0xff]
        %v3322 = vld [vmem:[%s3306 + $0x78] sm:$0xff]
        %v3323 = vld [vmem:[%s3306 + $0x80] sm:$0xff]
        %v3324 = vld [vmem:[%s3306 + $0x88] sm:$0xff]
        %v3325 = vld [vmem:[%s3306 + $0x90] sm:$0xff]
        %v3326 = vld [vmem:[%s3306 + $0x98] sm:$0xff]
        %v3327 = vld [vmem:[%s3306 + $0xa0] sm:$0xff]
        %v3328 = vld [vmem:[%s3306 + $0xa8] sm:$0xff]
        %v3329 = vld [vmem:[%s3306 + $0xb0] sm:$0xff]
        %v3330 = vld [vmem:[%s3306 + $0xb8] sm:$0xff]
        %v3331 = vld [vmem:[%s3306 + $0xc0] sm:$0xff]
        %v3332 = vld [vmem:[%s3306 + $0xc8] sm:$0xff]
        %v3333 = vld [vmem:[%s3306 + $0xd0] sm:$0xff]
        %v3334 = vld [vmem:[%s3306 + $0xd8] sm:$0xff]
        %v3335 = vld [vmem:[%s3306 + $0xe0] sm:$0xff]
        %v3336 = vld [vmem:[%s3306 + $0xe8] sm:$0xff]
        %v3337 = vld [vmem:[%s3306 + $0xf0] sm:$0xff]
        %v3338 = vld [vmem:[%s3306 + $0xf8] sm:$0xff]
        %v3339 = vld [vmem:[%s3306 + $0x100] sm:$0xff]
        %v3340 = vld [vmem:[%s3306 + $0x108] sm:$0xff]
        %v3341 = vld [vmem:[%s3306 + $0x110] sm:$0xff]
        %v3342 = vld [vmem:[%s3306 + $0x118] sm:$0xff]
        %v3343 = vld [vmem:[%s3306 + $0x120] sm:$0xff]
        %v3344 = vld [vmem:[%s3306 + $0x128] sm:$0xff]
        %v3345 = vld [vmem:[%s3306 + $0x130] sm:$0xff]
        %v3346 = vld [vmem:[%s3306 + $0x138] sm:$0xff]
        %v3347 = vld [vmem:[%s3306 + $0x140] sm:$0xff]
        %v3348 = vld [vmem:[%s3306 + $0x148] sm:$0xff]
        %v3349 = vld [vmem:[%s3306 + $0x150] sm:$0xff]
        %v3350 = vld [vmem:[%s3306 + $0x158] sm:$0xff]
        %v3351 = vld [vmem:[%s3306 + $0x160] sm:$0xff]
        %v3352 = vld [vmem:[%s3306 + $0x168] sm:$0xff]
        %v3353 = vld [vmem:[%s3306 + $0x170] sm:$0xff]
        %v3354 = vld [vmem:[%s3306 + $0x178] sm:$0xff]
        %v3355 = vld [vmem:[%s3306 + $0x180] sm:$0xff]
        %v3356 = vld [vmem:[%s3306 + $0x188] sm:$0xff]
        %v3357 = vld [vmem:[%s3306 + $0x190] sm:$0xff]
        %v3358 = vld [vmem:[%s3306 + $0x198] sm:$0xff]
        %v3359 = vld [vmem:[%s3306 + $0x1a0] sm:$0xff]
        %v3360 = vld [vmem:[%s3306 + $0x1a8] sm:$0xff]
        %v3361 = vld [vmem:[%s3306 + $0x1b0] sm:$0xff]
        %v3362 = vld [vmem:[%s3306 + $0x1b8] sm:$0xff]
        %v3363 = vld [vmem:[%s3306 + $0x1c0] sm:$0xff]
        %v3364 = vld [vmem:[%s3306 + $0x1c8] sm:$0xff]
        %v3365 = vld [vmem:[%s3306 + $0x1d0] sm:$0xff]
        %v3366 = vld [vmem:[%s3306 + $0x1d8] sm:$0xff]
        %v3367 = vld [vmem:[%s3306 + $0x1e0] sm:$0xff]
        %v3368 = vld [vmem:[%s3306 + $0x1e8] sm:$0xff]
        %v3369 = vld [vmem:[%s3306 + $0x1f0] sm:$0xff]
        %v3370 = vld [vmem:[%s3306 + $0x1f8] sm:$0xff]
        %v3372 = vrot.slane %v3241, 1
        %3374 = vmatprep.subr.mxu0 %v3368
        %3375 = vmatpush1.msra.mxu0 %v3367
        %3376 = vmatprep.subr.mxu0 %v3364
        %3377 = vmatpush1.msra.mxu0 %v3363
        %3378 = vmatprep.subr.mxu0 %v3360
        %3379 = vmatpush1.msra.mxu0 %v3359
        %3380 = vmatprep.subr.mxu0 %v3356
        %3381 = vmatpush1.msra.mxu0 %v3355
        %3382 = vmatprep.subr.mxu0 %v3352
        %3383 = vmatpush1.msra.mxu0 %v3351
        %3384 = vmatprep.subr.mxu0 %v3348
        %3385 = vmatpush1.msra.mxu0 %v3347
        %3386 = vmatprep.subr.mxu0 %v3344
        %3387 = vmatpush1.msra.mxu0 %v3343
        %3388 = vmatprep.subr.mxu0 %v3340
        %3389 = vmatpush1.msra.mxu0 %v3339
        %3390 = vmatprep.subr.mxu0 %v3336
        %3391 = vmatpush1.msra.mxu0 %v3335
        %3392 = vmatprep.subr.mxu0 %v3332
        %3393 = vmatpush1.msra.mxu0 %v3331
        %3394 = vmatprep.subr.mxu0 %v3328
        %3395 = vmatpush1.msra.mxu0 %v3327
        %3396 = vmatprep.subr.mxu0 %v3324
        %3397 = vmatpush1.msra.mxu0 %v3323
        %3398 = vmatprep.subr.mxu0 %v3320
        %3399 = vmatpush1.msra.mxu0 %v3319
        %3400 = vmatprep.subr.mxu0 %v3316
        %3401 = vmatpush1.msra.mxu0 %v3315
        %3402 = vmatprep.subr.mxu0 %v3312
        %3403 = vmatpush1.msra.mxu0 %v3311
        %3404 = vmatprep.subr.mxu0 %v3308
        %3405 = vmatpush1.msra.mxu0 %v3307
        %3406 = vmatprep.subr.mxu0 0.0
        %3407 = vmatpush2.msra.mxu0 0.0
        %3408 = vmatprep.subr.mxu0 0.0
        %3409 = vmatpush2.msra.mxu0 0.0
        %3410 = vmatprep.subr.mxu0 0.0
        %3411 = vmatpush2.msra.mxu0 0.0
        %3412 = vmatprep.subr.mxu0 0.0
        %3413 = vmatpush2.msra.mxu0 0.0
        %3414 = vmatprep.subr.mxu0 0.0
        %3415 = vmatpush2.msra.mxu0 0.0
        %3416 = vmatprep.subr.mxu0 0.0
        %3417 = vmatpush2.msra.mxu0 0.0
        %3418 = vmatprep.subr.mxu0 0.0
        %3419 = vmatpush2.msra.mxu0 0.0
        %3420 = vmatprep.subr.mxu0 0.0
        %3421 = vmatpush2.msra.mxu0 0.0
        %3422 = vmatprep.subr.mxu0 0.0
        %3423 = vmatpush2.msra.mxu0 0.0
        %3424 = vmatprep.subr.mxu0 0.0
        %3425 = vmatpush2.msra.mxu0 0.0
        %3426 = vmatprep.subr.mxu0 0.0
        %3427 = vmatpush2.msra.mxu0 0.0
        %3428 = vmatprep.subr.mxu0 0.0
        %3429 = vmatpush2.msra.mxu0 0.0
        %3430 = vmatprep.subr.mxu0 0.0
        %3431 = vmatpush2.msra.mxu0 0.0
        %3432 = vmatprep.subr.mxu0 0.0
        %3433 = vmatpush2.msra.mxu0 0.0
        %3434 = vmatprep.subr.mxu0 0.0
        %3435 = vmatpush2.msra.mxu0 0.0
        %3436 = vmatprep.subr.mxu0 0.0
        %3437 = vmatpush2.msra.mxu0 0.0
        %3438 = vmatprep.mubr.f32.mxu0 0.0
        %3439 = vmatmul.mubr.f32.gmra.mxu0 %v3372
        %v3440 = vpop.f32.mrf.mxu0
        %v3441 = vadd.f32 0.0, %v3440
        %v3442 = vpop.f32.mrf.mxu0
        %v3443 = vadd.f32 0.0, %v3442
        %3444 = vdwg.mxu0
        %3445 = vmatprep.subr.mxu0 %v3370
        %3446 = vmatpush1.msra.mxu0 %v3369
        %3447 = vmatprep.subr.mxu0 %v3366
        %3448 = vmatpush1.msra.mxu0 %v3365
        %3449 = vmatprep.subr.mxu0 %v3362
        %3450 = vmatpush1.msra.mxu0 %v3361
        %3451 = vmatprep.subr.mxu0 %v3358
        %3452 = vmatpush1.msra.mxu0 %v3357
        %3453 = vmatprep.subr.mxu0 %v3354
        %3454 = vmatpush1.msra.mxu0 %v3353
        %3455 = vmatprep.subr.mxu0 %v3350
        %3456 = vmatpush1.msra.mxu0 %v3349
        %3457 = vmatprep.subr.mxu0 %v3346
        %3458 = vmatpush1.msra.mxu0 %v3345
        %3459 = vmatprep.subr.mxu0 %v3342
        %3460 = vmatpush1.msra.mxu0 %v3341
        %3461 = vmatprep.subr.mxu0 %v3338
        %3462 = vmatpush1.msra.mxu0 %v3337
        %3463 = vmatprep.subr.mxu0 %v3334
        %3464 = vmatpush1.msra.mxu0 %v3333
        %3465 = vmatprep.subr.mxu0 %v3330
        %3466 = vmatpush1.msra.mxu0 %v3329
        %3467 = vmatprep.subr.mxu0 %v3326
        %3468 = vmatpush1.msra.mxu0 %v3325
        %3469 = vmatprep.subr.mxu0 %v3322
        %3470 = vmatpush1.msra.mxu0 %v3321
        %3471 = vmatprep.subr.mxu0 %v3318
        %3472 = vmatpush1.msra.mxu0 %v3317
        %3473 = vmatprep.subr.mxu0 %v3314
        %3474 = vmatpush1.msra.mxu0 %v3313
        %3475 = vmatprep.subr.mxu0 %v3310
        %3476 = vmatpush1.msra.mxu0 %v3309
        %3477 = vmatprep.subr.mxu0 0.0
        %3478 = vmatpush2.msra.mxu0 0.0
        %3479 = vmatprep.subr.mxu0 0.0
        %3480 = vmatpush2.msra.mxu0 0.0
        %3481 = vmatprep.subr.mxu0 0.0
        %3482 = vmatpush2.msra.mxu0 0.0
        %3483 = vmatprep.subr.mxu0 0.0
        %3484 = vmatpush2.msra.mxu0 0.0
        %3485 = vmatprep.subr.mxu0 0.0
        %3486 = vmatpush2.msra.mxu0 0.0
        %3487 = vmatprep.subr.mxu0 0.0
        %3488 = vmatpush2.msra.mxu0 0.0
        %3489 = vmatprep.subr.mxu0 0.0
        %3490 = vmatpush2.msra.mxu0 0.0
        %3491 = vmatprep.subr.mxu0 0.0
        %3492 = vmatpush2.msra.mxu0 0.0
        %3493 = vmatprep.subr.mxu0 0.0
        %3494 = vmatpush2.msra.mxu0 0.0
        %3495 = vmatprep.subr.mxu0 0.0
        %3496 = vmatpush2.msra.mxu0 0.0
        %3497 = vmatprep.subr.mxu0 0.0
        %3498 = vmatpush2.msra.mxu0 0.0
        %3499 = vmatprep.subr.mxu0 0.0
        %3500 = vmatpush2.msra.mxu0 0.0
        %3501 = vmatprep.subr.mxu0 0.0
        %3502 = vmatpush2.msra.mxu0 0.0
        %3503 = vmatprep.subr.mxu0 0.0
        %3504 = vmatpush2.msra.mxu0 0.0
        %3505 = vmatprep.subr.mxu0 0.0
        %3506 = vmatpush2.msra.mxu0 0.0
        %3507 = vmatprep.subr.mxu0 0.0
        %3508 = vmatpush2.msra.mxu0 0.0
        %3509 = vmatprep.mubr.f32.mxu0 0.0
        %3510 = vmatmul.mubr.f32.gmra.mxu0 %v3372
        %v3511 = vpop.f32.mrf.mxu0
        %v3512 = vadd.f32 0.0, %v3511
        %v3513 = vpop.f32.mrf.mxu0
        %v3514 = vadd.f32 0.0, %v3513
        %3515 = vdwg.mxu0
        %3516 = vmatprep.subr.mxu0 %v3303
        %3517 = vmatpush1.msra.mxu0 %v3302
        %3518 = vmatprep.subr.mxu0 %v3299
        %3519 = vmatpush1.msra.mxu0 %v3298
        %3520 = vmatprep.subr.mxu0 %v3295
        %3521 = vmatpush1.msra.mxu0 %v3294
        %3522 = vmatprep.subr.mxu0 %v3291
        %3523 = vmatpush1.msra.mxu0 %v3290
        %3524 = vmatprep.subr.mxu0 %v3287
        %3525 = vmatpush1.msra.mxu0 %v3286
        %3526 = vmatprep.subr.mxu0 %v3283
        %3527 = vmatpush1.msra.mxu0 %v3282
        %3528 = vmatprep.subr.mxu0 %v3279
        %3529 = vmatpush1.msra.mxu0 %v3278
        %3530 = vmatprep.subr.mxu0 %v3275
        %3531 = vmatpush1.msra.mxu0 %v3274
        %3532 = vmatprep.subr.mxu0 %v3271
        %3533 = vmatpush1.msra.mxu0 %v3270
        %3534 = vmatprep.subr.mxu0 %v3267
        %3535 = vmatpush1.msra.mxu0 %v3266
        %3536 = vmatprep.subr.mxu0 %v3263
        %3537 = vmatpush1.msra.mxu0 %v3262
        %3538 = vmatprep.subr.mxu0 %v3259
        %3539 = vmatpush1.msra.mxu0 %v3258
        %3540 = vmatprep.subr.mxu0 %v3255
        %3541 = vmatpush1.msra.mxu0 %v3254
        %3542 = vmatprep.subr.mxu0 %v3251
        %3543 = vmatpush1.msra.mxu0 %v3250
        %3544 = vmatprep.subr.mxu0 %v3247
        %3545 = vmatpush1.msra.mxu0 %v3246
        %3546 = vmatprep.subr.mxu0 %v3243
        %3547 = vmatpush1.msra.mxu0 %v3242
        %3548 = vmatprep.subr.mxu0 0.0
        %3549 = vmatpush2.msra.mxu0 0.0
        %3550 = vmatprep.subr.mxu0 0.0
        %3551 = vmatpush2.msra.mxu0 0.0
        %3552 = vmatprep.subr.mxu0 0.0
        %3553 = vmatpush2.msra.mxu0 0.0
        %3554 = vmatprep.subr.mxu0 0.0
        %3555 = vmatpush2.msra.mxu0 0.0
        %3556 = vmatprep.subr.mxu0 0.0
        %3557 = vmatpush2.msra.mxu0 0.0
        %3558 = vmatprep.subr.mxu0 0.0
        %3559 = vmatpush2.msra.mxu0 0.0
        %3560 = vmatprep.subr.mxu0 0.0
        %3561 = vmatpush2.msra.mxu0 0.0
        %3562 = vmatprep.subr.mxu0 0.0
        %3563 = vmatpush2.msra.mxu0 0.0
        %3564 = vmatprep.subr.mxu0 0.0
        %3565 = vmatpush2.msra.mxu0 0.0
        %3566 = vmatprep.subr.mxu0 0.0
        %3567 = vmatpush2.msra.mxu0 0.0
        %3568 = vmatprep.subr.mxu0 0.0
        %3569 = vmatpush2.msra.mxu0 0.0
        %3570 = vmatprep.subr.mxu0 0.0
        %3571 = vmatpush2.msra.mxu0 0.0
        %3572 = vmatprep.subr.mxu0 0.0
        %3573 = vmatpush2.msra.mxu0 0.0
        %3574 = vmatprep.subr.mxu0 0.0
        %3575 = vmatpush2.msra.mxu0 0.0
        %3576 = vmatprep.subr.mxu0 0.0
        %3577 = vmatpush2.msra.mxu0 0.0
        %3578 = vmatprep.subr.mxu0 0.0
        %3579 = vmatpush2.msra.mxu0 0.0
        %3580 = vmatprep.mubr.f32.mxu0 0.0
        %3581 = vmatmul.mubr.f32.gmra.mxu0 %v3241
        %v3582 = vpop.f32.mrf.mxu0
        %v3583 = vadd.f32 %v3441, %v3582
        %v3584 = vpop.f32.mrf.mxu0
        %v3585 = vadd.f32 %v3443, %v3584
        %3586 = vdwg.mxu0
        %3587 = vmatprep.subr.mxu0 %v3305
        %3588 = vmatpush1.msra.mxu0 %v3304
        %3589 = vmatprep.subr.mxu0 %v3301
        %3590 = vmatpush1.msra.mxu0 %v3300
        %3591 = vmatprep.subr.mxu0 %v3297
        %3592 = vmatpush1.msra.mxu0 %v3296
        %3593 = vmatprep.subr.mxu0 %v3293
        %3594 = vmatpush1.msra.mxu0 %v3292
        %3595 = vmatprep.subr.mxu0 %v3289
        %3596 = vmatpush1.msra.mxu0 %v3288
        %3597 = vmatprep.subr.mxu0 %v3285
        %3598 = vmatpush1.msra.mxu0 %v3284
        %3599 = vmatprep.subr.mxu0 %v3281
        %3600 = vmatpush1.msra.mxu0 %v3280
        %3601 = vmatprep.subr.mxu0 %v3277
        %3602 = vmatpush1.msra.mxu0 %v3276
        %3603 = vmatprep.subr.mxu0 %v3273
        %3604 = vmatpush1.msra.mxu0 %v3272
        %3605 = vmatprep.subr.mxu0 %v3269
        %3606 = vmatpush1.msra.mxu0 %v3268
        %3607 = vmatprep.subr.mxu0 %v3265
        %3608 = vmatpush1.msra.mxu0 %v3264
        %3609 = vmatprep.subr.mxu0 %v3261
        %3610 = vmatpush1.msra.mxu0 %v3260
        %3611 = vmatprep.subr.mxu0 %v3257
        %3612 = vmatpush1.msra.mxu0 %v3256
        %3613 = vmatprep.subr.mxu0 %v3253
        %3614 = vmatpush1.msra.mxu0 %v3252
        %3615 = vmatprep.subr.mxu0 %v3249
        %3616 = vmatpush1.msra.mxu0 %v3248
        %3617 = vmatprep.subr.mxu0 %v3245
        %3618 = vmatpush1.msra.mxu0 %v3244
        %3619 = vmatprep.subr.mxu0 0.0
        %3620 = vmatpush2.msra.mxu0 0.0
        %3621 = vmatprep.subr.mxu0 0.0
        %3622 = vmatpush2.msra.mxu0 0.0
        %3623 = vmatprep.subr.mxu0 0.0
        %3624 = vmatpush2.msra.mxu0 0.0
        %3625 = vmatprep.subr.mxu0 0.0
        %3626 = vmatpush2.msra.mxu0 0.0
        %3627 = vmatprep.subr.mxu0 0.0
        %3628 = vmatpush2.msra.mxu0 0.0
        %3629 = vmatprep.subr.mxu0 0.0
        %3630 = vmatpush2.msra.mxu0 0.0
        %3631 = vmatprep.subr.mxu0 0.0
        %3632 = vmatpush2.msra.mxu0 0.0
        %3633 = vmatprep.subr.mxu0 0.0
        %3634 = vmatpush2.msra.mxu0 0.0
        %3635 = vmatprep.subr.mxu0 0.0
        %3636 = vmatpush2.msra.mxu0 0.0
        %3637 = vmatprep.subr.mxu0 0.0
        %3638 = vmatpush2.msra.mxu0 0.0
        %3639 = vmatprep.subr.mxu0 0.0
        %3640 = vmatpush2.msra.mxu0 0.0
        %3641 = vmatprep.subr.mxu0 0.0
        %3642 = vmatpush2.msra.mxu0 0.0
        %3643 = vmatprep.subr.mxu0 0.0
        %3644 = vmatpush2.msra.mxu0 0.0
        %3645 = vmatprep.subr.mxu0 0.0
        %3646 = vmatpush2.msra.mxu0 0.0
        %3647 = vmatprep.subr.mxu0 0.0
        %3648 = vmatpush2.msra.mxu0 0.0
        %3649 = vmatprep.subr.mxu0 0.0
        %3650 = vmatpush2.msra.mxu0 0.0
        %3651 = vmatprep.mubr.f32.mxu0 0.0
        %3652 = vmatmul.mubr.f32.gmra.mxu0 %v3241
        %v3653 = vpop.f32.mrf.mxu0
        %v3654 = vadd.f32 %v3512, %v3653
        %v3655 = vpop.f32.mrf.mxu0
        %v3656 = vadd.f32 %v3514, %v3655
        %3657 = vdwg.mxu0
        %s3658 = scalar_lea.vmem [#allocation19], 1024
        %v3659 = vld [vmem:[%s3658] sm:$0xff]
        %v3660 = vld [vmem:[%s3658 + $0x8] sm:$0xff]
        %v3661 = vld [vmem:[%s3658 + $0x10] sm:$0xff]
        %v3662 = vld [vmem:[%s3658 + $0x18] sm:$0xff]
        %v3663 = vld [vmem:[%s3658 + $0x20] sm:$0xff]
        %v3664 = vld [vmem:[%s3658 + $0x28] sm:$0xff]
        %v3665 = vld [vmem:[%s3658 + $0x30] sm:$0xff]
        %v3666 = vld [vmem:[%s3658 + $0x38] sm:$0xff]
        %v3667 = vld [vmem:[%s3658 + $0x40] sm:$0xff]
        %v3668 = vld [vmem:[%s3658 + $0x48] sm:$0xff]
        %v3669 = vld [vmem:[%s3658 + $0x50] sm:$0xff]
        %v3670 = vld [vmem:[%s3658 + $0x58] sm:$0xff]
        %v3671 = vld [vmem:[%s3658 + $0x60] sm:$0xff]
        %v3672 = vld [vmem:[%s3658 + $0x68] sm:$0xff]
        %v3673 = vld [vmem:[%s3658 + $0x70] sm:$0xff]
        %v3674 = vld [vmem:[%s3658 + $0x78] sm:$0xff]
        %v3675 = vld [vmem:[%s3658 + $0x80] sm:$0xff]
        %v3676 = vld [vmem:[%s3658 + $0x88] sm:$0xff]
        %v3677 = vld [vmem:[%s3658 + $0x90] sm:$0xff]
        %v3678 = vld [vmem:[%s3658 + $0x98] sm:$0xff]
        %v3679 = vld [vmem:[%s3658 + $0xa0] sm:$0xff]
        %v3680 = vld [vmem:[%s3658 + $0xa8] sm:$0xff]
        %v3681 = vld [vmem:[%s3658 + $0xb0] sm:$0xff]
        %v3682 = vld [vmem:[%s3658 + $0xb8] sm:$0xff]
        %v3683 = vld [vmem:[%s3658 + $0xc0] sm:$0xff]
        %v3684 = vld [vmem:[%s3658 + $0xc8] sm:$0xff]
        %v3685 = vld [vmem:[%s3658 + $0xd0] sm:$0xff]
        %v3686 = vld [vmem:[%s3658 + $0xd8] sm:$0xff]
        %v3687 = vld [vmem:[%s3658 + $0xe0] sm:$0xff]
        %v3688 = vld [vmem:[%s3658 + $0xe8] sm:$0xff]
        %v3689 = vld [vmem:[%s3658 + $0xf0] sm:$0xff]
        %v3690 = vld [vmem:[%s3658 + $0xf8] sm:$0xff]
        %v3691 = vld [vmem:[%s3658 + $0x100] sm:$0xff]
        %v3692 = vld [vmem:[%s3658 + $0x108] sm:$0xff]
        %v3693 = vld [vmem:[%s3658 + $0x110] sm:$0xff]
        %v3694 = vld [vmem:[%s3658 + $0x118] sm:$0xff]
        %v3695 = vld [vmem:[%s3658 + $0x120] sm:$0xff]
        %v3696 = vld [vmem:[%s3658 + $0x128] sm:$0xff]
        %v3697 = vld [vmem:[%s3658 + $0x130] sm:$0xff]
        %v3698 = vld [vmem:[%s3658 + $0x138] sm:$0xff]
        %v3699 = vld [vmem:[%s3658 + $0x140] sm:$0xff]
        %v3700 = vld [vmem:[%s3658 + $0x148] sm:$0xff]
        %v3701 = vld [vmem:[%s3658 + $0x150] sm:$0xff]
        %v3702 = vld [vmem:[%s3658 + $0x158] sm:$0xff]
        %v3703 = vld [vmem:[%s3658 + $0x160] sm:$0xff]
        %v3704 = vld [vmem:[%s3658 + $0x168] sm:$0xff]
        %v3705 = vld [vmem:[%s3658 + $0x170] sm:$0xff]
        %v3706 = vld [vmem:[%s3658 + $0x178] sm:$0xff]
        %v3707 = vld [vmem:[%s3658 + $0x180] sm:$0xff]
        %v3708 = vld [vmem:[%s3658 + $0x188] sm:$0xff]
        %v3709 = vld [vmem:[%s3658 + $0x190] sm:$0xff]
        %v3710 = vld [vmem:[%s3658 + $0x198] sm:$0xff]
        %v3711 = vld [vmem:[%s3658 + $0x1a0] sm:$0xff]
        %v3712 = vld [vmem:[%s3658 + $0x1a8] sm:$0xff]
        %v3713 = vld [vmem:[%s3658 + $0x1b0] sm:$0xff]
        %v3714 = vld [vmem:[%s3658 + $0x1b8] sm:$0xff]
        %v3715 = vld [vmem:[%s3658 + $0x1c0] sm:$0xff]
        %v3716 = vld [vmem:[%s3658 + $0x1c8] sm:$0xff]
        %v3717 = vld [vmem:[%s3658 + $0x1d0] sm:$0xff]
        %v3718 = vld [vmem:[%s3658 + $0x1d8] sm:$0xff]
        %v3719 = vld [vmem:[%s3658 + $0x1e0] sm:$0xff]
        %v3720 = vld [vmem:[%s3658 + $0x1e8] sm:$0xff]
        %v3721 = vld [vmem:[%s3658 + $0x1f0] sm:$0xff]
        %v3722 = vld [vmem:[%s3658 + $0x1f8] sm:$0xff]
        %v3723 = vrot.slane %v3241, 2
        %3725 = vmatprep.subr.mxu0 %v3720
        %3726 = vmatpush1.msra.mxu0 %v3719
        %3727 = vmatprep.subr.mxu0 %v3716
        %3728 = vmatpush1.msra.mxu0 %v3715
        %3729 = vmatprep.subr.mxu0 %v3712
        %3730 = vmatpush1.msra.mxu0 %v3711
        %3731 = vmatprep.subr.mxu0 %v3708
        %3732 = vmatpush1.msra.mxu0 %v3707
        %3733 = vmatprep.subr.mxu0 %v3704
        %3734 = vmatpush1.msra.mxu0 %v3703
        %3735 = vmatprep.subr.mxu0 %v3700
        %3736 = vmatpush1.msra.mxu0 %v3699
        %3737 = vmatprep.subr.mxu0 %v3696
        %3738 = vmatpush1.msra.mxu0 %v3695
        %3739 = vmatprep.subr.mxu0 %v3692
        %3740 = vmatpush1.msra.mxu0 %v3691
        %3741 = vmatprep.subr.mxu0 %v3688
        %3742 = vmatpush1.msra.mxu0 %v3687
        %3743 = vmatprep.subr.mxu0 %v3684
        %3744 = vmatpush1.msra.mxu0 %v3683
        %3745 = vmatprep.subr.mxu0 %v3680
        %3746 = vmatpush1.msra.mxu0 %v3679
        %3747 = vmatprep.subr.mxu0 %v3676
        %3748 = vmatpush1.msra.mxu0 %v3675
        %3749 = vmatprep.subr.mxu0 %v3672
        %3750 = vmatpush1.msra.mxu0 %v3671
        %3751 = vmatprep.subr.mxu0 %v3668
        %3752 = vmatpush1.msra.mxu0 %v3667
        %3753 = vmatprep.subr.mxu0 %v3664
        %3754 = vmatpush1.msra.mxu0 %v3663
        %3755 = vmatprep.subr.mxu0 %v3660
        %3756 = vmatpush1.msra.mxu0 %v3659
        %3757 = vmatprep.subr.mxu0 0.0
        %3758 = vmatpush2.msra.mxu0 0.0
        %3759 = vmatprep.subr.mxu0 0.0
        %3760 = vmatpush2.msra.mxu0 0.0
        %3761 = vmatprep.subr.mxu0 0.0
        %3762 = vmatpush2.msra.mxu0 0.0
        %3763 = vmatprep.subr.mxu0 0.0
        %3764 = vmatpush2.msra.mxu0 0.0
        %3765 = vmatprep.subr.mxu0 0.0
        %3766 = vmatpush2.msra.mxu0 0.0
        %3767 = vmatprep.subr.mxu0 0.0
        %3768 = vmatpush2.msra.mxu0 0.0
        %3769 = vmatprep.subr.mxu0 0.0
        %3770 = vmatpush2.msra.mxu0 0.0
        %3771 = vmatprep.subr.mxu0 0.0
        %3772 = vmatpush2.msra.mxu0 0.0
        %3773 = vmatprep.subr.mxu0 0.0
        %3774 = vmatpush2.msra.mxu0 0.0
        %3775 = vmatprep.subr.mxu0 0.0
        %3776 = vmatpush2.msra.mxu0 0.0
        %3777 = vmatprep.subr.mxu0 0.0
        %3778 = vmatpush2.msra.mxu0 0.0
        %3779 = vmatprep.subr.mxu0 0.0
        %3780 = vmatpush2.msra.mxu0 0.0
        %3781 = vmatprep.subr.mxu0 0.0
        %3782 = vmatpush2.msra.mxu0 0.0
        %3783 = vmatprep.subr.mxu0 0.0
        %3784 = vmatpush2.msra.mxu0 0.0
        %3785 = vmatprep.subr.mxu0 0.0
        %3786 = vmatpush2.msra.mxu0 0.0
        %3787 = vmatprep.subr.mxu0 0.0
        %3788 = vmatpush2.msra.mxu0 0.0
        %3789 = vmatprep.mubr.f32.mxu0 0.0
        %3790 = vmatmul.mubr.f32.gmra.mxu0 %v3723
        %v3791 = vpop.f32.mrf.mxu0
        %v3792 = vadd.f32 0.0, %v3791
        %v3793 = vpop.f32.mrf.mxu0
        %v3794 = vadd.f32 0.0, %v3793
        %3795 = vdwg.mxu0
        %3796 = vmatprep.subr.mxu0 %v3722
        %3797 = vmatpush1.msra.mxu0 %v3721
        %3798 = vmatprep.subr.mxu0 %v3718
        %3799 = vmatpush1.msra.mxu0 %v3717
        %3800 = vmatprep.subr.mxu0 %v3714
        %3801 = vmatpush1.msra.mxu0 %v3713
        %3802 = vmatprep.subr.mxu0 %v3710
        %3803 = vmatpush1.msra.mxu0 %v3709
        %3804 = vmatprep.subr.mxu0 %v3706
        %3805 = vmatpush1.msra.mxu0 %v3705
        %3806 = vmatprep.subr.mxu0 %v3702
        %3807 = vmatpush1.msra.mxu0 %v3701
        %3808 = vmatprep.subr.mxu0 %v3698
        %3809 = vmatpush1.msra.mxu0 %v3697
        %3810 = vmatprep.subr.mxu0 %v3694
        %3811 = vmatpush1.msra.mxu0 %v3693
        %3812 = vmatprep.subr.mxu0 %v3690
        %3813 = vmatpush1.msra.mxu0 %v3689
        %3814 = vmatprep.subr.mxu0 %v3686
        %3815 = vmatpush1.msra.mxu0 %v3685
        %3816 = vmatprep.subr.mxu0 %v3682
        %3817 = vmatpush1.msra.mxu0 %v3681
        %3818 = vmatprep.subr.mxu0 %v3678
        %3819 = vmatpush1.msra.mxu0 %v3677
        %3820 = vmatprep.subr.mxu0 %v3674
        %3821 = vmatpush1.msra.mxu0 %v3673
        %3822 = vmatprep.subr.mxu0 %v3670
        %3823 = vmatpush1.msra.mxu0 %v3669
        %3824 = vmatprep.subr.mxu0 %v3666
        %3825 = vmatpush1.msra.mxu0 %v3665
        %3826 = vmatprep.subr.mxu0 %v3662
        %3827 = vmatpush1.msra.mxu0 %v3661
        %3828 = vmatprep.subr.mxu0 0.0
        %3829 = vmatpush2.msra.mxu0 0.0
        %3830 = vmatprep.subr.mxu0 0.0
        %3831 = vmatpush2.msra.mxu0 0.0
        %3832 = vmatprep.subr.mxu0 0.0
        %3833 = vmatpush2.msra.mxu0 0.0
        %3834 = vmatprep.subr.mxu0 0.0
        %3835 = vmatpush2.msra.mxu0 0.0
        %3836 = vmatprep.subr.mxu0 0.0
        %3837 = vmatpush2.msra.mxu0 0.0
        %3838 = vmatprep.subr.mxu0 0.0
        %3839 = vmatpush2.msra.mxu0 0.0
        %3840 = vmatprep.subr.mxu0 0.0
        %3841 = vmatpush2.msra.mxu0 0.0
        %3842 = vmatprep.subr.mxu0 0.0
        %3843 = vmatpush2.msra.mxu0 0.0
        %3844 = vmatprep.subr.mxu0 0.0
        %3845 = vmatpush2.msra.mxu0 0.0
        %3846 = vmatprep.subr.mxu0 0.0
        %3847 = vmatpush2.msra.mxu0 0.0
        %3848 = vmatprep.subr.mxu0 0.0
        %3849 = vmatpush2.msra.mxu0 0.0
        %3850 = vmatprep.subr.mxu0 0.0
        %3851 = vmatpush2.msra.mxu0 0.0
        %3852 = vmatprep.subr.mxu0 0.0
        %3853 = vmatpush2.msra.mxu0 0.0
        %3854 = vmatprep.subr.mxu0 0.0
        %3855 = vmatpush2.msra.mxu0 0.0
        %3856 = vmatprep.subr.mxu0 0.0
        %3857 = vmatpush2.msra.mxu0 0.0
        %3858 = vmatprep.subr.mxu0 0.0
        %3859 = vmatpush2.msra.mxu0 0.0
        %3860 = vmatprep.mubr.f32.mxu0 0.0
        %3861 = vmatmul.mubr.f32.gmra.mxu0 %v3723
        %v3862 = vpop.f32.mrf.mxu0
        %v3863 = vadd.f32 0.0, %v3862
        %v3864 = vpop.f32.mrf.mxu0
        %v3865 = vadd.f32 0.0, %v3864
        %3866 = vdwg.mxu0
        %v3867 = vadd.f32 %v3583, %v3792
        %v3868 = vadd.f32 %v3585, %v3794
        %v3869 = vadd.f32 %v3654, %v3863
        %v3870 = vadd.f32 %v3656, %v3865
        %s3871 = scalar_lea.vmem [#allocation19], 1536
        %v3872 = vld [vmem:[%s3871] sm:$0xff]
        %v3873 = vld [vmem:[%s3871 + $0x8] sm:$0xff]
        %v3874 = vld [vmem:[%s3871 + $0x10] sm:$0xff]
        %v3875 = vld [vmem:[%s3871 + $0x18] sm:$0xff]
        %v3876 = vld [vmem:[%s3871 + $0x20] sm:$0xff]
        %v3877 = vld [vmem:[%s3871 + $0x28] sm:$0xff]
        %v3878 = vld [vmem:[%s3871 + $0x30] sm:$0xff]
        %v3879 = vld [vmem:[%s3871 + $0x38] sm:$0xff]
        %v3880 = vld [vmem:[%s3871 + $0x40] sm:$0xff]
        %v3881 = vld [vmem:[%s3871 + $0x48] sm:$0xff]
        %v3882 = vld [vmem:[%s3871 + $0x50] sm:$0xff]
        %v3883 = vld [vmem:[%s3871 + $0x58] sm:$0xff]
        %v3884 = vld [vmem:[%s3871 + $0x60] sm:$0xff]
        %v3885 = vld [vmem:[%s3871 + $0x68] sm:$0xff]
        %v3886 = vld [vmem:[%s3871 + $0x70] sm:$0xff]
        %v3887 = vld [vmem:[%s3871 + $0x78] sm:$0xff]
        %v3888 = vld [vmem:[%s3871 + $0x80] sm:$0xff]
        %v3889 = vld [vmem:[%s3871 + $0x88] sm:$0xff]
        %v3890 = vld [vmem:[%s3871 + $0x90] sm:$0xff]
        %v3891 = vld [vmem:[%s3871 + $0x98] sm:$0xff]
        %v3892 = vld [vmem:[%s3871 + $0xa0] sm:$0xff]
        %v3893 = vld [vmem:[%s3871 + $0xa8] sm:$0xff]
        %v3894 = vld [vmem:[%s3871 + $0xb0] sm:$0xff]
        %v3895 = vld [vmem:[%s3871 + $0xb8] sm:$0xff]
        %v3896 = vld [vmem:[%s3871 + $0xc0] sm:$0xff]
        %v3897 = vld [vmem:[%s3871 + $0xc8] sm:$0xff]
        %v3898 = vld [vmem:[%s3871 + $0xd0] sm:$0xff]
        %v3899 = vld [vmem:[%s3871 + $0xd8] sm:$0xff]
        %v3900 = vld [vmem:[%s3871 + $0xe0] sm:$0xff]
        %v3901 = vld [vmem:[%s3871 + $0xe8] sm:$0xff]
        %v3902 = vld [vmem:[%s3871 + $0xf0] sm:$0xff]
        %v3903 = vld [vmem:[%s3871 + $0xf8] sm:$0xff]
        %v3904 = vld [vmem:[%s3871 + $0x100] sm:$0xff]
        %v3905 = vld [vmem:[%s3871 + $0x108] sm:$0xff]
        %v3906 = vld [vmem:[%s3871 + $0x110] sm:$0xff]
        %v3907 = vld [vmem:[%s3871 + $0x118] sm:$0xff]
        %v3908 = vld [vmem:[%s3871 + $0x120] sm:$0xff]
        %v3909 = vld [vmem:[%s3871 + $0x128] sm:$0xff]
        %v3910 = vld [vmem:[%s3871 + $0x130] sm:$0xff]
        %v3911 = vld [vmem:[%s3871 + $0x138] sm:$0xff]
        %v3912 = vld [vmem:[%s3871 + $0x140] sm:$0xff]
        %v3913 = vld [vmem:[%s3871 + $0x148] sm:$0xff]
        %v3914 = vld [vmem:[%s3871 + $0x150] sm:$0xff]
        %v3915 = vld [vmem:[%s3871 + $0x158] sm:$0xff]
        %v3916 = vld [vmem:[%s3871 + $0x160] sm:$0xff]
        %v3917 = vld [vmem:[%s3871 + $0x168] sm:$0xff]
        %v3918 = vld [vmem:[%s3871 + $0x170] sm:$0xff]
        %v3919 = vld [vmem:[%s3871 + $0x178] sm:$0xff]
        %v3920 = vld [vmem:[%s3871 + $0x180] sm:$0xff]
        %v3921 = vld [vmem:[%s3871 + $0x188] sm:$0xff]
        %v3922 = vld [vmem:[%s3871 + $0x190] sm:$0xff]
        %v3923 = vld [vmem:[%s3871 + $0x198] sm:$0xff]
        %v3924 = vld [vmem:[%s3871 + $0x1a0] sm:$0xff]
        %v3925 = vld [vmem:[%s3871 + $0x1a8] sm:$0xff]
        %v3926 = vld [vmem:[%s3871 + $0x1b0] sm:$0xff]
        %v3927 = vld [vmem:[%s3871 + $0x1b8] sm:$0xff]
        %v3928 = vld [vmem:[%s3871 + $0x1c0] sm:$0xff]
        %v3929 = vld [vmem:[%s3871 + $0x1c8] sm:$0xff]
        %v3930 = vld [vmem:[%s3871 + $0x1d0] sm:$0xff]
        %v3931 = vld [vmem:[%s3871 + $0x1d8] sm:$0xff]
        %v3932 = vld [vmem:[%s3871 + $0x1e0] sm:$0xff]
        %v3933 = vld [vmem:[%s3871 + $0x1e8] sm:$0xff]
        %v3934 = vld [vmem:[%s3871 + $0x1f0] sm:$0xff]
        %v3935 = vld [vmem:[%s3871 + $0x1f8] sm:$0xff]
        %v3936 = vrot.slane %v3241, 3
        %3938 = vmatprep.subr.mxu0 %v3933
        %3939 = vmatpush1.msra.mxu0 %v3932
        %3940 = vmatprep.subr.mxu0 %v3929
        %3941 = vmatpush1.msra.mxu0 %v3928
        %3942 = vmatprep.subr.mxu0 %v3925
        %3943 = vmatpush1.msra.mxu0 %v3924
        %3944 = vmatprep.subr.mxu0 %v3921
        %3945 = vmatpush1.msra.mxu0 %v3920
        %3946 = vmatprep.subr.mxu0 %v3917
        %3947 = vmatpush1.msra.mxu0 %v3916
        %3948 = vmatprep.subr.mxu0 %v3913
        %3949 = vmatpush1.msra.mxu0 %v3912
        %3950 = vmatprep.subr.mxu0 %v3909
        %3951 = vmatpush1.msra.mxu0 %v3908
        %3952 = vmatprep.subr.mxu0 %v3905
        %3953 = vmatpush1.msra.mxu0 %v3904
        %3954 = vmatprep.subr.mxu0 %v3901
        %3955 = vmatpush1.msra.mxu0 %v3900
        %3956 = vmatprep.subr.mxu0 %v3897
        %3957 = vmatpush1.msra.mxu0 %v3896
        %3958 = vmatprep.subr.mxu0 %v3893
        %3959 = vmatpush1.msra.mxu0 %v3892
        %3960 = vmatprep.subr.mxu0 %v3889
        %3961 = vmatpush1.msra.mxu0 %v3888
        %3962 = vmatprep.subr.mxu0 %v3885
        %3963 = vmatpush1.msra.mxu0 %v3884
        %3964 = vmatprep.subr.mxu0 %v3881
        %3965 = vmatpush1.msra.mxu0 %v3880
        %3966 = vmatprep.subr.mxu0 %v3877
        %3967 = vmatpush1.msra.mxu0 %v3876
        %3968 = vmatprep.subr.mxu0 %v3873
        %3969 = vmatpush1.msra.mxu0 %v3872
        %3970 = vmatprep.subr.mxu0 0.0
        %3971 = vmatpush2.msra.mxu0 0.0
        %3972 = vmatprep.subr.mxu0 0.0
        %3973 = vmatpush2.msra.mxu0 0.0
        %3974 = vmatprep.subr.mxu0 0.0
        %3975 = vmatpush2.msra.mxu0 0.0
        %3976 = vmatprep.subr.mxu0 0.0
        %3977 = vmatpush2.msra.mxu0 0.0
        %3978 = vmatprep.subr.mxu0 0.0
        %3979 = vmatpush2.msra.mxu0 0.0
        %3980 = vmatprep.subr.mxu0 0.0
        %3981 = vmatpush2.msra.mxu0 0.0
        %3982 = vmatprep.subr.mxu0 0.0
        %3983 = vmatpush2.msra.mxu0 0.0
        %3984 = vmatprep.subr.mxu0 0.0
        %3985 = vmatpush2.msra.mxu0 0.0
        %3986 = vmatprep.subr.mxu0 0.0
        %3987 = vmatpush2.msra.mxu0 0.0
        %3988 = vmatprep.subr.mxu0 0.0
        %3989 = vmatpush2.msra.mxu0 0.0
        %3990 = vmatprep.subr.mxu0 0.0
        %3991 = vmatpush2.msra.mxu0 0.0
        %3992 = vmatprep.subr.mxu0 0.0
        %3993 = vmatpush2.msra.mxu0 0.0
        %3994 = vmatprep.subr.mxu0 0.0
        %3995 = vmatpush2.msra.mxu0 0.0
        %3996 = vmatprep.subr.mxu0 0.0
        %3997 = vmatpush2.msra.mxu0 0.0
        %3998 = vmatprep.subr.mxu0 0.0
        %3999 = vmatpush2.msra.mxu0 0.0
        %4000 = vmatprep.subr.mxu0 0.0
        %4001 = vmatpush2.msra.mxu0 0.0
        %4002 = vmatprep.mubr.f32.mxu0 0.0
        %4003 = vmatmul.mubr.f32.gmra.mxu0 %v3936
        %v4004 = vpop.f32.mrf.mxu0
        %v4005 = vadd.f32 0.0, %v4004
        %v4006 = vpop.f32.mrf.mxu0
        %v4007 = vadd.f32 0.0, %v4006
        %4008 = vdwg.mxu0
        %4009 = vmatprep.subr.mxu0 %v3935
        %4010 = vmatpush1.msra.mxu0 %v3934
        %4011 = vmatprep.subr.mxu0 %v3931
        %4012 = vmatpush1.msra.mxu0 %v3930
        %4013 = vmatprep.subr.mxu0 %v3927
        %4014 = vmatpush1.msra.mxu0 %v3926
        %4015 = vmatprep.subr.mxu0 %v3923
        %4016 = vmatpush1.msra.mxu0 %v3922
        %4017 = vmatprep.subr.mxu0 %v3919
        %4018 = vmatpush1.msra.mxu0 %v3918
        %4019 = vmatprep.subr.mxu0 %v3915
        %4020 = vmatpush1.msra.mxu0 %v3914
        %4021 = vmatprep.subr.mxu0 %v3911
        %4022 = vmatpush1.msra.mxu0 %v3910
        %4023 = vmatprep.subr.mxu0 %v3907
        %4024 = vmatpush1.msra.mxu0 %v3906
        %4025 = vmatprep.subr.mxu0 %v3903
        %4026 = vmatpush1.msra.mxu0 %v3902
        %4027 = vmatprep.subr.mxu0 %v3899
        %4028 = vmatpush1.msra.mxu0 %v3898
        %4029 = vmatprep.subr.mxu0 %v3895
        %4030 = vmatpush1.msra.mxu0 %v3894
        %4031 = vmatprep.subr.mxu0 %v3891
        %4032 = vmatpush1.msra.mxu0 %v3890
        %4033 = vmatprep.subr.mxu0 %v3887
        %4034 = vmatpush1.msra.mxu0 %v3886
        %4035 = vmatprep.subr.mxu0 %v3883
        %4036 = vmatpush1.msra.mxu0 %v3882
        %4037 = vmatprep.subr.mxu0 %v3879
        %4038 = vmatpush1.msra.mxu0 %v3878
        %4039 = vmatprep.subr.mxu0 %v3875
        %4040 = vmatpush1.msra.mxu0 %v3874
        %4041 = vmatprep.subr.mxu0 0.0
        %4042 = vmatpush2.msra.mxu0 0.0
        %4043 = vmatprep.subr.mxu0 0.0
        %4044 = vmatpush2.msra.mxu0 0.0
        %4045 = vmatprep.subr.mxu0 0.0
        %4046 = vmatpush2.msra.mxu0 0.0
        %4047 = vmatprep.subr.mxu0 0.0
        %4048 = vmatpush2.msra.mxu0 0.0
        %4049 = vmatprep.subr.mxu0 0.0
        %4050 = vmatpush2.msra.mxu0 0.0
        %4051 = vmatprep.subr.mxu0 0.0
        %4052 = vmatpush2.msra.mxu0 0.0
        %4053 = vmatprep.subr.mxu0 0.0
        %4054 = vmatpush2.msra.mxu0 0.0
        %4055 = vmatprep.subr.mxu0 0.0
        %4056 = vmatpush2.msra.mxu0 0.0
        %4057 = vmatprep.subr.mxu0 0.0
        %4058 = vmatpush2.msra.mxu0 0.0
        %4059 = vmatprep.subr.mxu0 0.0
        %4060 = vmatpush2.msra.mxu0 0.0
        %4061 = vmatprep.subr.mxu0 0.0
        %4062 = vmatpush2.msra.mxu0 0.0
        %4063 = vmatprep.subr.mxu0 0.0
        %4064 = vmatpush2.msra.mxu0 0.0
        %4065 = vmatprep.subr.mxu0 0.0
        %4066 = vmatpush2.msra.mxu0 0.0
        %4067 = vmatprep.subr.mxu0 0.0
        %4068 = vmatpush2.msra.mxu0 0.0
        %4069 = vmatprep.subr.mxu0 0.0
        %4070 = vmatpush2.msra.mxu0 0.0
        %4071 = vmatprep.subr.mxu0 0.0
        %4072 = vmatpush2.msra.mxu0 0.0
        %4073 = vmatprep.mubr.f32.mxu0 0.0
        %4074 = vmatmul.mubr.f32.gmra.mxu0 %v3936
        %v4075 = vpop.f32.mrf.mxu0
        %v4076 = vadd.f32 0.0, %v4075
        %v4077 = vpop.f32.mrf.mxu0
        %v4078 = vadd.f32 0.0, %v4077
        %4079 = vdwg.mxu0
        %v4080 = vadd.f32 %v3867, %v4005
        %v4081 = vadd.f32 %v3868, %v4007
        %v4082 = vadd.f32 %v3869, %v4076
        %v4083 = vadd.f32 %v3870, %v4078
        %s4084 = scalar_lea.vmem [#allocation19], 2048
        %v4085 = vld [vmem:[%s4084] sm:$0xff]
        %v4086 = vld [vmem:[%s4084 + $0x8] sm:$0xff]
        %v4087 = vld [vmem:[%s4084 + $0x10] sm:$0xff]
        %v4088 = vld [vmem:[%s4084 + $0x18] sm:$0xff]
        %v4089 = vld [vmem:[%s4084 + $0x20] sm:$0xff]
        %v4090 = vld [vmem:[%s4084 + $0x28] sm:$0xff]
        %v4091 = vld [vmem:[%s4084 + $0x30] sm:$0xff]
        %v4092 = vld [vmem:[%s4084 + $0x38] sm:$0xff]
        %v4093 = vld [vmem:[%s4084 + $0x40] sm:$0xff]
        %v4094 = vld [vmem:[%s4084 + $0x48] sm:$0xff]
        %v4095 = vld [vmem:[%s4084 + $0x50] sm:$0xff]
        %v4096 = vld [vmem:[%s4084 + $0x58] sm:$0xff]
        %v4097 = vld [vmem:[%s4084 + $0x60] sm:$0xff]
        %v4098 = vld [vmem:[%s4084 + $0x68] sm:$0xff]
        %v4099 = vld [vmem:[%s4084 + $0x70] sm:$0xff]
        %v4100 = vld [vmem:[%s4084 + $0x78] sm:$0xff]
        %v4101 = vld [vmem:[%s4084 + $0x80] sm:$0xff]
        %v4102 = vld [vmem:[%s4084 + $0x88] sm:$0xff]
        %v4103 = vld [vmem:[%s4084 + $0x90] sm:$0xff]
        %v4104 = vld [vmem:[%s4084 + $0x98] sm:$0xff]
        %v4105 = vld [vmem:[%s4084 + $0xa0] sm:$0xff]
        %v4106 = vld [vmem:[%s4084 + $0xa8] sm:$0xff]
        %v4107 = vld [vmem:[%s4084 + $0xb0] sm:$0xff]
        %v4108 = vld [vmem:[%s4084 + $0xb8] sm:$0xff]
        %v4109 = vld [vmem:[%s4084 + $0xc0] sm:$0xff]
        %v4110 = vld [vmem:[%s4084 + $0xc8] sm:$0xff]
        %v4111 = vld [vmem:[%s4084 + $0xd0] sm:$0xff]
        %v4112 = vld [vmem:[%s4084 + $0xd8] sm:$0xff]
        %v4113 = vld [vmem:[%s4084 + $0xe0] sm:$0xff]
        %v4114 = vld [vmem:[%s4084 + $0xe8] sm:$0xff]
        %v4115 = vld [vmem:[%s4084 + $0xf0] sm:$0xff]
        %v4116 = vld [vmem:[%s4084 + $0xf8] sm:$0xff]
        %v4117 = vld [vmem:[%s4084 + $0x100] sm:$0xff]
        %v4118 = vld [vmem:[%s4084 + $0x108] sm:$0xff]
        %v4119 = vld [vmem:[%s4084 + $0x110] sm:$0xff]
        %v4120 = vld [vmem:[%s4084 + $0x118] sm:$0xff]
        %v4121 = vld [vmem:[%s4084 + $0x120] sm:$0xff]
        %v4122 = vld [vmem:[%s4084 + $0x128] sm:$0xff]
        %v4123 = vld [vmem:[%s4084 + $0x130] sm:$0xff]
        %v4124 = vld [vmem:[%s4084 + $0x138] sm:$0xff]
        %v4125 = vld [vmem:[%s4084 + $0x140] sm:$0xff]
        %v4126 = vld [vmem:[%s4084 + $0x148] sm:$0xff]
        %v4127 = vld [vmem:[%s4084 + $0x150] sm:$0xff]
        %v4128 = vld [vmem:[%s4084 + $0x158] sm:$0xff]
        %v4129 = vld [vmem:[%s4084 + $0x160] sm:$0xff]
        %v4130 = vld [vmem:[%s4084 + $0x168] sm:$0xff]
        %v4131 = vld [vmem:[%s4084 + $0x170] sm:$0xff]
        %v4132 = vld [vmem:[%s4084 + $0x178] sm:$0xff]
        %v4133 = vld [vmem:[%s4084 + $0x180] sm:$0xff]
        %v4134 = vld [vmem:[%s4084 + $0x188] sm:$0xff]
        %v4135 = vld [vmem:[%s4084 + $0x190] sm:$0xff]
        %v4136 = vld [vmem:[%s4084 + $0x198] sm:$0xff]
        %v4137 = vld [vmem:[%s4084 + $0x1a0] sm:$0xff]
        %v4138 = vld [vmem:[%s4084 + $0x1a8] sm:$0xff]
        %v4139 = vld [vmem:[%s4084 + $0x1b0] sm:$0xff]
        %v4140 = vld [vmem:[%s4084 + $0x1b8] sm:$0xff]
        %v4141 = vld [vmem:[%s4084 + $0x1c0] sm:$0xff]
        %v4142 = vld [vmem:[%s4084 + $0x1c8] sm:$0xff]
        %v4143 = vld [vmem:[%s4084 + $0x1d0] sm:$0xff]
        %v4144 = vld [vmem:[%s4084 + $0x1d8] sm:$0xff]
        %v4145 = vld [vmem:[%s4084 + $0x1e0] sm:$0xff]
        %v4146 = vld [vmem:[%s4084 + $0x1e8] sm:$0xff]
        %v4147 = vld [vmem:[%s4084 + $0x1f0] sm:$0xff]
        %v4148 = vld [vmem:[%s4084 + $0x1f8] sm:$0xff]
        %v4149 = vrot.slane %v3241, 4
        %4151 = vmatprep.subr.mxu0 %v4146
        %4152 = vmatpush1.msra.mxu0 %v4145
        %4153 = vmatprep.subr.mxu0 %v4142
        %4154 = vmatpush1.msra.mxu0 %v4141
        %4155 = vmatprep.subr.mxu0 %v4138
        %4156 = vmatpush1.msra.mxu0 %v4137
        %4157 = vmatprep.subr.mxu0 %v4134
        %4158 = vmatpush1.msra.mxu0 %v4133
        %4159 = vmatprep.subr.mxu0 %v4130
        %4160 = vmatpush1.msra.mxu0 %v4129
        %4161 = vmatprep.subr.mxu0 %v4126
        %4162 = vmatpush1.msra.mxu0 %v4125
        %4163 = vmatprep.subr.mxu0 %v4122
        %4164 = vmatpush1.msra.mxu0 %v4121
        %4165 = vmatprep.subr.mxu0 %v4118
        %4166 = vmatpush1.msra.mxu0 %v4117
        %4167 = vmatprep.subr.mxu0 %v4114
        %4168 = vmatpush1.msra.mxu0 %v4113
        %4169 = vmatprep.subr.mxu0 %v4110
        %4170 = vmatpush1.msra.mxu0 %v4109
        %4171 = vmatprep.subr.mxu0 %v4106
        %4172 = vmatpush1.msra.mxu0 %v4105
        %4173 = vmatprep.subr.mxu0 %v4102
        %4174 = vmatpush1.msra.mxu0 %v4101
        %4175 = vmatprep.subr.mxu0 %v4098
        %4176 = vmatpush1.msra.mxu0 %v4097
        %4177 = vmatprep.subr.mxu0 %v4094
        %4178 = vmatpush1.msra.mxu0 %v4093
        %4179 = vmatprep.subr.mxu0 %v4090
        %4180 = vmatpush1.msra.mxu0 %v4089
        %4181 = vmatprep.subr.mxu0 %v4086
        %4182 = vmatpush1.msra.mxu0 %v4085
        %4183 = vmatprep.subr.mxu0 0.0
        %4184 = vmatpush2.msra.mxu0 0.0
        %4185 = vmatprep.subr.mxu0 0.0
        %4186 = vmatpush2.msra.mxu0 0.0
        %4187 = vmatprep.subr.mxu0 0.0
        %4188 = vmatpush2.msra.mxu0 0.0
        %4189 = vmatprep.subr.mxu0 0.0
        %4190 = vmatpush2.msra.mxu0 0.0
        %4191 = vmatprep.subr.mxu0 0.0
        %4192 = vmatpush2.msra.mxu0 0.0
        %4193 = vmatprep.subr.mxu0 0.0
        %4194 = vmatpush2.msra.mxu0 0.0
        %4195 = vmatprep.subr.mxu0 0.0
        %4196 = vmatpush2.msra.mxu0 0.0
        %4197 = vmatprep.subr.mxu0 0.0
        %4198 = vmatpush2.msra.mxu0 0.0
        %4199 = vmatprep.subr.mxu0 0.0
        %4200 = vmatpush2.msra.mxu0 0.0
        %4201 = vmatprep.subr.mxu0 0.0
        %4202 = vmatpush2.msra.mxu0 0.0
        %4203 = vmatprep.subr.mxu0 0.0
        %4204 = vmatpush2.msra.mxu0 0.0
        %4205 = vmatprep.subr.mxu0 0.0
        %4206 = vmatpush2.msra.mxu0 0.0
        %4207 = vmatprep.subr.mxu0 0.0
        %4208 = vmatpush2.msra.mxu0 0.0
        %4209 = vmatprep.subr.mxu0 0.0
        %4210 = vmatpush2.msra.mxu0 0.0
        %4211 = vmatprep.subr.mxu0 0.0
        %4212 = vmatpush2.msra.mxu0 0.0
        %4213 = vmatprep.subr.mxu0 0.0
        %4214 = vmatpush2.msra.mxu0 0.0
        %4215 = vmatprep.mubr.f32.mxu0 0.0
        %4216 = vmatmul.mubr.f32.gmra.mxu0 %v4149
        %v4217 = vpop.f32.mrf.mxu0
        %v4218 = vadd.f32 0.0, %v4217
        %v4219 = vpop.f32.mrf.mxu0
        %v4220 = vadd.f32 0.0, %v4219
        %4221 = vdwg.mxu0
        %4222 = vmatprep.subr.mxu0 %v4148
        %4223 = vmatpush1.msra.mxu0 %v4147
        %4224 = vmatprep.subr.mxu0 %v4144
        %4225 = vmatpush1.msra.mxu0 %v4143
        %4226 = vmatprep.subr.mxu0 %v4140
        %4227 = vmatpush1.msra.mxu0 %v4139
        %4228 = vmatprep.subr.mxu0 %v4136
        %4229 = vmatpush1.msra.mxu0 %v4135
        %4230 = vmatprep.subr.mxu0 %v4132
        %4231 = vmatpush1.msra.mxu0 %v4131
        %4232 = vmatprep.subr.mxu0 %v4128
        %4233 = vmatpush1.msra.mxu0 %v4127
        %4234 = vmatprep.subr.mxu0 %v4124
        %4235 = vmatpush1.msra.mxu0 %v4123
        %4236 = vmatprep.subr.mxu0 %v4120
        %4237 = vmatpush1.msra.mxu0 %v4119
        %4238 = vmatprep.subr.mxu0 %v4116
        %4239 = vmatpush1.msra.mxu0 %v4115
        %4240 = vmatprep.subr.mxu0 %v4112
        %4241 = vmatpush1.msra.mxu0 %v4111
        %4242 = vmatprep.subr.mxu0 %v4108
        %4243 = vmatpush1.msra.mxu0 %v4107
        %4244 = vmatprep.subr.mxu0 %v4104
        %4245 = vmatpush1.msra.mxu0 %v4103
        %4246 = vmatprep.subr.mxu0 %v4100
        %4247 = vmatpush1.msra.mxu0 %v4099
        %4248 = vmatprep.subr.mxu0 %v4096
        %4249 = vmatpush1.msra.mxu0 %v4095
        %4250 = vmatprep.subr.mxu0 %v4092
        %4251 = vmatpush1.msra.mxu0 %v4091
        %4252 = vmatprep.subr.mxu0 %v4088
        %4253 = vmatpush1.msra.mxu0 %v4087
        %4254 = vmatprep.subr.mxu0 0.0
        %4255 = vmatpush2.msra.mxu0 0.0
        %4256 = vmatprep.subr.mxu0 0.0
        %4257 = vmatpush2.msra.mxu0 0.0
        %4258 = vmatprep.subr.mxu0 0.0
        %4259 = vmatpush2.msra.mxu0 0.0
        %4260 = vmatprep.subr.mxu0 0.0
        %4261 = vmatpush2.msra.mxu0 0.0
        %4262 = vmatprep.subr.mxu0 0.0
        %4263 = vmatpush2.msra.mxu0 0.0
        %4264 = vmatprep.subr.mxu0 0.0
        %4265 = vmatpush2.msra.mxu0 0.0
        %4266 = vmatprep.subr.mxu0 0.0
        %4267 = vmatpush2.msra.mxu0 0.0
        %4268 = vmatprep.subr.mxu0 0.0
        %4269 = vmatpush2.msra.mxu0 0.0
        %4270 = vmatprep.subr.mxu0 0.0
        %4271 = vmatpush2.msra.mxu0 0.0
        %4272 = vmatprep.subr.mxu0 0.0
        %4273 = vmatpush2.msra.mxu0 0.0
        %4274 = vmatprep.subr.mxu0 0.0
        %4275 = vmatpush2.msra.mxu0 0.0
        %4276 = vmatprep.subr.mxu0 0.0
        %4277 = vmatpush2.msra.mxu0 0.0
        %4278 = vmatprep.subr.mxu0 0.0
        %4279 = vmatpush2.msra.mxu0 0.0
        %4280 = vmatprep.subr.mxu0 0.0
        %4281 = vmatpush2.msra.mxu0 0.0
        %4282 = vmatprep.subr.mxu0 0.0
        %4283 = vmatpush2.msra.mxu0 0.0
        %4284 = vmatprep.subr.mxu0 0.0
        %4285 = vmatpush2.msra.mxu0 0.0
        %4286 = vmatprep.mubr.f32.mxu0 0.0
        %4287 = vmatmul.mubr.f32.gmra.mxu0 %v4149
        %v4288 = vpop.f32.mrf.mxu0
        %v4289 = vadd.f32 0.0, %v4288
        %v4290 = vpop.f32.mrf.mxu0
        %v4291 = vadd.f32 0.0, %v4290
        %4292 = vdwg.mxu0
        %v4293 = vadd.f32 %v4080, %v4218
        %v4294 = vadd.f32 %v4081, %v4220
        %v4295 = vadd.f32 %v4082, %v4289
        %v4296 = vadd.f32 %v4083, %v4291
        %s4297 = scalar_lea.vmem [#allocation19], 2560
        %v4298 = vld [vmem:[%s4297] sm:$0xff]
        %v4299 = vld [vmem:[%s4297 + $0x8] sm:$0xff]
        %v4300 = vld [vmem:[%s4297 + $0x10] sm:$0xff]
        %v4301 = vld [vmem:[%s4297 + $0x18] sm:$0xff]
        %v4302 = vld [vmem:[%s4297 + $0x20] sm:$0xff]
        %v4303 = vld [vmem:[%s4297 + $0x28] sm:$0xff]
        %v4304 = vld [vmem:[%s4297 + $0x30] sm:$0xff]
        %v4305 = vld [vmem:[%s4297 + $0x38] sm:$0xff]
        %v4306 = vld [vmem:[%s4297 + $0x40] sm:$0xff]
        %v4307 = vld [vmem:[%s4297 + $0x48] sm:$0xff]
        %v4308 = vld [vmem:[%s4297 + $0x50] sm:$0xff]
        %v4309 = vld [vmem:[%s4297 + $0x58] sm:$0xff]
        %v4310 = vld [vmem:[%s4297 + $0x60] sm:$0xff]
        %v4311 = vld [vmem:[%s4297 + $0x68] sm:$0xff]
        %v4312 = vld [vmem:[%s4297 + $0x70] sm:$0xff]
        %v4313 = vld [vmem:[%s4297 + $0x78] sm:$0xff]
        %v4314 = vld [vmem:[%s4297 + $0x80] sm:$0xff]
        %v4315 = vld [vmem:[%s4297 + $0x88] sm:$0xff]
        %v4316 = vld [vmem:[%s4297 + $0x90] sm:$0xff]
        %v4317 = vld [vmem:[%s4297 + $0x98] sm:$0xff]
        %v4318 = vld [vmem:[%s4297 + $0xa0] sm:$0xff]
        %v4319 = vld [vmem:[%s4297 + $0xa8] sm:$0xff]
        %v4320 = vld [vmem:[%s4297 + $0xb0] sm:$0xff]
        %v4321 = vld [vmem:[%s4297 + $0xb8] sm:$0xff]
        %v4322 = vld [vmem:[%s4297 + $0xc0] sm:$0xff]
        %v4323 = vld [vmem:[%s4297 + $0xc8] sm:$0xff]
        %v4324 = vld [vmem:[%s4297 + $0xd0] sm:$0xff]
        %v4325 = vld [vmem:[%s4297 + $0xd8] sm:$0xff]
        %v4326 = vld [vmem:[%s4297 + $0xe0] sm:$0xff]
        %v4327 = vld [vmem:[%s4297 + $0xe8] sm:$0xff]
        %v4328 = vld [vmem:[%s4297 + $0xf0] sm:$0xff]
        %v4329 = vld [vmem:[%s4297 + $0xf8] sm:$0xff]
        %v4330 = vld [vmem:[%s4297 + $0x100] sm:$0xff]
        %v4331 = vld [vmem:[%s4297 + $0x108] sm:$0xff]
        %v4332 = vld [vmem:[%s4297 + $0x110] sm:$0xff]
        %v4333 = vld [vmem:[%s4297 + $0x118] sm:$0xff]
        %v4334 = vld [vmem:[%s4297 + $0x120] sm:$0xff]
        %v4335 = vld [vmem:[%s4297 + $0x128] sm:$0xff]
        %v4336 = vld [vmem:[%s4297 + $0x130] sm:$0xff]
        %v4337 = vld [vmem:[%s4297 + $0x138] sm:$0xff]
        %v4338 = vld [vmem:[%s4297 + $0x140] sm:$0xff]
        %v4339 = vld [vmem:[%s4297 + $0x148] sm:$0xff]
        %v4340 = vld [vmem:[%s4297 + $0x150] sm:$0xff]
        %v4341 = vld [vmem:[%s4297 + $0x158] sm:$0xff]
        %v4342 = vld [vmem:[%s4297 + $0x160] sm:$0xff]
        %v4343 = vld [vmem:[%s4297 + $0x168] sm:$0xff]
        %v4344 = vld [vmem:[%s4297 + $0x170] sm:$0xff]
        %v4345 = vld [vmem:[%s4297 + $0x178] sm:$0xff]
        %v4346 = vld [vmem:[%s4297 + $0x180] sm:$0xff]
        %v4347 = vld [vmem:[%s4297 + $0x188] sm:$0xff]
        %v4348 = vld [vmem:[%s4297 + $0x190] sm:$0xff]
        %v4349 = vld [vmem:[%s4297 + $0x198] sm:$0xff]
        %v4350 = vld [vmem:[%s4297 + $0x1a0] sm:$0xff]
        %v4351 = vld [vmem:[%s4297 + $0x1a8] sm:$0xff]
        %v4352 = vld [vmem:[%s4297 + $0x1b0] sm:$0xff]
        %v4353 = vld [vmem:[%s4297 + $0x1b8] sm:$0xff]
        %v4354 = vld [vmem:[%s4297 + $0x1c0] sm:$0xff]
        %v4355 = vld [vmem:[%s4297 + $0x1c8] sm:$0xff]
        %v4356 = vld [vmem:[%s4297 + $0x1d0] sm:$0xff]
        %v4357 = vld [vmem:[%s4297 + $0x1d8] sm:$0xff]
        %v4358 = vld [vmem:[%s4297 + $0x1e0] sm:$0xff]
        %v4359 = vld [vmem:[%s4297 + $0x1e8] sm:$0xff]
        %v4360 = vld [vmem:[%s4297 + $0x1f0] sm:$0xff]
        %v4361 = vld [vmem:[%s4297 + $0x1f8] sm:$0xff]
        %v4362 = vrot.slane %v3241, 5
        %4364 = vmatprep.subr.mxu0 %v4359
        %4365 = vmatpush1.msra.mxu0 %v4358
        %4366 = vmatprep.subr.mxu0 %v4355
        %4367 = vmatpush1.msra.mxu0 %v4354
        %4368 = vmatprep.subr.mxu0 %v4351
        %4369 = vmatpush1.msra.mxu0 %v4350
        %4370 = vmatprep.subr.mxu0 %v4347
        %4371 = vmatpush1.msra.mxu0 %v4346
        %4372 = vmatprep.subr.mxu0 %v4343
        %4373 = vmatpush1.msra.mxu0 %v4342
        %4374 = vmatprep.subr.mxu0 %v4339
        %4375 = vmatpush1.msra.mxu0 %v4338
        %4376 = vmatprep.subr.mxu0 %v4335
        %4377 = vmatpush1.msra.mxu0 %v4334
        %4378 = vmatprep.subr.mxu0 %v4331
        %4379 = vmatpush1.msra.mxu0 %v4330
        %4380 = vmatprep.subr.mxu0 %v4327
        %4381 = vmatpush1.msra.mxu0 %v4326
        %4382 = vmatprep.subr.mxu0 %v4323
        %4383 = vmatpush1.msra.mxu0 %v4322
        %4384 = vmatprep.subr.mxu0 %v4319
        %4385 = vmatpush1.msra.mxu0 %v4318
        %4386 = vmatprep.subr.mxu0 %v4315
        %4387 = vmatpush1.msra.mxu0 %v4314
        %4388 = vmatprep.subr.mxu0 %v4311
        %4389 = vmatpush1.msra.mxu0 %v4310
        %4390 = vmatprep.subr.mxu0 %v4307
        %4391 = vmatpush1.msra.mxu0 %v4306
        %4392 = vmatprep.subr.mxu0 %v4303
        %4393 = vmatpush1.msra.mxu0 %v4302
        %4394 = vmatprep.subr.mxu0 %v4299
        %4395 = vmatpush1.msra.mxu0 %v4298
        %4396 = vmatprep.subr.mxu0 0.0
        %4397 = vmatpush2.msra.mxu0 0.0
        %4398 = vmatprep.subr.mxu0 0.0
        %4399 = vmatpush2.msra.mxu0 0.0
        %4400 = vmatprep.subr.mxu0 0.0
        %4401 = vmatpush2.msra.mxu0 0.0
        %4402 = vmatprep.subr.mxu0 0.0
        %4403 = vmatpush2.msra.mxu0 0.0
        %4404 = vmatprep.subr.mxu0 0.0
        %4405 = vmatpush2.msra.mxu0 0.0
        %4406 = vmatprep.subr.mxu0 0.0
        %4407 = vmatpush2.msra.mxu0 0.0
        %4408 = vmatprep.subr.mxu0 0.0
        %4409 = vmatpush2.msra.mxu0 0.0
        %4410 = vmatprep.subr.mxu0 0.0
        %4411 = vmatpush2.msra.mxu0 0.0
        %4412 = vmatprep.subr.mxu0 0.0
        %4413 = vmatpush2.msra.mxu0 0.0
        %4414 = vmatprep.subr.mxu0 0.0
        %4415 = vmatpush2.msra.mxu0 0.0
        %4416 = vmatprep.subr.mxu0 0.0
        %4417 = vmatpush2.msra.mxu0 0.0
        %4418 = vmatprep.subr.mxu0 0.0
        %4419 = vmatpush2.msra.mxu0 0.0
        %4420 = vmatprep.subr.mxu0 0.0
        %4421 = vmatpush2.msra.mxu0 0.0
        %4422 = vmatprep.subr.mxu0 0.0
        %4423 = vmatpush2.msra.mxu0 0.0
        %4424 = vmatprep.subr.mxu0 0.0
        %4425 = vmatpush2.msra.mxu0 0.0
        %4426 = vmatprep.subr.mxu0 0.0
        %4427 = vmatpush2.msra.mxu0 0.0
        %4428 = vmatprep.mubr.f32.mxu0 0.0
        %4429 = vmatmul.mubr.f32.gmra.mxu0 %v4362
        %v4430 = vpop.f32.mrf.mxu0
        %v4431 = vadd.f32 0.0, %v4430
        %v4432 = vpop.f32.mrf.mxu0
        %v4433 = vadd.f32 0.0, %v4432
        %4434 = vdwg.mxu0
        %4435 = vmatprep.subr.mxu0 %v4361
        %4436 = vmatpush1.msra.mxu0 %v4360
        %4437 = vmatprep.subr.mxu0 %v4357
        %4438 = vmatpush1.msra.mxu0 %v4356
        %4439 = vmatprep.subr.mxu0 %v4353
        %4440 = vmatpush1.msra.mxu0 %v4352
        %4441 = vmatprep.subr.mxu0 %v4349
        %4442 = vmatpush1.msra.mxu0 %v4348
        %4443 = vmatprep.subr.mxu0 %v4345
        %4444 = vmatpush1.msra.mxu0 %v4344
        %4445 = vmatprep.subr.mxu0 %v4341
        %4446 = vmatpush1.msra.mxu0 %v4340
        %4447 = vmatprep.subr.mxu0 %v4337
        %4448 = vmatpush1.msra.mxu0 %v4336
        %4449 = vmatprep.subr.mxu0 %v4333
        %4450 = vmatpush1.msra.mxu0 %v4332
        %4451 = vmatprep.subr.mxu0 %v4329
        %4452 = vmatpush1.msra.mxu0 %v4328
        %4453 = vmatprep.subr.mxu0 %v4325
        %4454 = vmatpush1.msra.mxu0 %v4324
        %4455 = vmatprep.subr.mxu0 %v4321
        %4456 = vmatpush1.msra.mxu0 %v4320
        %4457 = vmatprep.subr.mxu0 %v4317
        %4458 = vmatpush1.msra.mxu0 %v4316
        %4459 = vmatprep.subr.mxu0 %v4313
        %4460 = vmatpush1.msra.mxu0 %v4312
        %4461 = vmatprep.subr.mxu0 %v4309
        %4462 = vmatpush1.msra.mxu0 %v4308
        %4463 = vmatprep.subr.mxu0 %v4305
        %4464 = vmatpush1.msra.mxu0 %v4304
        %4465 = vmatprep.subr.mxu0 %v4301
        %4466 = vmatpush1.msra.mxu0 %v4300
        %4467 = vmatprep.subr.mxu0 0.0
        %4468 = vmatpush2.msra.mxu0 0.0
        %4469 = vmatprep.subr.mxu0 0.0
        %4470 = vmatpush2.msra.mxu0 0.0
        %4471 = vmatprep.subr.mxu0 0.0
        %4472 = vmatpush2.msra.mxu0 0.0
        %4473 = vmatprep.subr.mxu0 0.0
        %4474 = vmatpush2.msra.mxu0 0.0
        %4475 = vmatprep.subr.mxu0 0.0
        %4476 = vmatpush2.msra.mxu0 0.0
        %4477 = vmatprep.subr.mxu0 0.0
        %4478 = vmatpush2.msra.mxu0 0.0
        %4479 = vmatprep.subr.mxu0 0.0
        %4480 = vmatpush2.msra.mxu0 0.0
        %4481 = vmatprep.subr.mxu0 0.0
        %4482 = vmatpush2.msra.mxu0 0.0
        %4483 = vmatprep.subr.mxu0 0.0
        %4484 = vmatpush2.msra.mxu0 0.0
        %4485 = vmatprep.subr.mxu0 0.0
        %4486 = vmatpush2.msra.mxu0 0.0
        %4487 = vmatprep.subr.mxu0 0.0
        %4488 = vmatpush2.msra.mxu0 0.0
        %4489 = vmatprep.subr.mxu0 0.0
        %4490 = vmatpush2.msra.mxu0 0.0
        %4491 = vmatprep.subr.mxu0 0.0
        %4492 = vmatpush2.msra.mxu0 0.0
        %4493 = vmatprep.subr.mxu0 0.0
        %4494 = vmatpush2.msra.mxu0 0.0
        %4495 = vmatprep.subr.mxu0 0.0
        %4496 = vmatpush2.msra.mxu0 0.0
        %4497 = vmatprep.subr.mxu0 0.0
        %4498 = vmatpush2.msra.mxu0 0.0
        %4499 = vmatprep.mubr.f32.mxu0 0.0
        %4500 = vmatmul.mubr.f32.gmra.mxu0 %v4362
        %v4501 = vpop.f32.mrf.mxu0
        %v4502 = vadd.f32 0.0, %v4501
        %v4503 = vpop.f32.mrf.mxu0
        %v4504 = vadd.f32 0.0, %v4503
        %4505 = vdwg.mxu0
        %v4506 = vadd.f32 %v4293, %v4431
        %v4507 = vadd.f32 %v4294, %v4433
        %v4508 = vadd.f32 %v4295, %v4502
        %v4509 = vadd.f32 %v4296, %v4504
        %s4510 = scalar_lea.vmem [#allocation19], 3072
        %v4511 = vld [vmem:[%s4510] sm:$0xff]
        %v4512 = vld [vmem:[%s4510 + $0x8] sm:$0xff]
        %v4513 = vld [vmem:[%s4510 + $0x10] sm:$0xff]
        %v4514 = vld [vmem:[%s4510 + $0x18] sm:$0xff]
        %v4515 = vld [vmem:[%s4510 + $0x20] sm:$0xff]
        %v4516 = vld [vmem:[%s4510 + $0x28] sm:$0xff]
        %v4517 = vld [vmem:[%s4510 + $0x30] sm:$0xff]
        %v4518 = vld [vmem:[%s4510 + $0x38] sm:$0xff]
        %v4519 = vld [vmem:[%s4510 + $0x40] sm:$0xff]
        %v4520 = vld [vmem:[%s4510 + $0x48] sm:$0xff]
        %v4521 = vld [vmem:[%s4510 + $0x50] sm:$0xff]
        %v4522 = vld [vmem:[%s4510 + $0x58] sm:$0xff]
        %v4523 = vld [vmem:[%s4510 + $0x60] sm:$0xff]
        %v4524 = vld [vmem:[%s4510 + $0x68] sm:$0xff]
        %v4525 = vld [vmem:[%s4510 + $0x70] sm:$0xff]
        %v4526 = vld [vmem:[%s4510 + $0x78] sm:$0xff]
        %v4527 = vld [vmem:[%s4510 + $0x80] sm:$0xff]
        %v4528 = vld [vmem:[%s4510 + $0x88] sm:$0xff]
        %v4529 = vld [vmem:[%s4510 + $0x90] sm:$0xff]
        %v4530 = vld [vmem:[%s4510 + $0x98] sm:$0xff]
        %v4531 = vld [vmem:[%s4510 + $0xa0] sm:$0xff]
        %v4532 = vld [vmem:[%s4510 + $0xa8] sm:$0xff]
        %v4533 = vld [vmem:[%s4510 + $0xb0] sm:$0xff]
        %v4534 = vld [vmem:[%s4510 + $0xb8] sm:$0xff]
        %v4535 = vld [vmem:[%s4510 + $0xc0] sm:$0xff]
        %v4536 = vld [vmem:[%s4510 + $0xc8] sm:$0xff]
        %v4537 = vld [vmem:[%s4510 + $0xd0] sm:$0xff]
        %v4538 = vld [vmem:[%s4510 + $0xd8] sm:$0xff]
        %v4539 = vld [vmem:[%s4510 + $0xe0] sm:$0xff]
        %v4540 = vld [vmem:[%s4510 + $0xe8] sm:$0xff]
        %v4541 = vld [vmem:[%s4510 + $0xf0] sm:$0xff]
        %v4542 = vld [vmem:[%s4510 + $0xf8] sm:$0xff]
        %v4543 = vld [vmem:[%s4510 + $0x100] sm:$0xff]
        %v4544 = vld [vmem:[%s4510 + $0x108] sm:$0xff]
        %v4545 = vld [vmem:[%s4510 + $0x110] sm:$0xff]
        %v4546 = vld [vmem:[%s4510 + $0x118] sm:$0xff]
        %v4547 = vld [vmem:[%s4510 + $0x120] sm:$0xff]
        %v4548 = vld [vmem:[%s4510 + $0x128] sm:$0xff]
        %v4549 = vld [vmem:[%s4510 + $0x130] sm:$0xff]
        %v4550 = vld [vmem:[%s4510 + $0x138] sm:$0xff]
        %v4551 = vld [vmem:[%s4510 + $0x140] sm:$0xff]
        %v4552 = vld [vmem:[%s4510 + $0x148] sm:$0xff]
        %v4553 = vld [vmem:[%s4510 + $0x150] sm:$0xff]
        %v4554 = vld [vmem:[%s4510 + $0x158] sm:$0xff]
        %v4555 = vld [vmem:[%s4510 + $0x160] sm:$0xff]
        %v4556 = vld [vmem:[%s4510 + $0x168] sm:$0xff]
        %v4557 = vld [vmem:[%s4510 + $0x170] sm:$0xff]
        %v4558 = vld [vmem:[%s4510 + $0x178] sm:$0xff]
        %v4559 = vld [vmem:[%s4510 + $0x180] sm:$0xff]
        %v4560 = vld [vmem:[%s4510 + $0x188] sm:$0xff]
        %v4561 = vld [vmem:[%s4510 + $0x190] sm:$0xff]
        %v4562 = vld [vmem:[%s4510 + $0x198] sm:$0xff]
        %v4563 = vld [vmem:[%s4510 + $0x1a0] sm:$0xff]
        %v4564 = vld [vmem:[%s4510 + $0x1a8] sm:$0xff]
        %v4565 = vld [vmem:[%s4510 + $0x1b0] sm:$0xff]
        %v4566 = vld [vmem:[%s4510 + $0x1b8] sm:$0xff]
        %v4567 = vld [vmem:[%s4510 + $0x1c0] sm:$0xff]
        %v4568 = vld [vmem:[%s4510 + $0x1c8] sm:$0xff]
        %v4569 = vld [vmem:[%s4510 + $0x1d0] sm:$0xff]
        %v4570 = vld [vmem:[%s4510 + $0x1d8] sm:$0xff]
        %v4571 = vld [vmem:[%s4510 + $0x1e0] sm:$0xff]
        %v4572 = vld [vmem:[%s4510 + $0x1e8] sm:$0xff]
        %v4573 = vld [vmem:[%s4510 + $0x1f0] sm:$0xff]
        %v4574 = vld [vmem:[%s4510 + $0x1f8] sm:$0xff]
        %v4575 = vrot.slane %v3241, 6
        %4577 = vmatprep.subr.mxu0 %v4572
        %4578 = vmatpush1.msra.mxu0 %v4571
        %4579 = vmatprep.subr.mxu0 %v4568
        %4580 = vmatpush1.msra.mxu0 %v4567
        %4581 = vmatprep.subr.mxu0 %v4564
        %4582 = vmatpush1.msra.mxu0 %v4563
        %4583 = vmatprep.subr.mxu0 %v4560
        %4584 = vmatpush1.msra.mxu0 %v4559
        %4585 = vmatprep.subr.mxu0 %v4556
        %4586 = vmatpush1.msra.mxu0 %v4555
        %4587 = vmatprep.subr.mxu0 %v4552
        %4588 = vmatpush1.msra.mxu0 %v4551
        %4589 = vmatprep.subr.mxu0 %v4548
        %4590 = vmatpush1.msra.mxu0 %v4547
        %4591 = vmatprep.subr.mxu0 %v4544
        %4592 = vmatpush1.msra.mxu0 %v4543
        %4593 = vmatprep.subr.mxu0 %v4540
        %4594 = vmatpush1.msra.mxu0 %v4539
        %4595 = vmatprep.subr.mxu0 %v4536
        %4596 = vmatpush1.msra.mxu0 %v4535
        %4597 = vmatprep.subr.mxu0 %v4532
        %4598 = vmatpush1.msra.mxu0 %v4531
        %4599 = vmatprep.subr.mxu0 %v4528
        %4600 = vmatpush1.msra.mxu0 %v4527
        %4601 = vmatprep.subr.mxu0 %v4524
        %4602 = vmatpush1.msra.mxu0 %v4523
        %4603 = vmatprep.subr.mxu0 %v4520
        %4604 = vmatpush1.msra.mxu0 %v4519
        %4605 = vmatprep.subr.mxu0 %v4516
        %4606 = vmatpush1.msra.mxu0 %v4515
        %4607 = vmatprep.subr.mxu0 %v4512
        %4608 = vmatpush1.msra.mxu0 %v4511
        %4609 = vmatprep.subr.mxu0 0.0
        %4610 = vmatpush2.msra.mxu0 0.0
        %4611 = vmatprep.subr.mxu0 0.0
        %4612 = vmatpush2.msra.mxu0 0.0
        %4613 = vmatprep.subr.mxu0 0.0
        %4614 = vmatpush2.msra.mxu0 0.0
        %4615 = vmatprep.subr.mxu0 0.0
        %4616 = vmatpush2.msra.mxu0 0.0
        %4617 = vmatprep.subr.mxu0 0.0
        %4618 = vmatpush2.msra.mxu0 0.0
        %4619 = vmatprep.subr.mxu0 0.0
        %4620 = vmatpush2.msra.mxu0 0.0
        %4621 = vmatprep.subr.mxu0 0.0
        %4622 = vmatpush2.msra.mxu0 0.0
        %4623 = vmatprep.subr.mxu0 0.0
        %4624 = vmatpush2.msra.mxu0 0.0
        %4625 = vmatprep.subr.mxu0 0.0
        %4626 = vmatpush2.msra.mxu0 0.0
        %4627 = vmatprep.subr.mxu0 0.0
        %4628 = vmatpush2.msra.mxu0 0.0
        %4629 = vmatprep.subr.mxu0 0.0
        %4630 = vmatpush2.msra.mxu0 0.0
        %4631 = vmatprep.subr.mxu0 0.0
        %4632 = vmatpush2.msra.mxu0 0.0
        %4633 = vmatprep.subr.mxu0 0.0
        %4634 = vmatpush2.msra.mxu0 0.0
        %4635 = vmatprep.subr.mxu0 0.0
        %4636 = vmatpush2.msra.mxu0 0.0
        %4637 = vmatprep.subr.mxu0 0.0
        %4638 = vmatpush2.msra.mxu0 0.0
        %4639 = vmatprep.subr.mxu0 0.0
        %4640 = vmatpush2.msra.mxu0 0.0
        %4641 = vmatprep.mubr.f32.mxu0 0.0
        %4642 = vmatmul.mubr.f32.gmra.mxu0 %v4575
        %v4643 = vpop.f32.mrf.mxu0
        %v4644 = vadd.f32 0.0, %v4643
        %v4645 = vpop.f32.mrf.mxu0
        %v4646 = vadd.f32 0.0, %v4645
        %4647 = vdwg.mxu0
        %4648 = vmatprep.subr.mxu0 %v4574
        %4649 = vmatpush1.msra.mxu0 %v4573
        %4650 = vmatprep.subr.mxu0 %v4570
        %4651 = vmatpush1.msra.mxu0 %v4569
        %4652 = vmatprep.subr.mxu0 %v4566
        %4653 = vmatpush1.msra.mxu0 %v4565
        %4654 = vmatprep.subr.mxu0 %v4562
        %4655 = vmatpush1.msra.mxu0 %v4561
        %4656 = vmatprep.subr.mxu0 %v4558
        %4657 = vmatpush1.msra.mxu0 %v4557
        %4658 = vmatprep.subr.mxu0 %v4554
        %4659 = vmatpush1.msra.mxu0 %v4553
        %4660 = vmatprep.subr.mxu0 %v4550
        %4661 = vmatpush1.msra.mxu0 %v4549
        %4662 = vmatprep.subr.mxu0 %v4546
        %4663 = vmatpush1.msra.mxu0 %v4545
        %4664 = vmatprep.subr.mxu0 %v4542
        %4665 = vmatpush1.msra.mxu0 %v4541
        %4666 = vmatprep.subr.mxu0 %v4538
        %4667 = vmatpush1.msra.mxu0 %v4537
        %4668 = vmatprep.subr.mxu0 %v4534
        %4669 = vmatpush1.msra.mxu0 %v4533
        %4670 = vmatprep.subr.mxu0 %v4530
        %4671 = vmatpush1.msra.mxu0 %v4529
        %4672 = vmatprep.subr.mxu0 %v4526
        %4673 = vmatpush1.msra.mxu0 %v4525
        %4674 = vmatprep.subr.mxu0 %v4522
        %4675 = vmatpush1.msra.mxu0 %v4521
        %4676 = vmatprep.subr.mxu0 %v4518
        %4677 = vmatpush1.msra.mxu0 %v4517
        %4678 = vmatprep.subr.mxu0 %v4514
        %4679 = vmatpush1.msra.mxu0 %v4513
        %4680 = vmatprep.subr.mxu0 0.0
        %4681 = vmatpush2.msra.mxu0 0.0
        %4682 = vmatprep.subr.mxu0 0.0
        %4683 = vmatpush2.msra.mxu0 0.0
        %4684 = vmatprep.subr.mxu0 0.0
        %4685 = vmatpush2.msra.mxu0 0.0
        %4686 = vmatprep.subr.mxu0 0.0
        %4687 = vmatpush2.msra.mxu0 0.0
        %4688 = vmatprep.subr.mxu0 0.0
        %4689 = vmatpush2.msra.mxu0 0.0
        %4690 = vmatprep.subr.mxu0 0.0
        %4691 = vmatpush2.msra.mxu0 0.0
        %4692 = vmatprep.subr.mxu0 0.0
        %4693 = vmatpush2.msra.mxu0 0.0
        %4694 = vmatprep.subr.mxu0 0.0
        %4695 = vmatpush2.msra.mxu0 0.0
        %4696 = vmatprep.subr.mxu0 0.0
        %4697 = vmatpush2.msra.mxu0 0.0
        %4698 = vmatprep.subr.mxu0 0.0
        %4699 = vmatpush2.msra.mxu0 0.0
        %4700 = vmatprep.subr.mxu0 0.0
        %4701 = vmatpush2.msra.mxu0 0.0
        %4702 = vmatprep.subr.mxu0 0.0
        %4703 = vmatpush2.msra.mxu0 0.0
        %4704 = vmatprep.subr.mxu0 0.0
        %4705 = vmatpush2.msra.mxu0 0.0
        %4706 = vmatprep.subr.mxu0 0.0
        %4707 = vmatpush2.msra.mxu0 0.0
        %4708 = vmatprep.subr.mxu0 0.0
        %4709 = vmatpush2.msra.mxu0 0.0
        %4710 = vmatprep.subr.mxu0 0.0
        %4711 = vmatpush2.msra.mxu0 0.0
        %4712 = vmatprep.mubr.f32.mxu0 0.0
        %4713 = vmatmul.mubr.f32.gmra.mxu0 %v4575
        %v4714 = vpop.f32.mrf.mxu0
        %v4715 = vadd.f32 0.0, %v4714
        %v4716 = vpop.f32.mrf.mxu0
        %v4717 = vadd.f32 0.0, %v4716
        %4718 = vdwg.mxu0
        %v4719 = vadd.f32 %v4506, %v4644
        %v4720 = vadd.f32 %v4507, %v4646
        %v4721 = vadd.f32 %v4508, %v4715
        %v4722 = vadd.f32 %v4509, %v4717
        %s4723 = scalar_lea.vmem [#allocation19], 3584
        %v4724 = vld [vmem:[%s4723] sm:$0xff]
        %v4725 = vld [vmem:[%s4723 + $0x8] sm:$0xff]
        %v4726 = vld [vmem:[%s4723 + $0x10] sm:$0xff]
        %v4727 = vld [vmem:[%s4723 + $0x18] sm:$0xff]
        %v4728 = vld [vmem:[%s4723 + $0x20] sm:$0xff]
        %v4729 = vld [vmem:[%s4723 + $0x28] sm:$0xff]
        %v4730 = vld [vmem:[%s4723 + $0x30] sm:$0xff]
        %v4731 = vld [vmem:[%s4723 + $0x38] sm:$0xff]
        %v4732 = vld [vmem:[%s4723 + $0x40] sm:$0xff]
        %v4733 = vld [vmem:[%s4723 + $0x48] sm:$0xff]
        %v4734 = vld [vmem:[%s4723 + $0x50] sm:$0xff]
        %v4735 = vld [vmem:[%s4723 + $0x58] sm:$0xff]
        %v4736 = vld [vmem:[%s4723 + $0x60] sm:$0xff]
        %v4737 = vld [vmem:[%s4723 + $0x68] sm:$0xff]
        %v4738 = vld [vmem:[%s4723 + $0x70] sm:$0xff]
        %v4739 = vld [vmem:[%s4723 + $0x78] sm:$0xff]
        %v4740 = vld [vmem:[%s4723 + $0x80] sm:$0xff]
        %v4741 = vld [vmem:[%s4723 + $0x88] sm:$0xff]
        %v4742 = vld [vmem:[%s4723 + $0x90] sm:$0xff]
        %v4743 = vld [vmem:[%s4723 + $0x98] sm:$0xff]
        %v4744 = vld [vmem:[%s4723 + $0xa0] sm:$0xff]
        %v4745 = vld [vmem:[%s4723 + $0xa8] sm:$0xff]
        %v4746 = vld [vmem:[%s4723 + $0xb0] sm:$0xff]
        %v4747 = vld [vmem:[%s4723 + $0xb8] sm:$0xff]
        %v4748 = vld [vmem:[%s4723 + $0xc0] sm:$0xff]
        %v4749 = vld [vmem:[%s4723 + $0xc8] sm:$0xff]
        %v4750 = vld [vmem:[%s4723 + $0xd0] sm:$0xff]
        %v4751 = vld [vmem:[%s4723 + $0xd8] sm:$0xff]
        %v4752 = vld [vmem:[%s4723 + $0xe0] sm:$0xff]
        %v4753 = vld [vmem:[%s4723 + $0xe8] sm:$0xff]
        %v4754 = vld [vmem:[%s4723 + $0xf0] sm:$0xff]
        %v4755 = vld [vmem:[%s4723 + $0xf8] sm:$0xff]
        %v4756 = vld [vmem:[%s4723 + $0x100] sm:$0xff]
        %v4757 = vld [vmem:[%s4723 + $0x108] sm:$0xff]
        %v4758 = vld [vmem:[%s4723 + $0x110] sm:$0xff]
        %v4759 = vld [vmem:[%s4723 + $0x118] sm:$0xff]
        %v4760 = vld [vmem:[%s4723 + $0x120] sm:$0xff]
        %v4761 = vld [vmem:[%s4723 + $0x128] sm:$0xff]
        %v4762 = vld [vmem:[%s4723 + $0x130] sm:$0xff]
        %v4763 = vld [vmem:[%s4723 + $0x138] sm:$0xff]
        %v4764 = vld [vmem:[%s4723 + $0x140] sm:$0xff]
        %v4765 = vld [vmem:[%s4723 + $0x148] sm:$0xff]
        %v4766 = vld [vmem:[%s4723 + $0x150] sm:$0xff]
        %v4767 = vld [vmem:[%s4723 + $0x158] sm:$0xff]
        %v4768 = vld [vmem:[%s4723 + $0x160] sm:$0xff]
        %v4769 = vld [vmem:[%s4723 + $0x168] sm:$0xff]
        %v4770 = vld [vmem:[%s4723 + $0x170] sm:$0xff]
        %v4771 = vld [vmem:[%s4723 + $0x178] sm:$0xff]
        %v4772 = vld [vmem:[%s4723 + $0x180] sm:$0xff]
        %v4773 = vld [vmem:[%s4723 + $0x188] sm:$0xff]
        %v4774 = vld [vmem:[%s4723 + $0x190] sm:$0xff]
        %v4775 = vld [vmem:[%s4723 + $0x198] sm:$0xff]
        %v4776 = vld [vmem:[%s4723 + $0x1a0] sm:$0xff]
        %v4777 = vld [vmem:[%s4723 + $0x1a8] sm:$0xff]
        %v4778 = vld [vmem:[%s4723 + $0x1b0] sm:$0xff]
        %v4779 = vld [vmem:[%s4723 + $0x1b8] sm:$0xff]
        %v4780 = vld [vmem:[%s4723 + $0x1c0] sm:$0xff]
        %v4781 = vld [vmem:[%s4723 + $0x1c8] sm:$0xff]
        %v4782 = vld [vmem:[%s4723 + $0x1d0] sm:$0xff]
        %v4783 = vld [vmem:[%s4723 + $0x1d8] sm:$0xff]
        %v4784 = vld [vmem:[%s4723 + $0x1e0] sm:$0xff]
        %v4785 = vld [vmem:[%s4723 + $0x1e8] sm:$0xff]
        %v4786 = vld [vmem:[%s4723 + $0x1f0] sm:$0xff]
        %v4787 = vld [vmem:[%s4723 + $0x1f8] sm:$0xff]
        %v4788 = vrot.slane %v3241, 7
        %4790 = vmatprep.subr.mxu0 %v4785
        %4791 = vmatpush1.msra.mxu0 %v4784
        %4792 = vmatprep.subr.mxu0 %v4781
        %4793 = vmatpush1.msra.mxu0 %v4780
        %4794 = vmatprep.subr.mxu0 %v4777
        %4795 = vmatpush1.msra.mxu0 %v4776
        %4796 = vmatprep.subr.mxu0 %v4773
        %4797 = vmatpush1.msra.mxu0 %v4772
        %4798 = vmatprep.subr.mxu0 %v4769
        %4799 = vmatpush1.msra.mxu0 %v4768
        %4800 = vmatprep.subr.mxu0 %v4765
        %4801 = vmatpush1.msra.mxu0 %v4764
        %4802 = vmatprep.subr.mxu0 %v4761
        %4803 = vmatpush1.msra.mxu0 %v4760
        %4804 = vmatprep.subr.mxu0 %v4757
        %4805 = vmatpush1.msra.mxu0 %v4756
        %4806 = vmatprep.subr.mxu0 %v4753
        %4807 = vmatpush1.msra.mxu0 %v4752
        %4808 = vmatprep.subr.mxu0 %v4749
        %4809 = vmatpush1.msra.mxu0 %v4748
        %4810 = vmatprep.subr.mxu0 %v4745
        %4811 = vmatpush1.msra.mxu0 %v4744
        %4812 = vmatprep.subr.mxu0 %v4741
        %4813 = vmatpush1.msra.mxu0 %v4740
        %4814 = vmatprep.subr.mxu0 %v4737
        %4815 = vmatpush1.msra.mxu0 %v4736
        %4816 = vmatprep.subr.mxu0 %v4733
        %4817 = vmatpush1.msra.mxu0 %v4732
        %4818 = vmatprep.subr.mxu0 %v4729
        %4819 = vmatpush1.msra.mxu0 %v4728
        %4820 = vmatprep.subr.mxu0 %v4725
        %4821 = vmatpush1.msra.mxu0 %v4724
        %4822 = vmatprep.subr.mxu0 0.0
        %4823 = vmatpush2.msra.mxu0 0.0
        %4824 = vmatprep.subr.mxu0 0.0
        %4825 = vmatpush2.msra.mxu0 0.0
        %4826 = vmatprep.subr.mxu0 0.0
        %4827 = vmatpush2.msra.mxu0 0.0
        %4828 = vmatprep.subr.mxu0 0.0
        %4829 = vmatpush2.msra.mxu0 0.0
        %4830 = vmatprep.subr.mxu0 0.0
        %4831 = vmatpush2.msra.mxu0 0.0
        %4832 = vmatprep.subr.mxu0 0.0
        %4833 = vmatpush2.msra.mxu0 0.0
        %4834 = vmatprep.subr.mxu0 0.0
        %4835 = vmatpush2.msra.mxu0 0.0
        %4836 = vmatprep.subr.mxu0 0.0
        %4837 = vmatpush2.msra.mxu0 0.0
        %4838 = vmatprep.subr.mxu0 0.0
        %4839 = vmatpush2.msra.mxu0 0.0
        %4840 = vmatprep.subr.mxu0 0.0
        %4841 = vmatpush2.msra.mxu0 0.0
        %4842 = vmatprep.subr.mxu0 0.0
        %4843 = vmatpush2.msra.mxu0 0.0
        %4844 = vmatprep.subr.mxu0 0.0
        %4845 = vmatpush2.msra.mxu0 0.0
        %4846 = vmatprep.subr.mxu0 0.0
        %4847 = vmatpush2.msra.mxu0 0.0
        %4848 = vmatprep.subr.mxu0 0.0
        %4849 = vmatpush2.msra.mxu0 0.0
        %4850 = vmatprep.subr.mxu0 0.0
        %4851 = vmatpush2.msra.mxu0 0.0
        %4852 = vmatprep.subr.mxu0 0.0
        %4853 = vmatpush2.msra.mxu0 0.0
        %4854 = vmatprep.mubr.f32.mxu0 0.0
        %4855 = vmatmul.mubr.f32.gmra.mxu0 %v4788
        %v4856 = vpop.f32.mrf.mxu0
        %v4857 = vadd.f32 0.0, %v4856
        %v4858 = vpop.f32.mrf.mxu0
        %v4859 = vadd.f32 0.0, %v4858
        %4860 = vdwg.mxu0
        %4861 = vmatprep.subr.mxu0 %v4787
        %4862 = vmatpush1.msra.mxu0 %v4786
        %4863 = vmatprep.subr.mxu0 %v4783
        %4864 = vmatpush1.msra.mxu0 %v4782
        %4865 = vmatprep.subr.mxu0 %v4779
        %4866 = vmatpush1.msra.mxu0 %v4778
        %4867 = vmatprep.subr.mxu0 %v4775
        %4868 = vmatpush1.msra.mxu0 %v4774
        %4869 = vmatprep.subr.mxu0 %v4771
        %4870 = vmatpush1.msra.mxu0 %v4770
        %4871 = vmatprep.subr.mxu0 %v4767
        %4872 = vmatpush1.msra.mxu0 %v4766
        %4873 = vmatprep.subr.mxu0 %v4763
        %4874 = vmatpush1.msra.mxu0 %v4762
        %4875 = vmatprep.subr.mxu0 %v4759
        %4876 = vmatpush1.msra.mxu0 %v4758
        %4877 = vmatprep.subr.mxu0 %v4755
        %4878 = vmatpush1.msra.mxu0 %v4754
        %4879 = vmatprep.subr.mxu0 %v4751
        %4880 = vmatpush1.msra.mxu0 %v4750
        %4881 = vmatprep.subr.mxu0 %v4747
        %4882 = vmatpush1.msra.mxu0 %v4746
        %4883 = vmatprep.subr.mxu0 %v4743
        %4884 = vmatpush1.msra.mxu0 %v4742
        %4885 = vmatprep.subr.mxu0 %v4739
        %4886 = vmatpush1.msra.mxu0 %v4738
        %4887 = vmatprep.subr.mxu0 %v4735
        %4888 = vmatpush1.msra.mxu0 %v4734
        %4889 = vmatprep.subr.mxu0 %v4731
        %4890 = vmatpush1.msra.mxu0 %v4730
        %4891 = vmatprep.subr.mxu0 %v4727
        %4892 = vmatpush1.msra.mxu0 %v4726
        %4893 = vmatprep.subr.mxu0 0.0
        %4894 = vmatpush2.msra.mxu0 0.0
        %4895 = vmatprep.subr.mxu0 0.0
        %4896 = vmatpush2.msra.mxu0 0.0
        %4897 = vmatprep.subr.mxu0 0.0
        %4898 = vmatpush2.msra.mxu0 0.0
        %4899 = vmatprep.subr.mxu0 0.0
        %4900 = vmatpush2.msra.mxu0 0.0
        %4901 = vmatprep.subr.mxu0 0.0
        %4902 = vmatpush2.msra.mxu0 0.0
        %4903 = vmatprep.subr.mxu0 0.0
        %4904 = vmatpush2.msra.mxu0 0.0
        %4905 = vmatprep.subr.mxu0 0.0
        %4906 = vmatpush2.msra.mxu0 0.0
        %4907 = vmatprep.subr.mxu0 0.0
        %4908 = vmatpush2.msra.mxu0 0.0
        %4909 = vmatprep.subr.mxu0 0.0
        %4910 = vmatpush2.msra.mxu0 0.0
        %4911 = vmatprep.subr.mxu0 0.0
        %4912 = vmatpush2.msra.mxu0 0.0
        %4913 = vmatprep.subr.mxu0 0.0
        %4914 = vmatpush2.msra.mxu0 0.0
        %4915 = vmatprep.subr.mxu0 0.0
        %4916 = vmatpush2.msra.mxu0 0.0
        %4917 = vmatprep.subr.mxu0 0.0
        %4918 = vmatpush2.msra.mxu0 0.0
        %4919 = vmatprep.subr.mxu0 0.0
        %4920 = vmatpush2.msra.mxu0 0.0
        %4921 = vmatprep.subr.mxu0 0.0
        %4922 = vmatpush2.msra.mxu0 0.0
        %4923 = vmatprep.subr.mxu0 0.0
        %4924 = vmatpush2.msra.mxu0 0.0
        %4925 = vmatprep.mubr.f32.mxu0 0.0
        %4926 = vmatmul.mubr.f32.gmra.mxu0 %v4788
        %v4927 = vpop.f32.mrf.mxu0
        %v4928 = vadd.f32 0.0, %v4927
        %v4929 = vpop.f32.mrf.mxu0
        %v4930 = vadd.f32 0.0, %v4929
        %4931 = vdwg.mxu0
        %v4932 = vadd.f32 %v4719, %v4857
        %v4933 = vadd.f32 %v4720, %v4859
        %v4934 = vadd.f32 %v4721, %v4928
        %v4935 = vadd.f32 %v4722, %v4930
        %v4936 = vld [vmem:[#allocation21] sm:$0xf]
        %v4938 = vlaneseq
        %v4939 = vshrl.u32 %v4938, 7
        %v4940 = vsub.s32 0, %v4939
        %v4941 = vrot.slane %v4936, %v4940
        %v4942 = vlaneseq
        %v4943 = vshrl.u32 %v4942, 7
        %v4944 = vsub.s32 1, %v4943
        %v4945 = vrot.slane %v4936, %v4944
        %v4946 = vlaneseq
        %v4947 = vshrl.u32 %v4946, 7
        %v4948 = vsub.s32 2, %v4947
        %v4949 = vrot.slane %v4936, %v4948
        %v4950 = vlaneseq
        %v4951 = vshrl.u32 %v4950, 7
        %v4952 = vsub.s32 3, %v4951
        %v4953 = vrot.slane %v4936, %v4952
        %v4958 = vadd.f32 %v4932, %v4941
        %v4959 = vadd.f32 %v4933, %v4945
        %v4960 = vadd.f32 %v4934, %v4949
        %v4961 = vadd.f32 %v4935, %v4953
        %v4962 = vmax.f32 %v4958, 0.0
        %v4963 = vmax.f32 %v4959, 0.0
        %v4964 = vmax.f32 %v4960, 0.0
        %v4965 = vmax.f32 %v4961, 0.0
        %v4970 = vcombine.low %v4962, %v4963
        %v4971 = vcombine.low %v4964, %v4965
        %v4973 = vunpack.c.l.s4 1966171168
        %v4974 = vunpack.c.0.s8 %v4973
        %v4975 = vlaneseq
        %v4976 = vshrl.u32 %v4975, 7
        %v4977 = vsub.s32 %v4974, %v4976
        %v4978 = vrot.slane %v4970, %v4977
        %v4980 = vunpack.c.l.s4 1966171168
        %v4981 = vunpack.c.0.s8 %v4980
        %v4982 = vlaneseq
        %v4983 = vshrl.u32 %v4982, 7
        %v4984 = vsub.s32 %v4981, %v4983
        %v4985 = vrot.slane %v4971, %v4984
        %v4986 = vcombine.low %v4978, %v4985
        %v4988 = vunpack.c.l.s4 1966171168
        %v4989 = vunpack.c.0.s8 %v4988
        %v4990 = vlaneseq
        %v4991 = vshrl.u32 %v4990, 7
        %v4992 = vsub.s32 %v4989, %v4991
        %v4993 = vrot.slane %v4986, %v4992
        %v4995 = vlaneseq
        %vm4996 = vcmp.ge.s32.totalorder %v4995, 0
        %vm4997 = vcmp.lt.s32.totalorder %v4995, 512
        %vm4998 = vmand %vm4996, %vm4997
        %4999 = vst.msk [vmem:[%s595] sm:$0xf] %vm4998, %v4993
        %p5000 = scmp.lt.s32.totalorder %s32, 1
        %s5001 = scalar_select %p5000, %s32, 1
        %s5002 = smul.addr %s5001, 4
        %s5003 = scalar_lea.vmem %s13, %s5002
        // Predicated region
        $region117: #{feature_generator_small.1} parent=71 // pred_check
          %p5004 = pneg %p328
        $region118: #{feature_generator_small.1} parent=71 // pred_check_branch
          %5006 = sbr.rel (%p5004) target = $region120
        $region119: #{feature_generator_small.1} parent=71 // pred_region
          _
        $region120: #{feature_generator_small.1} parent=71 // pred_fallthru
          _
      $region72: #{feature_generator_small.1} parent=5 // pred_fallthru
        _
      %p5007 = scmp.le.s32.totalorder 2, %s27
      // Predicated region
      $region121: #{feature_generator_small.1} parent=5 // pred_check
        %p5008 = pneg %p5007
      $region122: #{feature_generator_small.1} parent=5 // pred_check_branch
        %5010 = sbr.rel (%p5008) target = $region124
      $region123: #{feature_generator_small.1} parent=5 // pred_region
        %s5011 = ssub.s32 %s27, 2
        // Predicated region
        $region125: #{feature_generator_small.1} parent=123 // pred_check
          %p5012 = pneg %p334
        $region126: #{feature_generator_small.1} parent=123 // pred_check_branch
          %5014 = sbr.rel (%p5012) target = $region128
        $region127: #{feature_generator_small.1} parent=123 // pred_region
          %p5015 = scmp.lt.s32.totalorder %s33, 1
          %s5016 = scalar_select %p5015, %s33, 1
          %s5017 = smul.addr %s5016, 4
          %s5018 = scalar_lea.vmem %s13, %s5017
        $region128: #{feature_generator_small.1} parent=123 // pred_fallthru
          _
      $region124: #{feature_generator_small.1} parent=5 // pred_fallthru
        _
    $region6: #{feature_generator_small.1} parent=1 // loop_footer
      %s31 = sadd.s32 1, %s27
    $region7: #{feature_generator_small.1} parent=1 // loop_footer_branch
      %26 = sbr.rel target = $region3
    $region8: #{feature_generator_small.1} parent=1 // loop_exit
      _
    %5019 = vsyncpa [#allocation6], 1
    %s5020 = scalar_lea.sflag [#allocation6], 1
    %5021 = vsyncpa %s5020, 1
    %5022 = vsyncpa [#allocation8], 1
    %5023 = vsyncpa [#allocation11], 1
    %5024 = vsyncpa [#allocation14], 1
    %5025 = vsyncpa [#allocation17], 1
    %5026 = vsyncpa [#allocation20], 1

</llo_original>
